<compile_context>
chip_gen: v7x
topology: tpu7x:2x2x1
jax: 0.10.0
libtpu: 0.0.40
codegen_flags: <defaults>
</compile_context>

<pallas_src>
import functools
import math

import jax
import jax.numpy as jnp
from jax.experimental import pallas as pl
from jax.experimental.pallas import tpu as pltpu

TOKEN_BLOCK = 512            # target tokens per grid step (lane-dense output tile)
MAX_NBUF = 32                # max outstanding row DMAs on the HBM-gather path
INFLIGHT_BYTES = 128 * 1024  # target bytes in flight on the HBM-gather path


def _round_up(x, m):
    return (x + m - 1) // m * m


def _vmem_budget_bytes():
    """Generation-aware VMEM budget (~80% of physical, leaves Mosaic headroom)."""
    cap = 64 << 20                        # conservative default: v7x per-TC VMEM
    try:
        info = pltpu.get_tpu_info()
        cap = int(getattr(info, "vmem_capacity_bytes", cap) or cap)
    except Exception:
        pass
    return int(cap * 0.8)                 # v5e/v6e: ~102 MiB, v7x: ~51 MiB


# ---------------------------------------------------------------------------
# Path A: embedding table resident in VMEM (grouped gather, unmasked stores).
# ---------------------------------------------------------------------------
def _embed_vmem_gather_kernel(ids_ref, tbl_ref, out_ref, *, scale, token_block,
                              group):
    # ids_ref : SMEM (n_pad,) int32      (scalar prefetch)
    # tbl_ref : VMEM (V, D)              (constant block index -> stays resident)
    # out_ref : VMEM (token_block, D)
    vocab = tbl_ref.shape[0]
    base = pl.program_id(0) * token_block

    def body(g, carry):
        off = pl.multiple_of(g * group, group)
        rows = []
        for j in range(group):                        # static unroll: `group` loads
            # Clamp guards OOB ids (no HW VMEM bounds check); diverges from
            # nn.Embedding which would raise on bad ids.
            tok = jnp.clip(ids_ref[base + off + j], 0, vocab - 1)
            rows.append(tbl_ref[pl.ds(tok, 1), :])    # (1, D) dynamic row load
        slab = jnp.concatenate(rows, axis=0)          # (group, D) sublane slab
        # One full-vreg scale + ONE unmasked (group, D) store per slab.
        out_ref[pl.ds(off, group), :] = (slab * scale).astype(out_ref.dtype)
        return carry

    jax.lax.fori_loop(0, token_block // group, body, 0)


# ---------------------------------------------------------------------------
# Path B: embedding table stays in HBM; multi-buffered row-DMA gather.
# ---------------------------------------------------------------------------
def _embed_hbm_gather_kernel(ids_ref, tbl_hbm, out_ref, sem, *,
                             scale, token_block, nbuf, slab, vocab):
    # ids_ref : SMEM (n_pad,) int32      (scalar prefetch)
    # tbl_hbm : HBM (V, D)               (memory_space=pl.ANY, manual DMA)
    # out_ref : VMEM (token_block, D)
    # sem     : DMA semaphores (nbuf,)
    base = pl.program_id(0) * token_block
    n_ids = ids_ref.shape[0]

    def read_tok(i):
        # Clamp the SMEM index (the look-ahead read in the last block can probe
        # past the padded id array) and the id itself (OOB guard, see Path A).
        idx = jnp.minimum(base + i, n_ids - 1)
        return jnp.clip(ids_ref[idx], 0, vocab - 1)

    def start_row(i, tok):
        pltpu.make_async_copy(tbl_hbm.at[tok], out_ref.at[i],
                              sem.at[i % nbuf]).start()

    def wait_slot(slot):
        # Only the byte count (one (D,) row) and the semaphore matter for the
        # wait; MUST stay shape-identical to the copies issued by start_row.
        pltpu.make_async_copy(tbl_hbm.at[0], out_ref.at[0], sem.at[slot]).wait()

    # Prime the pipeline: nbuf row DMAs in flight (static unroll, nbuf <= tb).
    for i in range(nbuf):
        start_row(i, read_tok(i))

    def make_row_body(lo):
        def row_body(r, carry):
            i = lo + r
            # Scalar id read BEFORE the wait: .wait() breaks SMEM sst->sld
            # forwarding, so hoisting the read avoids a per-row scalar stall.
            tok_next = read_tok(i + nbuf)
            wait_slot(i % nbuf)                        # row i landed in out_ref

            @pl.when(i + nbuf < token_block)
            def _():
                start_row(i + nbuf, tok_next)

            return carry
        return row_body

    def slab_body(s, carry):
        lo = pl.multiple_of(s * slab, slab)
        jax.lax.fori_loop(0, slab, make_row_body(lo), 0)
        # All rows [lo, lo+slab) have been waited on; in-flight DMAs only target
        # later rows, so this full-vreg scale overlaps the remaining DMAs
        # instead of running as a serial epilogue after the whole tile lands.
        out_ref[pl.ds(lo, slab), :] = (out_ref[pl.ds(lo, slab), :] * scale
                                       ).astype(out_ref.dtype)
        return carry

    jax.lax.fori_loop(0, token_block // slab, slab_body, 0)


def input_embeddings(ids, table, *, force_hbm_gather=False,
                     token_block=TOKEN_BLOCK):
    """Pallas equivalent of InputEmbeddings.forward: table[ids] * sqrt(d_model)."""
    B, S = ids.shape
    V, D = table.shape
    n = B * S
    itemsize = table.dtype.itemsize
    scale = float(math.sqrt(D))
    budget = _vmem_budget_bytes()

    # Grouping factor = one full sublane slab for the table dtype.
    group = max(8, 32 // itemsize)

    # --- token block selection ---------------------------------------------
    tb = _round_up(min(token_block, _round_up(n, group)), group)
    # >= 2 grid steps so both TensorCores get work on v7x (cheap elsewhere).
    if _round_up(n, tb) // tb < 2 and tb > group:
        tb = _round_up(max(group, tb // 2), group)
    # Keep the double-buffered output tile to <= ~1/4 of the VMEM budget so a
    # large d_model doesn't crowd out the resident table (esp. 64 MiB v7x).
    while tb > 2 * group and 2 * tb * D * itemsize > budget // 4:
        tb = _round_up(tb // 2, group)
    n_pad = _round_up(n, tb)
    n_blocks = n_pad // tb

    ids_flat = ids.reshape(n).astype(jnp.int32)
    if n_pad != n:
        ids_flat = jnp.pad(ids_flat, (0, n_pad - n))   # pad with id 0 (valid row)
    # TODO(synk): for very long inputs (n_pad >~ 100K tokens) the scalar-prefetched
    # id vector may exceed SMEM; chunk the call along the token axis in that case.

    table_bytes = V * D * itemsize
    out_tile_bytes = tb * D * itemsize
    margin = 4 << 20

    fits_single = table_bytes + 2 * out_tile_bytes + margin <= budget
    fits_double = 2 * table_bytes + 2 * out_tile_bytes + margin <= budget

    # Candidate configurations, fastest first.  The VMEM-resident gather is
    # strongly preferred whenever the table fits: sub-KiB row DMAs on the HBM
    # path are descriptor/latency bound on every TPU generation.
    candidates = []
    if not force_hbm_gather:
        if fits_single:
            candidates.append(("vmem", 1))    # single-buffered resident table
        if fits_double:
            candidates.append(("vmem", 2))    # fallback if Buffered(1) rejected
    candidates.append(("hbm", 0))

    def build(path, table_bufs):
        out_spec = pl.BlockSpec((tb, D), lambda i, ids_ref: (i, 0))
        if path == "vmem":
            kernel = functools.partial(_embed_vmem_gather_kernel, scale=scale,
                                       token_block=tb, group=group)
            if table_bufs == 1:
                # Constant block index -> never re-fetched; single-buffering
                # halves the table's VMEM footprint (raises residency threshold).
                tbl_spec = pl.BlockSpec((V, D), lambda i, ids_ref: (0, 0),
                                        pipeline_mode=pl.Buffered(1))
            else:
                tbl_spec = pl.BlockSpec((V, D), lambda i, ids_ref: (0, 0))
            in_specs = [tbl_spec]
            scratch = []
            vmem_need = table_bufs * table_bytes + 2 * out_tile_bytes + margin
        else:
            row_bytes = D * itemsize
            # Size outstanding row DMAs by bytes in flight, not a fixed count.
            nbuf = min(tb, max(8, min(MAX_NBUF,
                                      (INFLIGHT_BYTES + row_bytes - 1) // row_bytes)))
            slab = math.gcd(tb, 64)            # scale granularity; divides tb
            kernel = functools.partial(_embed_hbm_gather_kernel, scale=scale,
                                       token_block=tb, nbuf=nbuf, slab=slab,
                                       vocab=V)
            in_specs = [pl.BlockSpec(memory_space=pl.ANY)]   # table stays in HBM
            scratch = [pltpu.SemaphoreType.DMA((nbuf,))]
            vmem_need = 2 * out_tile_bytes + margin

        vmem_limit = int(min(max(vmem_need, 16 << 20), budget))
        return pl.pallas_call(
            kernel,
            out_shape=jax.ShapeDtypeStruct((n_pad, D), table.dtype),
            grid_spec=pltpu.PrefetchScalarGridSpec(
                num_scalar_prefetch=1,
                grid=(n_blocks,),
                in_specs=in_specs,
                out_specs=out_spec,
                scratch_shapes=scratch),
            compiler_params=pltpu.CompilerParams(
                dimension_semantics=("parallel",),
                vmem_limit_bytes=vmem_limit),
        )

    out_flat = None
    for idx, (path, bufs) in enumerate(candidates):
        try:
            out_flat = build(path, bufs)(ids_flat, table)
            break
        except Exception:
            if idx == len(candidates) - 1:
                raise   # last candidate: surface the real error

    return out_flat[:n].reshape(B, S, D)


if __name__ == "__main__":
    # Small, deterministic synthetic setup.
    d_model = 128
    vocab_size = 512
    batch, seq = 2, 64

    key_ids, key_tbl, key_ids2 = jax.random.split(jax.random.PRNGKey(0), 3)
    x = jax.random.randint(key_ids, (batch, seq), 0, vocab_size, dtype=jnp.int32)
    # nn.Embedding default init: N(0, 1)
    embedding_table = jax.random.normal(key_tbl, (vocab_size, d_model),
                                        dtype=jnp.float32)

    ref = embedding_table[x] * math.sqrt(d_model)

    # Path A: VMEM-resident table, grouped full-vreg stores (auto-selected).
    out_vmem = jax.block_until_ready(input_embeddings(x, embedding_table))
    assert out_vmem.shape == (batch, seq, d_model)
    assert jnp.allclose(out_vmem, ref, atol=1e-5, rtol=1e-5)

    # Path B: HBM-resident table, multi-buffered row-DMA gather (forced here to
    # exercise the large-vocab regime at small shapes).
    out_hbm = jax.block_until_ready(
        input_embeddings(x, embedding_table, force_hbm_gather=True))
    assert jnp.allclose(out_hbm, ref, atol=1e-5, rtol=1e-5)

    # Ragged token count: exercises id padding, small token blocks and the
    # >=2-block split on both paths.
    x2 = jax.random.randint(key_ids2, (2, 17), 0, vocab_size, dtype=jnp.int32)
    ref2 = embedding_table[x2] * math.sqrt(d_model)
    out2a = jax.block_until_ready(input_embeddings(x2, embedding_table))
    out2b = jax.block_until_ready(
        input_embeddings(x2, embedding_table, force_hbm_gather=True))
    assert jnp.allclose(out2a, ref2, atol=1e-5, rtol=1e-5)
    assert jnp.allclose(out2b, ref2, atol=1e-5, rtol=1e-5)

    print("KERNEL_OK")
</pallas_src>

<mosaic_0001>
module attributes {stable_mosaic.version = 11 : i64} {
  func.func @_embed_vmem_gather_kernel(%arg0: i32, %arg1: memref<128xi32, #tpu.memory_space<smem>>, %arg2: memref<512x128xf32, #tpu.memory_space<vmem>>, %arg3: memref<64x128xf32, #tpu.memory_space<vmem>>) attributes {dimension_semantics = [#tpu.dimension_semantics<parallel>], iteration_bounds = array<i64: 2>, scalar_prefetch = 1 : i64, scratch_operands = 0 : i64, tpu.core_type = #tpu.core_type<tc>, window_params = [{pipeline_mode = #tpu.pipeline_mode<synchronous>, transform_indices = @transform_0, window_bounds = array<i64: 512, 128>}, {transform_indices = @transform_1, window_bounds = array<i64: 64, 128>}]} {
    %c64_i32 = arith.constant 64 : i32
    %0 = arith.muli %arg0, %c64_i32 : i32
    %c0_i32 = arith.constant 0 : i32
    %c8_i32 = arith.constant 8 : i32
    %1 = arith.addi %c0_i32, %c8_i32 : i32
    %c1_i32 = arith.constant 1 : i32
    scf.for %arg4 = %c0_i32 to %1 step %c1_i32  : i32 {
      %c8_i32_1 = arith.constant 8 : i32
      %2 = arith.muli %arg4, %c8_i32_1 : i32
      %3 = tpu.assume_multiple %2, 8 : i32
      %4 = arith.addi %0, %3 : i32
      %c0_i32_2 = arith.constant 0 : i32
      %5 = arith.addi %4, %c0_i32_2 : i32
      %6 = arith.index_cast %5 : i32 to index
      %7 = memref.load %arg1[%6] : memref<128xi32, #tpu.memory_space<smem>>
      %c0_i32_3 = arith.constant 0 : i32
      %c511_i32 = arith.constant 511 : i32
      %8 = arith.maxsi %c0_i32_3, %7 : i32
      %9 = arith.minsi %c511_i32, %8 : i32
      %10 = arith.index_cast %9 : i32 to index
      %c0 = arith.constant 0 : index
      %11 = vector.load %arg2[%10, %c0] : memref<512x128xf32, #tpu.memory_space<vmem>>, vector<1x128xf32>
      %12 = arith.addi %0, %3 : i32
      %c1_i32_4 = arith.constant 1 : i32
      %13 = arith.addi %12, %c1_i32_4 : i32
      %14 = arith.index_cast %13 : i32 to index
      %15 = memref.load %arg1[%14] : memref<128xi32, #tpu.memory_space<smem>>
      %c0_i32_5 = arith.constant 0 : i32
      %c511_i32_6 = arith.constant 511 : i32
      %16 = arith.maxsi %c0_i32_5, %15 : i32
      %17 = arith.minsi %c511_i32_6, %16 : i32
      %18 = arith.index_cast %17 : i32 to index
      %c0_7 = arith.constant 0 : index
      %19 = vector.load %arg2[%18, %c0_7] : memref<512x128xf32, #tpu.memory_space<vmem>>, vector<1x128xf32>
      %20 = arith.addi %0, %3 : i32
      %c2_i32 = arith.constant 2 : i32
      %21 = arith.addi %20, %c2_i32 : i32
      %22 = arith.index_cast %21 : i32 to index
      %23 = memref.load %arg1[%22] : memref<128xi32, #tpu.memory_space<smem>>
      %c0_i32_8 = arith.constant 0 : i32
      %c511_i32_9 = arith.constant 511 : i32
      %24 = arith.maxsi %c0_i32_8, %23 : i32
      %25 = arith.minsi %c511_i32_9, %24 : i32
      %26 = arith.index_cast %25 : i32 to index
      %c0_10 = arith.constant 0 : index
      %27 = vector.load %arg2[%26, %c0_10] : memref<512x128xf32, #tpu.memory_space<vmem>>, vector<1x128xf32>
      %28 = arith.addi %0, %3 : i32
      %c3_i32 = arith.constant 3 : i32
      %29 = arith.addi %28, %c3_i32 : i32
      %30 = arith.index_cast %29 : i32 to index
      %31 = memref.load %arg1[%30] : memref<128xi32, #tpu.memory_space<smem>>
      %c0_i32_11 = arith.constant 0 : i32
      %c511_i32_12 = arith.constant 511 : i32
      %32 = arith.maxsi %c0_i32_11, %31 : i32
      %33 = arith.minsi %c511_i32_12, %32 : i32
      %34 = arith.index_cast %33 : i32 to index
      %c0_13 = arith.constant 0 : index
      %35 = vector.load %arg2[%34, %c0_13] : memref<512x128xf32, #tpu.memory_space<vmem>>, vector<1x128xf32>
      %36 = arith.addi %0, %3 : i32
      %c4_i32 = arith.constant 4 : i32
      %37 = arith.addi %36, %c4_i32 : i32
      %38 = arith.index_cast %37 : i32 to index
      %39 = memref.load %arg1[%38] : memref<128xi32, #tpu.memory_space<smem>>
      %c0_i32_14 = arith.constant 0 : i32
      %c511_i32_15 = arith.constant 511 : i32
      %40 = arith.maxsi %c0_i32_14, %39 : i32
      %41 = arith.minsi %c511_i32_15, %40 : i32
      %42 = arith.index_cast %41 : i32 to index
      %c0_16 = arith.constant 0 : index
      %43 = vector.load %arg2[%42, %c0_16] : memref<512x128xf32, #tpu.memory_space<vmem>>, vector<1x128xf32>
      %44 = arith.addi %0, %3 : i32
      %c5_i32 = arith.constant 5 : i32
      %45 = arith.addi %44, %c5_i32 : i32
      %46 = arith.index_cast %45 : i32 to index
      %47 = memref.load %arg1[%46] : memref<128xi32, #tpu.memory_space<smem>>
      %c0_i32_17 = arith.constant 0 : i32
      %c511_i32_18 = arith.constant 511 : i32
      %48 = arith.maxsi %c0_i32_17, %47 : i32
      %49 = arith.minsi %c511_i32_18, %48 : i32
      %50 = arith.index_cast %49 : i32 to index
      %c0_19 = arith.constant 0 : index
      %51 = vector.load %arg2[%50, %c0_19] : memref<512x128xf32, #tpu.memory_space<vmem>>, vector<1x128xf32>
      %52 = arith.addi %0, %3 : i32
      %c6_i32 = arith.constant 6 : i32
      %53 = arith.addi %52, %c6_i32 : i32
      %54 = arith.index_cast %53 : i32 to index
      %55 = memref.load %arg1[%54] : memref<128xi32, #tpu.memory_space<smem>>
      %c0_i32_20 = arith.constant 0 : i32
      %c511_i32_21 = arith.constant 511 : i32
      %56 = arith.maxsi %c0_i32_20, %55 : i32
      %57 = arith.minsi %c511_i32_21, %56 : i32
      %58 = arith.index_cast %57 : i32 to index
      %c0_22 = arith.constant 0 : index
      %59 = vector.load %arg2[%58, %c0_22] : memref<512x128xf32, #tpu.memory_space<vmem>>, vector<1x128xf32>
      %60 = arith.addi %0, %3 : i32
      %c7_i32 = arith.constant 7 : i32
      %61 = arith.addi %60, %c7_i32 : i32
      %62 = arith.index_cast %61 : i32 to index
      %63 = memref.load %arg1[%62] : memref<128xi32, #tpu.memory_space<smem>>
      %c0_i32_23 = arith.constant 0 : i32
      %c511_i32_24 = arith.constant 511 : i32
      %64 = arith.maxsi %c0_i32_23, %63 : i32
      %65 = arith.minsi %c511_i32_24, %64 : i32
      %66 = arith.index_cast %65 : i32 to index
      %c0_25 = arith.constant 0 : index
      %67 = vector.load %arg2[%66, %c0_25] : memref<512x128xf32, #tpu.memory_space<vmem>>, vector<1x128xf32>
      %68 = tpu.concatenate %11, %19, %27, %35, %43, %51, %59, %67 in 0 : vector<1x128xf32>, vector<1x128xf32>, vector<1x128xf32>, vector<1x128xf32>, vector<1x128xf32>, vector<1x128xf32>, vector<1x128xf32>, vector<1x128xf32> -> vector<8x128xf32>
      %cst = arith.constant 11.3137083 : f32
      %69 = vector.broadcast %cst : f32 to vector<8x128xf32>
      %70 = arith.mulf %68, %69 : vector<8x128xf32>
      %71 = arith.index_cast %3 : i32 to index
      %c0_26 = arith.constant 0 : index
      %72 = vector.load %arg3[%71, %c0_26] : memref<64x128xf32, #tpu.memory_space<vmem>>, vector<8x128xf32>
      tpu.vector_store %arg3[%71, %c0_26], %70 {strides = array<i32>} : memref<64x128xf32, #tpu.memory_space<vmem>>, vector<8x128xf32>,
    }
    %c8_i32_0 = arith.constant 8 : i32
    return
  }
  func.func @transform_0(%arg0: i32, %arg1: memref<128xi32, #tpu.memory_space<smem>>) -> (i32, i32) {
    %c0_i32 = arith.constant 0 : i32
    %c0_i32_0 = arith.constant 0 : i32
    %c0_i32_1 = arith.constant 0 : i32
    return %c0_i32, %c0_i32_0 : i32, i32
  }
  func.func @transform_1(%arg0: i32, %arg1: memref<128xi32, #tpu.memory_space<smem>>) -> (i32, i32) {
    %c0_i32 = arith.constant 0 : i32
    %c0_i32_0 = arith.constant 0 : i32
    return %arg0, %c0_i32 : i32, i32
  }
}

module attributes {stable_mosaic.version = 11 : i64} {
  func.func @_embed_vmem_gather_kernel(%arg0: i32, %arg1: memref<128xi32, #tpu.memory_space<smem>>, %arg2: memref<512x128xf32, #tpu.memory_space<vmem>>, %arg3: memref<64x128xf32, #tpu.memory_space<vmem>>) attributes {dimension_semantics = [#tpu.dimension_semantics<parallel>], iteration_bounds = array<i64: 2>, scalar_prefetch = 1 : i64, scratch_operands = 0 : i64, tpu.core_type = #tpu.core_type<tc>, window_params = [{pipeline_mode = #tpu.pipeline_mode<synchronous>, transform_indices = @transform_0, window_bounds = array<i64: 512, 128>}, {transform_indices = @transform_1, window_bounds = array<i64: 64, 128>}]} {
    %c64_i32 = arith.constant 64 : i32
    %0 = arith.muli %arg0, %c64_i32 : i32
    %c0_i32 = arith.constant 0 : i32
    %c8_i32 = arith.constant 8 : i32
    %1 = arith.addi %c0_i32, %c8_i32 : i32
    %c1_i32 = arith.constant 1 : i32
    scf.for %arg4 = %c0_i32 to %1 step %c1_i32  : i32 {
      %c8_i32_1 = arith.constant 8 : i32
      %2 = arith.muli %arg4, %c8_i32_1 : i32
      %3 = tpu.assume_multiple %2, 8 : i32
      %4 = arith.addi %0, %3 : i32
      %c0_i32_2 = arith.constant 0 : i32
      %5 = arith.addi %4, %c0_i32_2 : i32
      %6 = arith.index_cast %5 : i32 to index
      %7 = memref.load %arg1[%6] : memref<128xi32, #tpu.memory_space<smem>>
      %c0_i32_3 = arith.constant 0 : i32
      %c511_i32 = arith.constant 511 : i32
      %8 = arith.maxsi %c0_i32_3, %7 : i32
      %9 = arith.minsi %c511_i32, %8 : i32
      %10 = arith.index_cast %9 : i32 to index
      %c0 = arith.constant 0 : index
      %11 = vector.load %arg2[%10, %c0] : memref<512x128xf32, #tpu.memory_space<vmem>>, vector<1x128xf32>
      %12 = arith.addi %0, %3 : i32
      %c1_i32_4 = arith.constant 1 : i32
      %13 = arith.addi %12, %c1_i32_4 : i32
      %14 = arith.index_cast %13 : i32 to index
      %15 = memref.load %arg1[%14] : memref<128xi32, #tpu.memory_space<smem>>
      %c0_i32_5 = arith.constant 0 : i32
      %c511_i32_6 = arith.constant 511 : i32
      %16 = arith.maxsi %c0_i32_5, %15 : i32
      %17 = arith.minsi %c511_i32_6, %16 : i32
      %18 = arith.index_cast %17 : i32 to index
      %c0_7 = arith.constant 0 : index
      %19 = vector.load %arg2[%18, %c0_7] : memref<512x128xf32, #tpu.memory_space<vmem>>, vector<1x128xf32>
      %20 = arith.addi %0, %3 : i32
      %c2_i32 = arith.constant 2 : i32
      %21 = arith.addi %20, %c2_i32 : i32
      %22 = arith.index_cast %21 : i32 to index
      %23 = memref.load %arg1[%22] : memref<128xi32, #tpu.memory_space<smem>>
      %c0_i32_8 = arith.constant 0 : i32
      %c511_i32_9 = arith.constant 511 : i32
      %24 = arith.maxsi %c0_i32_8, %23 : i32
      %25 = arith.minsi %c511_i32_9, %24 : i32
      %26 = arith.index_cast %25 : i32 to index
      %c0_10 = arith.constant 0 : index
      %27 = vector.load %arg2[%26, %c0_10] : memref<512x128xf32, #tpu.memory_space<vmem>>, vector<1x128xf32>
      %28 = arith.addi %0, %3 : i32
      %c3_i32 = arith.constant 3 : i32
      %29 = arith.addi %28, %c3_i32 : i32
      %30 = arith.index_cast %29 : i32 to index
      %31 = memref.load %arg1[%30] : memref<128xi32, #tpu.memory_space<smem>>
      %c0_i32_11 = arith.constant 0 : i32
      %c511_i32_12 = arith.constant 511 : i32
      %32 = arith.maxsi %c0_i32_11, %31 : i32
      %33 = arith.minsi %c511_i32_12, %32 : i32
      %34 = arith.index_cast %33 : i32 to index
      %c0_13 = arith.constant 0 : index
      %35 = vector.load %arg2[%34, %c0_13] : memref<512x128xf32, #tpu.memory_space<vmem>>, vector<1x128xf32>
      %36 = arith.addi %0, %3 : i32
      %c4_i32 = arith.constant 4 : i32
      %37 = arith.addi %36, %c4_i32 : i32
      %38 = arith.index_cast %37 : i32 to index
      %39 = memref.load %arg1[%38] : memref<128xi32, #tpu.memory_space<smem>>
      %c0_i32_14 = arith.constant 0 : i32
      %c511_i32_15 = arith.constant 511 : i32
      %40 = arith.maxsi %c0_i32_14, %39 : i32
      %41 = arith.minsi %c511_i32_15, %40 : i32
      %42 = arith.index_cast %41 : i32 to index
      %c0_16 = arith.constant 0 : index
      %43 = vector.load %arg2[%42, %c0_16] : memref<512x128xf32, #tpu.memory_space<vmem>>, vector<1x128xf32>
      %44 = arith.addi %0, %3 : i32
      %c5_i32 = arith.constant 5 : i32
      %45 = arith.addi %44, %c5_i32 : i32
      %46 = arith.index_cast %45 : i32 to index
      %47 = memref.load %arg1[%46] : memref<128xi32, #tpu.memory_space<smem>>
      %c0_i32_17 = arith.constant 0 : i32
      %c511_i32_18 = arith.constant 511 : i32
      %48 = arith.maxsi %c0_i32_17, %47 : i32
      %49 = arith.minsi %c511_i32_18, %48 : i32
      %50 = arith.index_cast %49 : i32 to index
      %c0_19 = arith.constant 0 : index
      %51 = vector.load %arg2[%50, %c0_19] : memref<512x128xf32, #tpu.memory_space<vmem>>, vector<1x128xf32>
      %52 = arith.addi %0, %3 : i32
      %c6_i32 = arith.constant 6 : i32
      %53 = arith.addi %52, %c6_i32 : i32
      %54 = arith.index_cast %53 : i32 to index
      %55 = memref.load %arg1[%54] : memref<128xi32, #tpu.memory_space<smem>>
      %c0_i32_20 = arith.constant 0 : i32
      %c511_i32_21 = arith.constant 511 : i32
      %56 = arith.maxsi %c0_i32_20, %55 : i32
      %57 = arith.minsi %c511_i32_21, %56 : i32
      %58 = arith.index_cast %57 : i32 to index
      %c0_22 = arith.constant 0 : index
      %59 = vector.load %arg2[%58, %c0_22] : memref<512x128xf32, #tpu.memory_space<vmem>>, vector<1x128xf32>
      %60 = arith.addi %0, %3 : i32
      %c7_i32 = arith.constant 7 : i32
      %61 = arith.addi %60, %c7_i32 : i32
      %62 = arith.index_cast %61 : i32 to index
      %63 = memref.load %arg1[%62] : memref<128xi32, #tpu.memory_space<smem>>
      %c0_i32_23 = arith.constant 0 : i32
      %c511_i32_24 = arith.constant 511 : i32
      %64 = arith.maxsi %c0_i32_23, %63 : i32
      %65 = arith.minsi %c511_i32_24, %64 : i32
      %66 = arith.index_cast %65 : i32 to index
      %c0_25 = arith.constant 0 : index
      %67 = vector.load %arg2[%66, %c0_25] : memref<512x128xf32, #tpu.memory_space<vmem>>, vector<1x128xf32>
      %68 = tpu.concatenate %11, %19, %27, %35, %43, %51, %59, %67 in 0 : vector<1x128xf32>, vector<1x128xf32>, vector<1x128xf32>, vector<1x128xf32>, vector<1x128xf32>, vector<1x128xf32>, vector<1x128xf32>, vector<1x128xf32> -> vector<8x128xf32>
      %cst = arith.constant 11.3137083 : f32
      %69 = vector.broadcast %cst : f32 to vector<8x128xf32>
      %70 = arith.mulf %68, %69 : vector<8x128xf32>
      %71 = arith.index_cast %3 : i32 to index
      %c0_26 = arith.constant 0 : index
      %72 = vector.load %arg3[%71, %c0_26] : memref<64x128xf32, #tpu.memory_space<vmem>>, vector<8x128xf32>
      tpu.vector_store %arg3[%71, %c0_26], %70 {strides = array<i32>} : memref<64x128xf32, #tpu.memory_space<vmem>>, vector<8x128xf32>,
    }
    %c8_i32_0 = arith.constant 8 : i32
    return
  }
  func.func @transform_0(%arg0: i32, %arg1: memref<128xi32, #tpu.memory_space<smem>>) -> (i32, i32) {
    %c0_i32 = arith.constant 0 : i32
    %c0_i32_0 = arith.constant 0 : i32
    %c0_i32_1 = arith.constant 0 : i32
    return %c0_i32, %c0_i32_0 : i32, i32
  }
  func.func @transform_1(%arg0: i32, %arg1: memref<128xi32, #tpu.memory_space<smem>>) -> (i32, i32) {
    %c0_i32 = arith.constant 0 : i32
    %c0_i32_0 = arith.constant 0 : i32
    return %arg0, %c0_i32 : i32, i32
  }
}

module attributes {stable_mosaic.version = 11 : i64} {
  func.func @_embed_hbm_gather_kernel(%arg0: i32, %arg1: memref<128xi32, #tpu.memory_space<smem>>, %arg2: memref<512x128xf32, #tpu.memory_space<any>>, %arg3: memref<64x128xf32, #tpu.memory_space<vmem>>, %arg4: memref<32x!tpu.dma_semaphore, #tpu.memory_space<semaphore_mem>>) attributes {dimension_semantics = [#tpu.dimension_semantics<parallel>], iteration_bounds = array<i64: 2>, scalar_prefetch = 1 : i64, scratch_operands = 1 : i64, tpu.core_type = #tpu.core_type<tc>, window_params = [{}, {transform_indices = @transform_1, window_bounds = array<i64: 64, 128>}]} {
    %c64_i32 = arith.constant 64 : i32
    %0 = arith.muli %arg0, %c64_i32 : i32
    %c0_i32 = arith.constant 0 : i32
    %1 = arith.addi %0, %c0_i32 : i32
    %c127_i32 = arith.constant 127 : i32
    %2 = arith.minsi %1, %c127_i32 : i32
    %3 = arith.index_cast %2 : i32 to index
    %4 = memref.load %arg1[%3] : memref<128xi32, #tpu.memory_space<smem>>
    %c0_i32_0 = arith.constant 0 : i32
    %c511_i32 = arith.constant 511 : i32
    %5 = arith.maxsi %c0_i32_0, %4 : i32
    %6 = arith.minsi %c511_i32, %5 : i32
    %c0_i32_1 = arith.constant 0 : i32
    %c0_i32_2 = arith.constant 0 : i32
    %c0_i32_3 = arith.constant 0 : i32
    %7 = tpu.memref_slice %arg2[%6, %c0_i32_3] : memref<512x128xf32, #tpu.memory_space<any>> -> memref<1x128xf32, #tpu.memory_space<any>>
    %8 = tpu.memref_squeeze %7 : memref<1x128xf32, #tpu.memory_space<any>> -> memref<128xf32, #tpu.memory_space<any>>
    %c0_i32_4 = arith.constant 0 : i32
    %9 = tpu.memref_slice %arg3[%c0_i32_1, %c0_i32_4] : memref<64x128xf32, #tpu.memory_space<vmem>> -> memref<1x128xf32, #tpu.memory_space<vmem>>
    %10 = tpu.memref_squeeze %9 : memref<1x128xf32, #tpu.memory_space<vmem>> -> memref<128xf32, #tpu.memory_space<vmem>>
    %11 = tpu.memref_slice %arg4[%c0_i32_2] : memref<32x!tpu.dma_semaphore, #tpu.memory_space<semaphore_mem>> -> memref<1x!tpu.dma_semaphore, #tpu.memory_space<semaphore_mem>>
    %12 = tpu.memref_squeeze %11 : memref<1x!tpu.dma_semaphore, #tpu.memory_space<semaphore_mem>> -> memref<!tpu.dma_semaphore, #tpu.memory_space<semaphore_mem>>
    tpu.enqueue_dma source(%8 : memref<128xf32, #tpu.memory_space<any>>) target(%10 : memref<128xf32, #tpu.memory_space<vmem>>) target_semaphore(%12 : memref<!tpu.dma_semaphore, #tpu.memory_space<semaphore_mem>>)
    %c1_i32 = arith.constant 1 : i32
    %13 = arith.addi %0, %c1_i32 : i32
    %c127_i32_5 = arith.constant 127 : i32
    %14 = arith.minsi %13, %c127_i32_5 : i32
    %15 = arith.index_cast %14 : i32 to index
    %16 = memref.load %arg1[%15] : memref<128xi32, #tpu.memory_space<smem>>
    %c0_i32_6 = arith.constant 0 : i32
    %c511_i32_7 = arith.constant 511 : i32
    %17 = arith.maxsi %c0_i32_6, %16 : i32
    %18 = arith.minsi %c511_i32_7, %17 : i32
    %c1_i32_8 = arith.constant 1 : i32
    %c1_i32_9 = arith.constant 1 : i32
    %c0_i32_10 = arith.constant 0 : i32
    %19 = tpu.memref_slice %arg2[%18, %c0_i32_10] : memref<512x128xf32, #tpu.memory_space<any>> -> memref<1x128xf32, #tpu.memory_space<any>>
    %20 = tpu.memref_squeeze %19 : memref<1x128xf32, #tpu.memory_space<any>> -> memref<128xf32, #tpu.memory_space<any>>
    %c0_i32_11 = arith.constant 0 : i32
    %21 = tpu.memref_slice %arg3[%c1_i32_8, %c0_i32_11] : memref<64x128xf32, #tpu.memory_space<vmem>> -> memref<1x128xf32, #tpu.memory_space<vmem>>
    %22 = tpu.memref_squeeze %21 : memref<1x128xf32, #tpu.memory_space<vmem>> -> memref<128xf32, #tpu.memory_space<vmem>>
    %23 = tpu.memref_slice %arg4[%c1_i32_9] : memref<32x!tpu.dma_semaphore, #tpu.memory_space<semaphore_mem>> -> memref<1x!tpu.dma_semaphore, #tpu.memory_space<semaphore_mem>>
    %24 = tpu.memref_squeeze %23 : memref<1x!tpu.dma_semaphore, #tpu.memory_space<semaphore_mem>> -> memref<!tpu.dma_semaphore, #tpu.memory_space<semaphore_mem>>
    tpu.enqueue_dma source(%20 : memref<128xf32, #tpu.memory_space<any>>) target(%22 : memref<128xf32, #tpu.memory_space<vmem>>) target_semaphore(%24 : memref<!tpu.dma_semaphore, #tpu.memory_space<semaphore_mem>>)
    %c2_i32 = arith.constant 2 : i32
    %25 = arith.addi %0, %c2_i32 : i32
    %c127_i32_12 = arith.constant 127 : i32
    %26 = arith.minsi %25, %c127_i32_12 : i32
    %27 = arith.index_cast %26 : i32 to index
    %28 = memref.load %arg1[%27] : memref<128xi32, #tpu.memory_space<smem>>
    %c0_i32_13 = arith.constant 0 : i32
    %c511_i32_14 = arith.constant 511 : i32
    %29 = arith.maxsi %c0_i32_13, %28 : i32
    %30 = arith.minsi %c511_i32_14, %29 : i32
    %c2_i32_15 = arith.constant 2 : i32
    %c2_i32_16 = arith.constant 2 : i32
    %c0_i32_17 = arith.constant 0 : i32
    %31 = tpu.memref_slice %arg2[%30, %c0_i32_17] : memref<512x128xf32, #tpu.memory_space<any>> -> memref<1x128xf32, #tpu.memory_space<any>>
    %32 = tpu.memref_squeeze %31 : memref<1x128xf32, #tpu.memory_space<any>> -> memref<128xf32, #tpu.memory_space<any>>
    %c0_i32_18 = arith.constant 0 : i32
    %33 = tpu.memref_slice %arg3[%c2_i32_15, %c0_i32_18] : memref<64x128xf32, #tpu.memory_space<vmem>> -> memref<1x128xf32, #tpu.memory_space<vmem>>
    %34 = tpu.memref_squeeze %33 : memref<1x128xf32, #tpu.memory_space<vmem>> -> memref<128xf32, #tpu.memory_space<vmem>>
    %35 = tpu.memref_slice %arg4[%c2_i32_16] : memref<32x!tpu.dma_semaphore, #tpu.memory_space<semaphore_mem>> -> memref<1x!tpu.dma_semaphore, #tpu.memory_space<semaphore_mem>>
    %36 = tpu.memref_squeeze %35 : memref<1x!tpu.dma_semaphore, #tpu.memory_space<semaphore_mem>> -> memref<!tpu.dma_semaphore, #tpu.memory_space<semaphore_mem>>
    tpu.enqueue_dma source(%32 : memref<128xf32, #tpu.memory_space<any>>) target(%34 : memref<128xf32, #tpu.memory_space<vmem>>) target_semaphore(%36 : memref<!tpu.dma_semaphore, #tpu.memory_space<semaphore_mem>>)
    %c3_i32 = arith.constant 3 : i32
    %37 = arith.addi %0, %c3_i32 : i32
    %c127_i32_19 = arith.constant 127 : i32
    %38 = arith.minsi %37, %c127_i32_19 : i32
    %39 = arith.index_cast %38 : i32 to index
    %40 = memref.load %arg1[%39] : memref<128xi32, #tpu.memory_space<smem>>
    %c0_i32_20 = arith.constant 0 : i32
    %c511_i32_21 = arith.constant 511 : i32
    %41 = arith.maxsi %c0_i32_20, %40 : i32
    %42 = arith.minsi %c511_i32_21, %41 : i32
    %c3_i32_22 = arith.constant 3 : i32
    %c3_i32_23 = arith.constant 3 : i32
    %c0_i32_24 = arith.constant 0 : i32
    %43 = tpu.memref_slice %arg2[%42, %c0_i32_24] : memref<512x128xf32, #tpu.memory_space<any>> -> memref<1x128xf32, #tpu.memory_space<any>>
    %44 = tpu.memref_squeeze %43 : memref<1x128xf32, #tpu.memory_space<any>> -> memref<128xf32, #tpu.memory_space<any>>
    %c0_i32_25 = arith.constant 0 : i32
    %45 = tpu.memref_slice %arg3[%c3_i32_22, %c0_i32_25] : memref<64x128xf32, #tpu.memory_space<vmem>> -> memref<1x128xf32, #tpu.memory_space<vmem>>
    %46 = tpu.memref_squeeze %45 : memref<1x128xf32, #tpu.memory_space<vmem>> -> memref<128xf32, #tpu.memory_space<vmem>>
    %47 = tpu.memref_slice %arg4[%c3_i32_23] : memref<32x!tpu.dma_semaphore, #tpu.memory_space<semaphore_mem>> -> memref<1x!tpu.dma_semaphore, #tpu.memory_space<semaphore_mem>>
    %48 = tpu.memref_squeeze %47 : memref<1x!tpu.dma_semaphore, #tpu.memory_space<semaphore_mem>> -> memref<!tpu.dma_semaphore, #tpu.memory_space<semaphore_mem>>
    tpu.enqueue_dma source(%44 : memref<128xf32, #tpu.memory_space<any>>) target(%46 : memref<128xf32, #tpu.memory_space<vmem>>) target_semaphore(%48 : memref<!tpu.dma_semaphore, #tpu.memory_space<semaphore_mem>>)
    %c4_i32 = arith.constant 4 : i32
    %49 = arith.addi %0, %c4_i32 : i32
    %c127_i32_26 = arith.constant 127 : i32
    %50 = arith.minsi %49, %c127_i32_26 : i32
    %51 = arith.index_cast %50 : i32 to index
    %52 = memref.load %arg1[%51] : memref<128xi32, #tpu.memory_space<smem>>
    %c0_i32_27 = arith.constant 0 : i32
    %c511_i32_28 = arith.constant 511 : i32
    %53 = arith.maxsi %c0_i32_27, %52 : i32
    %54 = arith.minsi %c511_i32_28, %53 : i32
    %c4_i32_29 = arith.constant 4 : i32
    %c4_i32_30 = arith.constant 4 : i32
    %c0_i32_31 = arith.constant 0 : i32
    %55 = tpu.memref_slice %arg2[%54, %c0_i32_31] : memref<512x128xf32, #tpu.memory_space<any>> -> memref<1x128xf32, #tpu.memory_space<any>>
    %56 = tpu.memref_squeeze %55 : memref<1x128xf32, #tpu.memory_space<any>> -> memref<128xf32, #tpu.memory_space<any>>
    %c0_i32_32 = arith.constant 0 : i32
    %57 = tpu.memref_slice %arg3[%c4_i32_29, %c0_i32_32] : memref<64x128xf32, #tpu.memory_space<vmem>> -> memref<1x128xf32, #tpu.memory_space<vmem>>
    %58 = tpu.memref_squeeze %57 : memref<1x128xf32, #tpu.memory_space<vmem>> -> memref<128xf32, #tpu.memory_space<vmem>>
    %59 = tpu.memref_slice %arg4[%c4_i32_30] : memref<32x!tpu.dma_semaphore, #tpu.memory_space<semaphore_mem>> -> memref<1x!tpu.dma_semaphore, #tpu.memory_space<semaphore_mem>>
    %60 = tpu.memref_squeeze %59 : memref<1x!tpu.dma_semaphore, #tpu.memory_space<semaphore_mem>> -> memref<!tpu.dma_semaphore, #tpu.memory_space<semaphore_mem>>
    tpu.enqueue_dma source(%56 : memref<128xf32, #tpu.memory_space<any>>) target(%58 : memref<128xf32, #tpu.memory_space<vmem>>) target_semaphore(%60 : memref<!tpu.dma_semaphore, #tpu.memory_space<semaphore_mem>>)
    %c5_i32 = arith.constant 5 : i32
    %61 = arith.addi %0, %c5_i32 : i32
    %c127_i32_33 = arith.constant 127 : i32
    %62 = arith.minsi %61, %c127_i32_33 : i32
    %63 = arith.index_cast %62 : i32 to index
    %64 = memref.load %arg1[%63] : memref<128xi32, #tpu.memory_space<smem>>
    %c0_i32_34 = arith.constant 0 : i32
    %c511_i32_35 = arith.constant 511 : i32
    %65 = arith.maxsi %c0_i32_34, %64 : i32
    %66 = arith.minsi %c511_i32_35, %65 : i32
    %c5_i32_36 = arith.constant 5 : i32
    %c5_i32_37 = arith.constant 5 : i32
    %c0_i32_38 = arith.constant 0 : i32
    %67 = tpu.memref_slice %arg2[%66, %c0_i32_38] : memref<512x128xf32, #tpu.memory_space<any>> -> memref<1x128xf32, #tpu.memory_space<any>>
    %68 = tpu.memref_squeeze %67 : memref<1x128xf32, #tpu.memory_space<any>> -> memref<128xf32, #tpu.memory_space<any>>
    %c0_i32_39 = arith.constant 0 : i32
    %69 = tpu.memref_slice %arg3[%c5_i32_36, %c0_i32_39] : memref<64x128xf32, #tpu.memory_space<vmem>> -> memref<1x128xf32, #tpu.memory_space<vmem>>
    %70 = tpu.memref_squeeze %69 : memref<1x128xf32, #tpu.memory_space<vmem>> -> memref<128xf32, #tpu.memory_space<vmem>>
    %71 = tpu.memref_slice %arg4[%c5_i32_37] : memref<32x!tpu.dma_semaphore, #tpu.memory_space<semaphore_mem>> -> memref<1x!tpu.dma_semaphore, #tpu.memory_space<semaphore_mem>>
    %72 = tpu.memref_squeeze %71 : memref<1x!tpu.dma_semaphore, #tpu.memory_space<semaphore_mem>> -> memref<!tpu.dma_semaphore, #tpu.memory_space<semaphore_mem>>
    tpu.enqueue_dma source(%68 : memref<128xf32, #tpu.memory_space<any>>) target(%70 : memref<128xf32, #tpu.memory_space<vmem>>) target_semaphore(%72 : memref<!tpu.dma_semaphore, #tpu.memory_space<semaphore_mem>>)
    %c6_i32 = arith.constant 6 : i32
    %73 = arith.addi %0, %c6_i32 : i32
    %c127_i32_40 = arith.constant 127 : i32
    %74 = arith.minsi %73, %c127_i32_40 : i32
    %75 = arith.index_cast %74 : i32 to index
    %76 = memref.load %arg1[%75] : memref<128xi32, #tpu.memory_space<smem>>
    %c0_i32_41 = arith.constant 0 : i32
    %c511_i32_42 = arith.constant 511 : i32
    %77 = arith.maxsi %c0_i32_41, %76 : i32
    %78 = arith.minsi %c511_i32_42, %77 : i32
    %c6_i32_43 = arith.constant 6 : i32
    %c6_i32_44 = arith.constant 6 : i32
    %c0_i32_45 = arith.constant 0 : i32
    %79 = tpu.memref_slice %arg2[%78, %c0_i32_45] : memref<512x128xf32, #tpu.memory_space<any>> -> memref<1x128xf32, #tpu.memory_space<any>>
    %80 = tpu.memref_squeeze %79 : memref<1x128xf32, #tpu.memory_space<any>> -> memref<128xf32, #tpu.memory_space<any>>
    %c0_i32_46 = arith.constant 0 : i32
    %81 = tpu.memref_slice %arg3[%c6_i32_43, %c0_i32_46] : memref<64x128xf32, #tpu.memory_space<vmem>> -> memref<1x128xf32, #tpu.memory_space<vmem>>
    %82 = tpu.memref_squeeze %81 : memref<1x128xf32, #tpu.memory_space<vmem>> -> memref<128xf32, #tpu.memory_space<vmem>>
    %83 = tpu.memref_slice %arg4[%c6_i32_44] : memref<32x!tpu.dma_semaphore, #tpu.memory_space<semaphore_mem>> -> memref<1x!tpu.dma_semaphore, #tpu.memory_space<semaphore_mem>>
    %84 = tpu.memref_squeeze %83 : memref<1x!tpu.dma_semaphore, #tpu.memory_space<semaphore_mem>> -> memref<!tpu.dma_semaphore, #tpu.memory_space<semaphore_mem>>
    tpu.enqueue_dma source(%80 : memref<128xf32, #tpu.memory_space<any>>) target(%82 : memref<128xf32, #tpu.memory_space<vmem>>) target_semaphore(%84 : memref<!tpu.dma_semaphore, #tpu.memory_space<semaphore_mem>>)
    %c7_i32 = arith.constant 7 : i32
    %85 = arith.addi %0, %c7_i32 : i32
    %c127_i32_47 = arith.constant 127 : i32
    %86 = arith.minsi %85, %c127_i32_47 : i32
    %87 = arith.index_cast %86 : i32 to index
    %88 = memref.load %arg1[%87] : memref<128xi32, #tpu.memory_space<smem>>
    %c0_i32_48 = arith.constant 0 : i32
    %c511_i32_49 = arith.constant 511 : i32
    %89 = arith.maxsi %c0_i32_48, %88 : i32
    %90 = arith.minsi %c511_i32_49, %89 : i32
    %c7_i32_50 = arith.constant 7 : i32
    %c7_i32_51 = arith.constant 7 : i32
    %c0_i32_52 = arith.constant 0 : i32
    %91 = tpu.memref_slice %arg2[%90, %c0_i32_52] : memref<512x128xf32, #tpu.memory_space<any>> -> memref<1x128xf32, #tpu.memory_space<any>>
    %92 = tpu.memref_squeeze %91 : memref<1x128xf32, #tpu.memory_space<any>> -> memref<128xf32, #tpu.memory_space<any>>
    %c0_i32_53 = arith.constant 0 : i32
    %93 = tpu.memref_slice %arg3[%c7_i32_50, %c0_i32_53] : memref<64x128xf32, #tpu.memory_space<vmem>> -> memref<1x128xf32, #tpu.memory_space<vmem>>
    %94 = tpu.memref_squeeze %93 : memref<1x128xf32, #tpu.memory_space<vmem>> -> memref<128xf32, #tpu.memory_space<vmem>>
    %95 = tpu.memref_slice %arg4[%c7_i32_51] : memref<32x!tpu.dma_semaphore, #tpu.memory_space<semaphore_mem>> -> memref<1x!tpu.dma_semaphore, #tpu.memory_space<semaphore_mem>>
    %96 = tpu.memref_squeeze %95 : memref<1x!tpu.dma_semaphore, #tpu.memory_space<semaphore_mem>> -> memref<!tpu.dma_semaphore, #tpu.memory_space<semaphore_mem>>
    tpu.enqueue_dma source(%92 : memref<128xf32, #tpu.memory_space<any>>) target(%94 : memref<128xf32, #tpu.memory_space<vmem>>) target_semaphore(%96 : memref<!tpu.dma_semaphore, #tpu.memory_space<semaphore_mem>>)
    %c8_i32 = arith.constant 8 : i32
    %97 = arith.addi %0, %c8_i32 : i32
    %c127_i32_54 = arith.constant 127 : i32
    %98 = arith.minsi %97, %c127_i32_54 : i32
    %99 = arith.index_cast %98 : i32 to index
    %100 = memref.load %arg1[%99] : memref<128xi32, #tpu.memory_space<smem>>
    %c0_i32_55 = arith.constant 0 : i32
    %c511_i32_56 = arith.constant 511 : i32
    %101 = arith.maxsi %c0_i32_55, %100 : i32
    %102 = arith.minsi %c511_i32_56, %101 : i32
    %c8_i32_57 = arith.constant 8 : i32
    %c8_i32_58 = arith.constant 8 : i32
    %c0_i32_59 = arith.constant 0 : i32
    %103 = tpu.memref_slice %arg2[%102, %c0_i32_59] : memref<512x128xf32, #tpu.memory_space<any>> -> memref<1x128xf32, #tpu.memory_space<any>>
    %104 = tpu.memref_squeeze %103 : memref<1x128xf32, #tpu.memory_space<any>> -> memref<128xf32, #tpu.memory_space<any>>
    %c0_i32_60 = arith.constant 0 : i32
    %105 = tpu.memref_slice %arg3[%c8_i32_57, %c0_i32_60] : memref<64x128xf32, #tpu.memory_space<vmem>> -> memref<1x128xf32, #tpu.memory_space<vmem>>
    %106 = tpu.memref_squeeze %105 : memref<1x128xf32, #tpu.memory_space<vmem>> -> memref<128xf32, #tpu.memory_space<vmem>>
    %107 = tpu.memref_slice %arg4[%c8_i32_58] : memref<32x!tpu.dma_semaphore, #tpu.memory_space<semaphore_mem>> -> memref<1x!tpu.dma_semaphore, #tpu.memory_space<semaphore_mem>>
    %108 = tpu.memref_squeeze %107 : memref<1x!tpu.dma_semaphore, #tpu.memory_space<semaphore_mem>> -> memref<!tpu.dma_semaphore, #tpu.memory_space<semaphore_mem>>
    tpu.enqueue_dma source(%104 : memref<128xf32, #tpu.memory_space<any>>) target(%106 : memref<128xf32, #tpu.memory_space<vmem>>) target_semaphore(%108 : memref<!tpu.dma_semaphore, #tpu.memory_space<semaphore_mem>>)
    %c9_i32 = arith.constant 9 : i32
    %109 = arith.addi %0, %c9_i32 : i32
    %c127_i32_61 = arith.constant 127 : i32
    %110 = arith.minsi %109, %c127_i32_61 : i32
    %111 = arith.index_cast %110 : i32 to index
    %112 = memref.load %arg1[%111] : memref<128xi32, #tpu.memory_space<smem>>
    %c0_i32_62 = arith.constant 0 : i32
    %c511_i32_63 = arith.constant 511 : i32
    %113 = arith.maxsi %c0_i32_62, %112 : i32
    %114 = arith.minsi %c511_i32_63, %113 : i32
    %c9_i32_64 = arith.constant 9 : i32
    %c9_i32_65 = arith.constant 9 : i32
    %c0_i32_66 = arith.constant 0 : i32
    %115 = tpu.memref_slice %arg2[%114, %c0_i32_66] : memref<512x128xf32, #tpu.memory_space<any>> -> memref<1x128xf32, #tpu.memory_space<any>>
    %116 = tpu.memref_squeeze %115 : memref<1x128xf32, #tpu.memory_space<any>> -> memref<128xf32, #tpu.memory_space<any>>
    %c0_i32_67 = arith.constant 0 : i32
    %117 = tpu.memref_slice %arg3[%c9_i32_64, %c0_i32_67] : memref<64x128xf32, #tpu.memory_space<vmem>> -> memref<1x128xf32, #tpu.memory_space<vmem>>
    %118 = tpu.memref_squeeze %117 : memref<1x128xf32, #tpu.memory_space<vmem>> -> memref<128xf32, #tpu.memory_space<vmem>>
    %119 = tpu.memref_slice %arg4[%c9_i32_65] : memref<32x!tpu.dma_semaphore, #tpu.memory_space<semaphore_mem>> -> memref<1x!tpu.dma_semaphore, #tpu.memory_space<semaphore_mem>>
    %120 = tpu.memref_squeeze %119 : memref<1x!tpu.dma_semaphore, #tpu.memory_space<semaphore_mem>> -> memref<!tpu.dma_semaphore, #tpu.memory_space<semaphore_mem>>
    tpu.enqueue_dma source(%116 : memref<128xf32, #tpu.memory_space<any>>) target(%118 : memref<128xf32, #tpu.memory_space<vmem>>) target_semaphore(%120 : memref<!tpu.dma_semaphore, #tpu.memory_space<semaphore_mem>>)
    %c10_i32 = arith.constant 10 : i32
    %121 = arith.addi %0, %c10_i32 : i32
    %c127_i32_68 = arith.constant 127 : i32
    %122 = arith.minsi %121, %c127_i32_68 : i32
    %123 = arith.index_cast %122 : i32 to index
    %124 = memref.load %arg1[%123] : memref<128xi32, #tpu.memory_space<smem>>
    %c0_i32_69 = arith.constant 0 : i32
    %c511_i32_70 = arith.constant 511 : i32
    %125 = arith.maxsi %c0_i32_69, %124 : i32
    %126 = arith.minsi %c511_i32_70, %125 : i32
    %c10_i32_71 = arith.constant 10 : i32
    %c10_i32_72 = arith.constant 10 : i32
    %c0_i32_73 = arith.constant 0 : i32
    %127 = tpu.memref_slice %arg2[%126, %c0_i32_73] : memref<512x128xf32, #tpu.memory_space<any>> -> memref<1x128xf32, #tpu.memory_space<any>>
    %128 = tpu.memref_squeeze %127 : memref<1x128xf32, #tpu.memory_space<any>> -> memref<128xf32, #tpu.memory_space<any>>
    %c0_i32_74 = arith.constant 0 : i32
    %129 = tpu.memref_slice %arg3[%c10_i32_71, %c0_i32_74] : memref<64x128xf32, #tpu.memory_space<vmem>> -> memref<1x128xf32, #tpu.memory_space<vmem>>
    %130 = tpu.memref_squeeze %129 : memref<1x128xf32, #tpu.memory_space<vmem>> -> memref<128xf32, #tpu.memory_space<vmem>>
    %131 = tpu.memref_slice %arg4[%c10_i32_72] : memref<32x!tpu.dma_semaphore, #tpu.memory_space<semaphore_mem>> -> memref<1x!tpu.dma_semaphore, #tpu.memory_space<semaphore_mem>>
    %132 = tpu.memref_squeeze %131 : memref<1x!tpu.dma_semaphore, #tpu.memory_space<semaphore_mem>> -> memref<!tpu.dma_semaphore, #tpu.memory_space<semaphore_mem>>
    tpu.enqueue_dma source(%128 : memref<128xf32, #tpu.memory_space<any>>) target(%130 : memref<128xf32, #tpu.memory_space<vmem>>) target_semaphore(%132 : memref<!tpu.dma_semaphore, #tpu.memory_space<semaphore_mem>>)
    %c11_i32 = arith.constant 11 : i32
    %133 = arith.addi %0, %c11_i32 : i32
    %c127_i32_75 = arith.constant 127 : i32
    %134 = arith.minsi %133, %c127_i32_75 : i32
    %135 = arith.index_cast %134 : i32 to index
    %136 = memref.load %arg1[%135] : memref<128xi32, #tpu.memory_space<smem>>
    %c0_i32_76 = arith.constant 0 : i32
    %c511_i32_77 = arith.constant 511 : i32
    %137 = arith.maxsi %c0_i32_76, %136 : i32
    %138 = arith.minsi %c511_i32_77, %137 : i32
    %c11_i32_78 = arith.constant 11 : i32
    %c11_i32_79 = arith.constant 11 : i32
    %c0_i32_80 = arith.constant 0 : i32
    %139 = tpu.memref_slice %arg2[%138, %c0_i32_80] : memref<512x128xf32, #tpu.memory_space<any>> -> memref<1x128xf32, #tpu.memory_space<any>>
    %140 = tpu.memref_squeeze %139 : memref<1x128xf32, #tpu.memory_space<any>> -> memref<128xf32, #tpu.memory_space<any>>
    %c0_i32_81 = arith.constant 0 : i32
    %141 = tpu.memref_slice %arg3[%c11_i32_78, %c0_i32_81] : memref<64x128xf32, #tpu.memory_space<vmem>> -> memref<1x128xf32, #tpu.memory_space<vmem>>
    %142 = tpu.memref_squeeze %141 : memref<1x128xf32, #tpu.memory_space<vmem>> -> memref<128xf32, #tpu.memory_space<vmem>>
    %143 = tpu.memref_slice %arg4[%c11_i32_79] : memref<32x!tpu.dma_semaphore, #tpu.memory_space<semaphore_mem>> -> memref<1x!tpu.dma_semaphore, #tpu.memory_space<semaphore_mem>>
    %144 = tpu.memref_squeeze %143 : memref<1x!tpu.dma_semaphore, #tpu.memory_space<semaphore_mem>> -> memref<!tpu.dma_semaphore, #tpu.memory_space<semaphore_mem>>
    tpu.enqueue_dma source(%140 : memref<128xf32, #tpu.memory_space<any>>) target(%142 : memref<128xf32, #tpu.memory_space<vmem>>) target_semaphore(%144 : memref<!tpu.dma_semaphore, #tpu.memory_space<semaphore_mem>>)
    %c12_i32 = arith.constant 12 : i32
    %145 = arith.addi %0, %c12_i32 : i32
    %c127_i32_82 = arith.constant 127 : i32
    %146 = arith.minsi %145, %c127_i32_82 : i32
    %147 = arith.index_cast %146 : i32 to index
    %148 = memref.load %arg1[%147] : memref<128xi32, #tpu.memory_space<smem>>
    %c0_i32_83 = arith.constant 0 : i32
    %c511_i32_84 = arith.constant 511 : i32
    %149 = arith.maxsi %c0_i32_83, %148 : i32
    %150 = arith.minsi %c511_i32_84, %149 : i32
    %c12_i32_85 = arith.constant 12 : i32
    %c12_i32_86 = arith.constant 12 : i32
    %c0_i32_87 = arith.constant 0 : i32
    %151 = tpu.memref_slice %arg2[%150, %c0_i32_87] : memref<512x128xf32, #tpu.memory_space<any>> -> memref<1x128xf32, #tpu.memory_space<any>>
    %152 = tpu.memref_squeeze %151 : memref<1x128xf32, #tpu.memory_space<any>> -> memref<128xf32, #tpu.memory_space<any>>
    %c0_i32_88 = arith.constant 0 : i32
    %153 = tpu.memref_slice %arg3[%c12_i32_85, %c0_i32_88] : memref<64x128xf32, #tpu.memory_space<vmem>> -> memref<1x128xf32, #tpu.memory_space<vmem>>
    %154 = tpu.memref_squeeze %153 : memref<1x128xf32, #tpu.memory_space<vmem>> -> memref<128xf32, #tpu.memory_space<vmem>>
    %155 = tpu.memref_slice %arg4[%c12_i32_86] : memref<32x!tpu.dma_semaphore, #tpu.memory_space<semaphore_mem>> -> memref<1x!tpu.dma_semaphore, #tpu.memory_space<semaphore_mem>>
    %156 = tpu.memref_squeeze %155 : memref<1x!tpu.dma_semaphore, #tpu.memory_space<semaphore_mem>> -> memref<!tpu.dma_semaphore, #tpu.memory_space<semaphore_mem>>
    tpu.enqueue_dma source(%152 : memref<128xf32, #tpu.memory_space<any>>) target(%154 : memref<128xf32, #tpu.memory_space<vmem>>) target_semaphore(%156 : memref<!tpu.dma_semaphore, #tpu.memory_space<semaphore_mem>>)
    %c13_i32 = arith.constant 13 : i32
    %157 = arith.addi %0, %c13_i32 : i32
    %c127_i32_89 = arith.constant 127 : i32
    %158 = arith.minsi %157, %c127_i32_89 : i32
    %159 = arith.index_cast %158 : i32 to index
    %160 = memref.load %arg1[%159] : memref<128xi32, #tpu.memory_space<smem>>
    %c0_i32_90 = arith.constant 0 : i32
    %c511_i32_91 = arith.constant 511 : i32
    %161 = arith.maxsi %c0_i32_90, %160 : i32
    %162 = arith.minsi %c511_i32_91, %161 : i32
    %c13_i32_92 = arith.constant 13 : i32
    %c13_i32_93 = arith.constant 13 : i32
    %c0_i32_94 = arith.constant 0 : i32
    %163 = tpu.memref_slice %arg2[%162, %c0_i32_94] : memref<512x128xf32, #tpu.memory_space<any>> -> memref<1x128xf32, #tpu.memory_space<any>>
    %164 = tpu.memref_squeeze %163 : memref<1x128xf32, #tpu.memory_space<any>> -> memref<128xf32, #tpu.memory_space<any>>
    %c0_i32_95 = arith.constant 0 : i32
    %165 = tpu.memref_slice %arg3[%c13_i32_92, %c0_i32_95] : memref<64x128xf32, #tpu.memory_space<vmem>> -> memref<1x128xf32, #tpu.memory_space<vmem>>
    %166 = tpu.memref_squeeze %165 : memref<1x128xf32, #tpu.memory_space<vmem>> -> memref<128xf32, #tpu.memory_space<vmem>>
    %167 = tpu.memref_slice %arg4[%c13_i32_93] : memref<32x!tpu.dma_semaphore, #tpu.memory_space<semaphore_mem>> -> memref<1x!tpu.dma_semaphore, #tpu.memory_space<semaphore_mem>>
    %168 = tpu.memref_squeeze %167 : memref<1x!tpu.dma_semaphore, #tpu.memory_space<semaphore_mem>> -> memref<!tpu.dma_semaphore, #tpu.memory_space<semaphore_mem>>
    tpu.enqueue_dma source(%164 : memref<128xf32, #tpu.memory_space<any>>) target(%166 : memref<128xf32, #tpu.memory_space<vmem>>) target_semaphore(%168 : memref<!tpu.dma_semaphore, #tpu.memory_space<semaphore_mem>>)
    %c14_i32 = arith.constant 14 : i32
    %169 = arith.addi %0, %c14_i32 : i32
    %c127_i32_96 = arith.constant 127 : i32
    %170 = arith.minsi %169, %c127_i32_96 : i32
    %171 = arith.index_cast %170 : i32 to index
    %172 = memref.load %arg1[%171] : memref<128xi32, #tpu.memory_space<smem>>
    %c0_i32_97 = arith.constant 0 : i32
    %c511_i32_98 = arith.constant 511 : i32
    %173 = arith.maxsi %c0_i32_97, %172 : i32
    %174 = arith.minsi %c511_i32_98, %173 : i32
    %c14_i32_99 = arith.constant 14 : i32
    %c14_i32_100 = arith.constant 14 : i32
    %c0_i32_101 = arith.constant 0 : i32
    %175 = tpu.memref_slice %arg2[%174, %c0_i32_101] : memref<512x128xf32, #tpu.memory_space<any>> -> memref<1x128xf32, #tpu.memory_space<any>>
    %176 = tpu.memref_squeeze %175 : memref<1x128xf32, #tpu.memory_space<any>> -> memref<128xf32, #tpu.memory_space<any>>
    %c0_i32_102 = arith.constant 0 : i32
    %177 = tpu.memref_slice %arg3[%c14_i32_99, %c0_i32_102] : memref<64x128xf32, #tpu.memory_space<vmem>> -> memref<1x128xf32, #tpu.memory_space<vmem>>
    %178 = tpu.memref_squeeze %177 : memref<1x128xf32, #tpu.memory_space<vmem>> -> memref<128xf32, #tpu.memory_space<vmem>>
    %179 = tpu.memref_slice %arg4[%c14_i32_100] : memref<32x!tpu.dma_semaphore, #tpu.memory_space<semaphore_mem>> -> memref<1x!tpu.dma_semaphore, #tpu.memory_space<semaphore_mem>>
    %180 = tpu.memref_squeeze %179 : memref<1x!tpu.dma_semaphore, #tpu.memory_space<semaphore_mem>> -> memref<!tpu.dma_semaphore, #tpu.memory_space<semaphore_mem>>
    tpu.enqueue_dma source(%176 : memref<128xf32, #tpu.memory_space<any>>) target(%178 : memref<128xf32, #tpu.memory_space<vmem>>) target_semaphore(%180 : memref<!tpu.dma_semaphore, #tpu.memory_space<semaphore_mem>>)
    %c15_i32 = arith.constant 15 : i32
    %181 = arith.addi %0, %c15_i32 : i32
    %c127_i32_103 = arith.constant 127 : i32
    %182 = arith.minsi %181, %c127_i32_103 : i32
    %183 = arith.index_cast %182 : i32 to index
    %184 = memref.load %arg1[%183] : memref<128xi32, #tpu.memory_space<smem>>
    %c0_i32_104 = arith.constant 0 : i32
    %c511_i32_105 = arith.constant 511 : i32
    %185 = arith.maxsi %c0_i32_104, %184 : i32
    %186 = arith.minsi %c511_i32_105, %185 : i32
    %c15_i32_106 = arith.constant 15 : i32
    %c15_i32_107 = arith.constant 15 : i32
    %c0_i32_108 = arith.constant 0 : i32
    %187 = tpu.memref_slice %arg2[%186, %c0_i32_108] : memref<512x128xf32, #tpu.memory_space<any>> -> memref<1x128xf32, #tpu.memory_space<any>>
    %188 = tpu.memref_squeeze %187 : memref<1x128xf32, #tpu.memory_space<any>> -> memref<128xf32, #tpu.memory_space<any>>
    %c0_i32_109 = arith.constant 0 : i32
    %189 = tpu.memref_slice %arg3[%c15_i32_106, %c0_i32_109] : memref<64x128xf32, #tpu.memory_space<vmem>> -> memref<1x128xf32, #tpu.memory_space<vmem>>
    %190 = tpu.memref_squeeze %189 : memref<1x128xf32, #tpu.memory_space<vmem>> -> memref<128xf32, #tpu.memory_space<vmem>>
    %191 = tpu.memref_slice %arg4[%c15_i32_107] : memref<32x!tpu.dma_semaphore, #tpu.memory_space<semaphore_mem>> -> memref<1x!tpu.dma_semaphore, #tpu.memory_space<semaphore_mem>>
    %192 = tpu.memref_squeeze %191 : memref<1x!tpu.dma_semaphore, #tpu.memory_space<semaphore_mem>> -> memref<!tpu.dma_semaphore, #tpu.memory_space<semaphore_mem>>
    tpu.enqueue_dma source(%188 : memref<128xf32, #tpu.memory_space<any>>) target(%190 : memref<128xf32, #tpu.memory_space<vmem>>) target_semaphore(%192 : memref<!tpu.dma_semaphore, #tpu.memory_space<semaphore_mem>>)
    %c16_i32 = arith.constant 16 : i32
    %193 = arith.addi %0, %c16_i32 : i32
    %c127_i32_110 = arith.constant 127 : i32
    %194 = arith.minsi %193, %c127_i32_110 : i32
    %195 = arith.index_cast %194 : i32 to index
    %196 = memref.load %arg1[%195] : memref<128xi32, #tpu.memory_space<smem>>
    %c0_i32_111 = arith.constant 0 : i32
    %c511_i32_112 = arith.constant 511 : i32
    %197 = arith.maxsi %c0_i32_111, %196 : i32
    %198 = arith.minsi %c511_i32_112, %197 : i32
    %c16_i32_113 = arith.constant 16 : i32
    %c16_i32_114 = arith.constant 16 : i32
    %c0_i32_115 = arith.constant 0 : i32
    %199 = tpu.memref_slice %arg2[%198, %c0_i32_115] : memref<512x128xf32, #tpu.memory_space<any>> -> memref<1x128xf32, #tpu.memory_space<any>>
    %200 = tpu.memref_squeeze %199 : memref<1x128xf32, #tpu.memory_space<any>> -> memref<128xf32, #tpu.memory_space<any>>
    %c0_i32_116 = arith.constant 0 : i32
    %201 = tpu.memref_slice %arg3[%c16_i32_113, %c0_i32_116] : memref<64x128xf32, #tpu.memory_space<vmem>> -> memref<1x128xf32, #tpu.memory_space<vmem>>
    %202 = tpu.memref_squeeze %201 : memref<1x128xf32, #tpu.memory_space<vmem>> -> memref<128xf32, #tpu.memory_space<vmem>>
    %203 = tpu.memref_slice %arg4[%c16_i32_114] : memref<32x!tpu.dma_semaphore, #tpu.memory_space<semaphore_mem>> -> memref<1x!tpu.dma_semaphore, #tpu.memory_space<semaphore_mem>>
    %204 = tpu.memref_squeeze %203 : memref<1x!tpu.dma_semaphore, #tpu.memory_space<semaphore_mem>> -> memref<!tpu.dma_semaphore, #tpu.memory_space<semaphore_mem>>
    tpu.enqueue_dma source(%200 : memref<128xf32, #tpu.memory_space<any>>) target(%202 : memref<128xf32, #tpu.memory_space<vmem>>) target_semaphore(%204 : memref<!tpu.dma_semaphore, #tpu.memory_space<semaphore_mem>>)
    %c17_i32 = arith.constant 17 : i32
    %205 = arith.addi %0, %c17_i32 : i32
    %c127_i32_117 = arith.constant 127 : i32
    %206 = arith.minsi %205, %c127_i32_117 : i32
    %207 = arith.index_cast %206 : i32 to index
    %208 = memref.load %arg1[%207] : memref<128xi32, #tpu.memory_space<smem>>
    %c0_i32_118 = arith.constant 0 : i32
    %c511_i32_119 = arith.constant 511 : i32
    %209 = arith.maxsi %c0_i32_118, %208 : i32
    %210 = arith.minsi %c511_i32_119, %209 : i32
    %c17_i32_120 = arith.constant 17 : i32
    %c17_i32_121 = arith.constant 17 : i32
    %c0_i32_122 = arith.constant 0 : i32
    %211 = tpu.memref_slice %arg2[%210, %c0_i32_122] : memref<512x128xf32, #tpu.memory_space<any>> -> memref<1x128xf32, #tpu.memory_space<any>>
    %212 = tpu.memref_squeeze %211 : memref<1x128xf32, #tpu.memory_space<any>> -> memref<128xf32, #tpu.memory_space<any>>
    %c0_i32_123 = arith.constant 0 : i32
    %213 = tpu.memref_slice %arg3[%c17_i32_120, %c0_i32_123] : memref<64x128xf32, #tpu.memory_space<vmem>> -> memref<1x128xf32, #tpu.memory_space<vmem>>
    %214 = tpu.memref_squeeze %213 : memref<1x128xf32, #tpu.memory_space<vmem>> -> memref<128xf32, #tpu.memory_space<vmem>>
    %215 = tpu.memref_slice %arg4[%c17_i32_121] : memref<32x!tpu.dma_semaphore, #tpu.memory_space<semaphore_mem>> -> memref<1x!tpu.dma_semaphore, #tpu.memory_space<semaphore_mem>>
    %216 = tpu.memref_squeeze %215 : memref<1x!tpu.dma_semaphore, #tpu.memory_space<semaphore_mem>> -> memref<!tpu.dma_semaphore, #tpu.memory_space<semaphore_mem>>
    tpu.enqueue_dma source(%212 : memref<128xf32, #tpu.memory_space<any>>) target(%214 : memref<128xf32, #tpu.memory_space<vmem>>) target_semaphore(%216 : memref<!tpu.dma_semaphore, #tpu.memory_space<semaphore_mem>>)
    %c18_i32 = arith.constant 18 : i32
    %217 = arith.addi %0, %c18_i32 : i32
    %c127_i32_124 = arith.constant 127 : i32
    %218 = arith.minsi %217, %c127_i32_124 : i32
    %219 = arith.index_cast %218 : i32 to index
    %220 = memref.load %arg1[%219] : memref<128xi32, #tpu.memory_space<smem>>
    %c0_i32_125 = arith.constant 0 : i32
    %c511_i32_126 = arith.constant 511 : i32
    %221 = arith.maxsi %c0_i32_125, %220 : i32
    %222 = arith.minsi %c511_i32_126, %221 : i32
    %c18_i32_127 = arith.constant 18 : i32
    %c18_i32_128 = arith.constant 18 : i32
    %c0_i32_129 = arith.constant 0 : i32
    %223 = tpu.memref_slice %arg2[%222, %c0_i32_129] : memref<512x128xf32, #tpu.memory_space<any>> -> memref<1x128xf32, #tpu.memory_space<any>>
    %224 = tpu.memref_squeeze %223 : memref<1x128xf32, #tpu.memory_space<any>> -> memref<128xf32, #tpu.memory_space<any>>
    %c0_i32_130 = arith.constant 0 : i32
    %225 = tpu.memref_slice %arg3[%c18_i32_127, %c0_i32_130] : memref<64x128xf32, #tpu.memory_space<vmem>> -> memref<1x128xf32, #tpu.memory_space<vmem>>
    %226 = tpu.memref_squeeze %225 : memref<1x128xf32, #tpu.memory_space<vmem>> -> memref<128xf32, #tpu.memory_space<vmem>>
    %227 = tpu.memref_slice %arg4[%c18_i32_128] : memref<32x!tpu.dma_semaphore, #tpu.memory_space<semaphore_mem>> -> memref<1x!tpu.dma_semaphore, #tpu.memory_space<semaphore_mem>>
    %228 = tpu.memref_squeeze %227 : memref<1x!tpu.dma_semaphore, #tpu.memory_space<semaphore_mem>> -> memref<!tpu.dma_semaphore, #tpu.memory_space<semaphore_mem>>
    tpu.enqueue_dma source(%224 : memref<128xf32, #tpu.memory_space<any>>) target(%226 : memref<128xf32, #tpu.memory_space<vmem>>) target_semaphore(%228 : memref<!tpu.dma_semaphore, #tpu.memory_space<semaphore_mem>>)
    %c19_i32 = arith.constant 19 : i32
    %229 = arith.addi %0, %c19_i32 : i32
    %c127_i32_131 = arith.constant 127 : i32
    %230 = arith.minsi %229, %c127_i32_131 : i32
    %231 = arith.index_cast %230 : i32 to index
    %232 = memref.load %arg1[%231] : memref<128xi32, #tpu.memory_space<smem>>
    %c0_i32_132 = arith.constant 0 : i32
    %c511_i32_133 = arith.constant 511 : i32
    %233 = arith.maxsi %c0_i32_132, %232 : i32
    %234 = arith.minsi %c511_i32_133, %233 : i32
    %c19_i32_134 = arith.constant 19 : i32
    %c19_i32_135 = arith.constant 19 : i32
    %c0_i32_136 = arith.constant 0 : i32
    %235 = tpu.memref_slice %arg2[%234, %c0_i32_136] : memref<512x128xf32, #tpu.memory_space<any>> -> memref<1x128xf32, #tpu.memory_space<any>>
    %236 = tpu.memref_squeeze %235 : memref<1x128xf32, #tpu.memory_space<any>> -> memref<128xf32, #tpu.memory_space<any>>
    %c0_i32_137 = arith.constant 0 : i32
    %237 = tpu.memref_slice %arg3[%c19_i32_134, %c0_i32_137] : memref<64x128xf32, #tpu.memory_space<vmem>> -> memref<1x128xf32, #tpu.memory_space<vmem>>
    %238 = tpu.memref_squeeze %237 : memref<1x128xf32, #tpu.memory_space<vmem>> -> memref<128xf32, #tpu.memory_space<vmem>>
    %239 = tpu.memref_slice %arg4[%c19_i32_135] : memref<32x!tpu.dma_semaphore, #tpu.memory_space<semaphore_mem>> -> memref<1x!tpu.dma_semaphore, #tpu.memory_space<semaphore_mem>>
    %240 = tpu.memref_squeeze %239 : memref<1x!tpu.dma_semaphore, #tpu.memory_space<semaphore_mem>> -> memref<!tpu.dma_semaphore, #tpu.memory_space<semaphore_mem>>
    tpu.enqueue_dma source(%236 : memref<128xf32, #tpu.memory_space<any>>) target(%238 : memref<128xf32, #tpu.memory_space<vmem>>) target_semaphore(%240 : memref<!tpu.dma_semaphore, #tpu.memory_space<semaphore_mem>>)
    %c20_i32 = arith.constant 20 : i32
    %241 = arith.addi %0, %c20_i32 : i32
    %c127_i32_138 = arith.constant 127 : i32
    %242 = arith.minsi %241, %c127_i32_138 : i32
    %243 = arith.index_cast %242 : i32 to index
    %244 = memref.load %arg1[%243] : memref<128xi32, #tpu.memory_space<smem>>
    %c0_i32_139 = arith.constant 0 : i32
    %c511_i32_140 = arith.constant 511 : i32
    %245 = arith.maxsi %c0_i32_139, %244 : i32
    %246 = arith.minsi %c511_i32_140, %245 : i32
    %c20_i32_141 = arith.constant 20 : i32
    %c20_i32_142 = arith.constant 20 : i32
    %c0_i32_143 = arith.constant 0 : i32
    %247 = tpu.memref_slice %arg2[%246, %c0_i32_143] : memref<512x128xf32, #tpu.memory_space<any>> -> memref<1x128xf32, #tpu.memory_space<any>>
    %248 = tpu.memref_squeeze %247 : memref<1x128xf32, #tpu.memory_space<any>> -> memref<128xf32, #tpu.memory_space<any>>
    %c0_i32_144 = arith.constant 0 : i32
    %249 = tpu.memref_slice %arg3[%c20_i32_141, %c0_i32_144] : memref<64x128xf32, #tpu.memory_space<vmem>> -> memref<1x128xf32, #tpu.memory_space<vmem>>
    %250 = tpu.memref_squeeze %249 : memref<1x128xf32, #tpu.memory_space<vmem>> -> memref<128xf32, #tpu.memory_space<vmem>>
    %251 = tpu.memref_slice %arg4[%c20_i32_142] : memref<32x!tpu.dma_semaphore, #tpu.memory_space<semaphore_mem>> -> memref<1x!tpu.dma_semaphore, #tpu.memory_space<semaphore_mem>>
    %252 = tpu.memref_squeeze %251 : memref<1x!tpu.dma_semaphore, #tpu.memory_space<semaphore_mem>> -> memref<!tpu.dma_semaphore, #tpu.memory_space<semaphore_mem>>
    tpu.enqueue_dma source(%248 : memref<128xf32, #tpu.memory_space<any>>) target(%250 : memref<128xf32, #tpu.memory_space<vmem>>) target_semaphore(%252 : memref<!tpu.dma_semaphore, #tpu.memory_space<semaphore_mem>>)
    %c21_i32 = arith.constant 21 : i32
    %253 = arith.addi %0, %c21_i32 : i32
    %c127_i32_145 = arith.constant 127 : i32
    %254 = arith.minsi %253, %c127_i32_145 : i32
    %255 = arith.index_cast %254 : i32 to index
    %256 = memref.load %arg1[%255] : memref<128xi32, #tpu.memory_space<smem>>
    %c0_i32_146 = arith.constant 0 : i32
    %c511_i32_147 = arith.constant 511 : i32
    %257 = arith.maxsi %c0_i32_146, %256 : i32
    %258 = arith.minsi %c511_i32_147, %257 : i32
    %c21_i32_148 = arith.constant 21 : i32
    %c21_i32_149 = arith.constant 21 : i32
    %c0_i32_150 = arith.constant 0 : i32
    %259 = tpu.memref_slice %arg2[%258, %c0_i32_150] : memref<512x128xf32, #tpu.memory_space<any>> -> memref<1x128xf32, #tpu.memory_space<any>>
    %260 = tpu.memref_squeeze %259 : memref<1x128xf32, #tpu.memory_space<any>> -> memref<128xf32, #tpu.memory_space<any>>
    %c0_i32_151 = arith.constant 0 : i32
    %261 = tpu.memref_slice %arg3[%c21_i32_148, %c0_i32_151] : memref<64x128xf32, #tpu.memory_space<vmem>> -> memref<1x128xf32, #tpu.memory_space<vmem>>
    %262 = tpu.memref_squeeze %261 : memref<1x128xf32, #tpu.memory_space<vmem>> -> memref<128xf32, #tpu.memory_space<vmem>>
    %263 = tpu.memref_slice %arg4[%c21_i32_149] : memref<32x!tpu.dma_semaphore, #tpu.memory_space<semaphore_mem>> -> memref<1x!tpu.dma_semaphore, #tpu.memory_space<semaphore_mem>>
    %264 = tpu.memref_squeeze %263 : memref<1x!tpu.dma_semaphore, #tpu.memory_space<semaphore_mem>> -> memref<!tpu.dma_semaphore, #tpu.memory_space<semaphore_mem>>
    tpu.enqueue_dma source(%260 : memref<128xf32, #tpu.memory_space<any>>) target(%262 : memref<128xf32, #tpu.memory_space<vmem>>) target_semaphore(%264 : memref<!tpu.dma_semaphore, #tpu.memory_space<semaphore_mem>>)
    %c22_i32 = arith.constant 22 : i32
    %265 = arith.addi %0, %c22_i32 : i32
    %c127_i32_152 = arith.constant 127 : i32
    %266 = arith.minsi %265, %c127_i32_152 : i32
    %267 = arith.index_cast %266 : i32 to index
    %268 = memref.load %arg1[%267] : memref<128xi32, #tpu.memory_space<smem>>
    %c0_i32_153 = arith.constant 0 : i32
    %c511_i32_154 = arith.constant 511 : i32
    %269 = arith.maxsi %c0_i32_153, %268 : i32
    %270 = arith.minsi %c511_i32_154, %269 : i32
    %c22_i32_155 = arith.constant 22 : i32
    %c22_i32_156 = arith.constant 22 : i32
    %c0_i32_157 = arith.constant 0 : i32
    %271 = tpu.memref_slice %arg2[%270, %c0_i32_157] : memref<512x128xf32, #tpu.memory_space<any>> -> memref<1x128xf32, #tpu.memory_space<any>>
    %272 = tpu.memref_squeeze %271 : memref<1x128xf32, #tpu.memory_space<any>> -> memref<128xf32, #tpu.memory_space<any>>
    %c0_i32_158 = arith.constant 0 : i32
    %273 = tpu.memref_slice %arg3[%c22_i32_155, %c0_i32_158] : memref<64x128xf32, #tpu.memory_space<vmem>> -> memref<1x128xf32, #tpu.memory_space<vmem>>
    %274 = tpu.memref_squeeze %273 : memref<1x128xf32, #tpu.memory_space<vmem>> -> memref<128xf32, #tpu.memory_space<vmem>>
    %275 = tpu.memref_slice %arg4[%c22_i32_156] : memref<32x!tpu.dma_semaphore, #tpu.memory_space<semaphore_mem>> -> memref<1x!tpu.dma_semaphore, #tpu.memory_space<semaphore_mem>>
    %276 = tpu.memref_squeeze %275 : memref<1x!tpu.dma_semaphore, #tpu.memory_space<semaphore_mem>> -> memref<!tpu.dma_semaphore, #tpu.memory_space<semaphore_mem>>
    tpu.enqueue_dma source(%272 : memref<128xf32, #tpu.memory_space<any>>) target(%274 : memref<128xf32, #tpu.memory_space<vmem>>) target_semaphore(%276 : memref<!tpu.dma_semaphore, #tpu.memory_space<semaphore_mem>>)
    %c23_i32 = arith.constant 23 : i32
    %277 = arith.addi %0, %c23_i32 : i32
    %c127_i32_159 = arith.constant 127 : i32
    %278 = arith.minsi %277, %c127_i32_159 : i32
    %279 = arith.index_cast %278 : i32 to index
    %280 = memref.load %arg1[%279] : memref<128xi32, #tpu.memory_space<smem>>
    %c0_i32_160 = arith.constant 0 : i32
    %c511_i32_161 = arith.constant 511 : i32
    %281 = arith.maxsi %c0_i32_160, %280 : i32
    %282 = arith.minsi %c511_i32_161, %281 : i32
    %c23_i32_162 = arith.constant 23 : i32
    %c23_i32_163 = arith.constant 23 : i32
    %c0_i32_164 = arith.constant 0 : i32
    %283 = tpu.memref_slice %arg2[%282, %c0_i32_164] : memref<512x128xf32, #tpu.memory_space<any>> -> memref<1x128xf32, #tpu.memory_space<any>>
    %284 = tpu.memref_squeeze %283 : memref<1x128xf32, #tpu.memory_space<any>> -> memref<128xf32, #tpu.memory_space<any>>
    %c0_i32_165 = arith.constant 0 : i32
    %285 = tpu.memref_slice %arg3[%c23_i32_162, %c0_i32_165] : memref<64x128xf32, #tpu.memory_space<vmem>> -> memref<1x128xf32, #tpu.memory_space<vmem>>
    %286 = tpu.memref_squeeze %285 : memref<1x128xf32, #tpu.memory_space<vmem>> -> memref<128xf32, #tpu.memory_space<vmem>>
    %287 = tpu.memref_slice %arg4[%c23_i32_163] : memref<32x!tpu.dma_semaphore, #tpu.memory_space<semaphore_mem>> -> memref<1x!tpu.dma_semaphore, #tpu.memory_space<semaphore_mem>>
    %288 = tpu.memref_squeeze %287 : memref<1x!tpu.dma_semaphore, #tpu.memory_space<semaphore_mem>> -> memref<!tpu.dma_semaphore, #tpu.memory_space<semaphore_mem>>
    tpu.enqueue_dma source(%284 : memref<128xf32, #tpu.memory_space<any>>) target(%286 : memref<128xf32, #tpu.memory_space<vmem>>) target_semaphore(%288 : memref<!tpu.dma_semaphore, #tpu.memory_space<semaphore_mem>>)
    %c24_i32 = arith.constant 24 : i32
    %289 = arith.addi %0, %c24_i32 : i32
    %c127_i32_166 = arith.constant 127 : i32
    %290 = arith.minsi %289, %c127_i32_166 : i32
    %291 = arith.index_cast %290 : i32 to index
    %292 = memref.load %arg1[%291] : memref<128xi32, #tpu.memory_space<smem>>
    %c0_i32_167 = arith.constant 0 : i32
    %c511_i32_168 = arith.constant 511 : i32
    %293 = arith.maxsi %c0_i32_167, %292 : i32
    %294 = arith.minsi %c511_i32_168, %293 : i32
    %c24_i32_169 = arith.constant 24 : i32
    %c24_i32_170 = arith.constant 24 : i32
    %c0_i32_171 = arith.constant 0 : i32
    %295 = tpu.memref_slice %arg2[%294, %c0_i32_171] : memref<512x128xf32, #tpu.memory_space<any>> -> memref<1x128xf32, #tpu.memory_space<any>>
    %296 = tpu.memref_squeeze %295 : memref<1x128xf32, #tpu.memory_space<any>> -> memref<128xf32, #tpu.memory_space<any>>
    %c0_i32_172 = arith.constant 0 : i32
    %297 = tpu.memref_slice %arg3[%c24_i32_169, %c0_i32_172] : memref<64x128xf32, #tpu.memory_space<vmem>> -> memref<1x128xf32, #tpu.memory_space<vmem>>
    %298 = tpu.memref_squeeze %297 : memref<1x128xf32, #tpu.memory_space<vmem>> -> memref<128xf32, #tpu.memory_space<vmem>>
    %299 = tpu.memref_slice %arg4[%c24_i32_170] : memref<32x!tpu.dma_semaphore, #tpu.memory_space<semaphore_mem>> -> memref<1x!tpu.dma_semaphore, #tpu.memory_space<semaphore_mem>>
    %300 = tpu.memref_squeeze %299 : memref<1x!tpu.dma_semaphore, #tpu.memory_space<semaphore_mem>> -> memref<!tpu.dma_semaphore, #tpu.memory_space<semaphore_mem>>
    tpu.enqueue_dma source(%296 : memref<128xf32, #tpu.memory_space<any>>) target(%298 : memref<128xf32, #tpu.memory_space<vmem>>) target_semaphore(%300 : memref<!tpu.dma_semaphore, #tpu.memory_space<semaphore_mem>>)
    %c25_i32 = arith.constant 25 : i32
    %301 = arith.addi %0, %c25_i32 : i32
    %c127_i32_173 = arith.constant 127 : i32
    %302 = arith.minsi %301, %c127_i32_173 : i32
    %303 = arith.index_cast %302 : i32 to index
    %304 = memref.load %arg1[%303] : memref<128xi32, #tpu.memory_space<smem>>
    %c0_i32_174 = arith.constant 0 : i32
    %c511_i32_175 = arith.constant 511 : i32
    %305 = arith.maxsi %c0_i32_174, %304 : i32
    %306 = arith.minsi %c511_i32_175, %305 : i32
    %c25_i32_176 = arith.constant 25 : i32
    %c25_i32_177 = arith.constant 25 : i32
    %c0_i32_178 = arith.constant 0 : i32
    %307 = tpu.memref_slice %arg2[%306, %c0_i32_178] : memref<512x128xf32, #tpu.memory_space<any>> -> memref<1x128xf32, #tpu.memory_space<any>>
    %308 = tpu.memref_squeeze %307 : memref<1x128xf32, #tpu.memory_space<any>> -> memref<128xf32, #tpu.memory_space<any>>
    %c0_i32_179 = arith.constant 0 : i32
    %309 = tpu.memref_slice %arg3[%c25_i32_176, %c0_i32_179] : memref<64x128xf32, #tpu.memory_space<vmem>> -> memref<1x128xf32, #tpu.memory_space<vmem>>
    %310 = tpu.memref_squeeze %309 : memref<1x128xf32, #tpu.memory_space<vmem>> -> memref<128xf32, #tpu.memory_space<vmem>>
    %311 = tpu.memref_slice %arg4[%c25_i32_177] : memref<32x!tpu.dma_semaphore, #tpu.memory_space<semaphore_mem>> -> memref<1x!tpu.dma_semaphore, #tpu.memory_space<semaphore_mem>>
    %312 = tpu.memref_squeeze %311 : memref<1x!tpu.dma_semaphore, #tpu.memory_space<semaphore_mem>> -> memref<!tpu.dma_semaphore, #tpu.memory_space<semaphore_mem>>
    tpu.enqueue_dma source(%308 : memref<128xf32, #tpu.memory_space<any>>) target(%310 : memref<128xf32, #tpu.memory_space<vmem>>) target_semaphore(%312 : memref<!tpu.dma_semaphore, #tpu.memory_space<semaphore_mem>>)
    %c26_i32 = arith.constant 26 : i32
    %313 = arith.addi %0, %c26_i32 : i32
    %c127_i32_180 = arith.constant 127 : i32
    %314 = arith.minsi %313, %c127_i32_180 : i32
    %315 = arith.index_cast %314 : i32 to index
    %316 = memref.load %arg1[%315] : memref<128xi32, #tpu.memory_space<smem>>
    %c0_i32_181 = arith.constant 0 : i32
    %c511_i32_182 = arith.constant 511 : i32
    %317 = arith.maxsi %c0_i32_181, %316 : i32
    %318 = arith.minsi %c511_i32_182, %317 : i32
    %c26_i32_183 = arith.constant 26 : i32
    %c26_i32_184 = arith.constant 26 : i32
    %c0_i32_185 = arith.constant 0 : i32
    %319 = tpu.memref_slice %arg2[%318, %c0_i32_185] : memref<512x128xf32, #tpu.memory_space<any>> -> memref<1x128xf32, #tpu.memory_space<any>>
    %320 = tpu.memref_squeeze %319 : memref<1x128xf32, #tpu.memory_space<any>> -> memref<128xf32, #tpu.memory_space<any>>
    %c0_i32_186 = arith.constant 0 : i32
    %321 = tpu.memref_slice %arg3[%c26_i32_183, %c0_i32_186] : memref<64x128xf32, #tpu.memory_space<vmem>> -> memref<1x128xf32, #tpu.memory_space<vmem>>
    %322 = tpu.memref_squeeze %321 : memref<1x128xf32, #tpu.memory_space<vmem>> -> memref<128xf32, #tpu.memory_space<vmem>>
    %323 = tpu.memref_slice %arg4[%c26_i32_184] : memref<32x!tpu.dma_semaphore, #tpu.memory_space<semaphore_mem>> -> memref<1x!tpu.dma_semaphore, #tpu.memory_space<semaphore_mem>>
    %324 = tpu.memref_squeeze %323 : memref<1x!tpu.dma_semaphore, #tpu.memory_space<semaphore_mem>> -> memref<!tpu.dma_semaphore, #tpu.memory_space<semaphore_mem>>
    tpu.enqueue_dma source(%320 : memref<128xf32, #tpu.memory_space<any>>) target(%322 : memref<128xf32, #tpu.memory_space<vmem>>) target_semaphore(%324 : memref<!tpu.dma_semaphore, #tpu.memory_space<semaphore_mem>>)
    %c27_i32 = arith.constant 27 : i32
    %325 = arith.addi %0, %c27_i32 : i32
    %c127_i32_187 = arith.constant 127 : i32
    %326 = arith.minsi %325, %c127_i32_187 : i32
    %327 = arith.index_cast %326 : i32 to index
    %328 = memref.load %arg1[%327] : memref<128xi32, #tpu.memory_space<smem>>
    %c0_i32_188 = arith.constant 0 : i32
    %c511_i32_189 = arith.constant 511 : i32
    %329 = arith.maxsi %c0_i32_188, %328 : i32
    %330 = arith.minsi %c511_i32_189, %329 : i32
    %c27_i32_190 = arith.constant 27 : i32
    %c27_i32_191 = arith.constant 27 : i32
    %c0_i32_192 = arith.constant 0 : i32
    %331 = tpu.memref_slice %arg2[%330, %c0_i32_192] : memref<512x128xf32, #tpu.memory_space<any>> -> memref<1x128xf32, #tpu.memory_space<any>>
    %332 = tpu.memref_squeeze %331 : memref<1x128xf32, #tpu.memory_space<any>> -> memref<128xf32, #tpu.memory_space<any>>
    %c0_i32_193 = arith.constant 0 : i32
    %333 = tpu.memref_slice %arg3[%c27_i32_190, %c0_i32_193] : memref<64x128xf32, #tpu.memory_space<vmem>> -> memref<1x128xf32, #tpu.memory_space<vmem>>
    %334 = tpu.memref_squeeze %333 : memref<1x128xf32, #tpu.memory_space<vmem>> -> memref<128xf32, #tpu.memory_space<vmem>>
    %335 = tpu.memref_slice %arg4[%c27_i32_191] : memref<32x!tpu.dma_semaphore, #tpu.memory_space<semaphore_mem>> -> memref<1x!tpu.dma_semaphore, #tpu.memory_space<semaphore_mem>>
    %336 = tpu.memref_squeeze %335 : memref<1x!tpu.dma_semaphore, #tpu.memory_space<semaphore_mem>> -> memref<!tpu.dma_semaphore, #tpu.memory_space<semaphore_mem>>
    tpu.enqueue_dma source(%332 : memref<128xf32, #tpu.memory_space<any>>) target(%334 : memref<128xf32, #tpu.memory_space<vmem>>) target_semaphore(%336 : memref<!tpu.dma_semaphore, #tpu.memory_space<semaphore_mem>>)
    %c28_i32 = arith.constant 28 : i32
    %337 = arith.addi %0, %c28_i32 : i32
    %c127_i32_194 = arith.constant 127 : i32
    %338 = arith.minsi %337, %c127_i32_194 : i32
    %339 = arith.index_cast %338 : i32 to index
    %340 = memref.load %arg1[%339] : memref<128xi32, #tpu.memory_space<smem>>
    %c0_i32_195 = arith.constant 0 : i32
    %c511_i32_196 = arith.constant 511 : i32
    %341 = arith.maxsi %c0_i32_195, %340 : i32
    %342 = arith.minsi %c511_i32_196, %341 : i32
    %c28_i32_197 = arith.constant 28 : i32
    %c28_i32_198 = arith.constant 28 : i32
    %c0_i32_199 = arith.constant 0 : i32
    %343 = tpu.memref_slice %arg2[%342, %c0_i32_199] : memref<512x128xf32, #tpu.memory_space<any>> -> memref<1x128xf32, #tpu.memory_space<any>>
    %344 = tpu.memref_squeeze %343 : memref<1x128xf32, #tpu.memory_space<any>> -> memref<128xf32, #tpu.memory_space<any>>
    %c0_i32_200 = arith.constant 0 : i32
    %345 = tpu.memref_slice %arg3[%c28_i32_197, %c0_i32_200] : memref<64x128xf32, #tpu.memory_space<vmem>> -> memref<1x128xf32, #tpu.memory_space<vmem>>
    %346 = tpu.memref_squeeze %345 : memref<1x128xf32, #tpu.memory_space<vmem>> -> memref<128xf32, #tpu.memory_space<vmem>>
    %347 = tpu.memref_slice %arg4[%c28_i32_198] : memref<32x!tpu.dma_semaphore, #tpu.memory_space<semaphore_mem>> -> memref<1x!tpu.dma_semaphore, #tpu.memory_space<semaphore_mem>>
    %348 = tpu.memref_squeeze %347 : memref<1x!tpu.dma_semaphore, #tpu.memory_space<semaphore_mem>> -> memref<!tpu.dma_semaphore, #tpu.memory_space<semaphore_mem>>
    tpu.enqueue_dma source(%344 : memref<128xf32, #tpu.memory_space<any>>) target(%346 : memref<128xf32, #tpu.memory_space<vmem>>) target_semaphore(%348 : memref<!tpu.dma_semaphore, #tpu.memory_space<semaphore_mem>>)
    %c29_i32 = arith.constant 29 : i32
    %349 = arith.addi %0, %c29_i32 : i32
    %c127_i32_201 = arith.constant 127 : i32
    %350 = arith.minsi %349, %c127_i32_201 : i32
    %351 = arith.index_cast %350 : i32 to index
    %352 = memref.load %arg1[%351] : memref<128xi32, #tpu.memory_space<smem>>
    %c0_i32_202 = arith.constant 0 : i32
    %c511_i32_203 = arith.constant 511 : i32
    %353 = arith.maxsi %c0_i32_202, %352 : i32
    %354 = arith.minsi %c511_i32_203, %353 : i32
    %c29_i32_204 = arith.constant 29 : i32
    %c29_i32_205 = arith.constant 29 : i32
    %c0_i32_206 = arith.constant 0 : i32
    %355 = tpu.memref_slice %arg2[%354, %c0_i32_206] : memref<512x128xf32, #tpu.memory_space<any>> -> memref<1x128xf32, #tpu.memory_space<any>>
    %356 = tpu.memref_squeeze %355 : memref<1x128xf32, #tpu.memory_space<any>> -> memref<128xf32, #tpu.memory_space<any>>
    %c0_i32_207 = arith.constant 0 : i32
    %357 = tpu.memref_slice %arg3[%c29_i32_204, %c0_i32_207] : memref<64x128xf32, #tpu.memory_space<vmem>> -> memref<1x128xf32, #tpu.memory_space<vmem>>
    %358 = tpu.memref_squeeze %357 : memref<1x128xf32, #tpu.memory_space<vmem>> -> memref<128xf32, #tpu.memory_space<vmem>>
    %359 = tpu.memref_slice %arg4[%c29_i32_205] : memref<32x!tpu.dma_semaphore, #tpu.memory_space<semaphore_mem>> -> memref<1x!tpu.dma_semaphore, #tpu.memory_space<semaphore_mem>>
    %360 = tpu.memref_squeeze %359 : memref<1x!tpu.dma_semaphore, #tpu.memory_space<semaphore_mem>> -> memref<!tpu.dma_semaphore, #tpu.memory_space<semaphore_mem>>
    tpu.enqueue_dma source(%356 : memref<128xf32, #tpu.memory_space<any>>) target(%358 : memref<128xf32, #tpu.memory_space<vmem>>) target_semaphore(%360 : memref<!tpu.dma_semaphore, #tpu.memory_space<semaphore_mem>>)
    %c30_i32 = arith.constant 30 : i32
    %361 = arith.addi %0, %c30_i32 : i32
    %c127_i32_208 = arith.constant 127 : i32
    %362 = arith.minsi %361, %c127_i32_208 : i32
    %363 = arith.index_cast %362 : i32 to index
    %364 = memref.load %arg1[%363] : memref<128xi32, #tpu.memory_space<smem>>
    %c0_i32_209 = arith.constant 0 : i32
    %c511_i32_210 = arith.constant 511 : i32
    %365 = arith.maxsi %c0_i32_209, %364 : i32
    %366 = arith.minsi %c511_i32_210, %365 : i32
    %c30_i32_211 = arith.constant 30 : i32
    %c30_i32_212 = arith.constant 30 : i32
    %c0_i32_213 = arith.constant 0 : i32
    %367 = tpu.memref_slice %arg2[%366, %c0_i32_213] : memref<512x128xf32, #tpu.memory_space<any>> -> memref<1x128xf32, #tpu.memory_space<any>>
    %368 = tpu.memref_squeeze %367 : memref<1x128xf32, #tpu.memory_space<any>> -> memref<128xf32, #tpu.memory_space<any>>
    %c0_i32_214 = arith.constant 0 : i32
    %369 = tpu.memref_slice %arg3[%c30_i32_211, %c0_i32_214] : memref<64x128xf32, #tpu.memory_space<vmem>> -> memref<1x128xf32, #tpu.memory_space<vmem>>
    %370 = tpu.memref_squeeze %369 : memref<1x128xf32, #tpu.memory_space<vmem>> -> memref<128xf32, #tpu.memory_space<vmem>>
    %371 = tpu.memref_slice %arg4[%c30_i32_212] : memref<32x!tpu.dma_semaphore, #tpu.memory_space<semaphore_mem>> -> memref<1x!tpu.dma_semaphore, #tpu.memory_space<semaphore_mem>>
    %372 = tpu.memref_squeeze %371 : memref<1x!tpu.dma_semaphore, #tpu.memory_space<semaphore_mem>> -> memref<!tpu.dma_semaphore, #tpu.memory_space<semaphore_mem>>
    tpu.enqueue_dma source(%368 : memref<128xf32, #tpu.memory_space<any>>) target(%370 : memref<128xf32, #tpu.memory_space<vmem>>) target_semaphore(%372 : memref<!tpu.dma_semaphore, #tpu.memory_space<semaphore_mem>>)
    %c31_i32 = arith.constant 31 : i32
    %373 = arith.addi %0, %c31_i32 : i32
    %c127_i32_215 = arith.constant 127 : i32
    %374 = arith.minsi %373, %c127_i32_215 : i32
    %375 = arith.index_cast %374 : i32 to index
    %376 = memref.load %arg1[%375] : memref<128xi32, #tpu.memory_space<smem>>
    %c0_i32_216 = arith.constant 0 : i32
    %c511_i32_217 = arith.constant 511 : i32
    %377 = arith.maxsi %c0_i32_216, %376 : i32
    %378 = arith.minsi %c511_i32_217, %377 : i32
    %c31_i32_218 = arith.constant 31 : i32
    %c31_i32_219 = arith.constant 31 : i32
    %c0_i32_220 = arith.constant 0 : i32
    %379 = tpu.memref_slice %arg2[%378, %c0_i32_220] : memref<512x128xf32, #tpu.memory_space<any>> -> memref<1x128xf32, #tpu.memory_space<any>>
    %380 = tpu.memref_squeeze %379 : memref<1x128xf32, #tpu.memory_space<any>> -> memref<128xf32, #tpu.memory_space<any>>
    %c0_i32_221 = arith.constant 0 : i32
    %381 = tpu.memref_slice %arg3[%c31_i32_218, %c0_i32_221] : memref<64x128xf32, #tpu.memory_space<vmem>> -> memref<1x128xf32, #tpu.memory_space<vmem>>
    %382 = tpu.memref_squeeze %381 : memref<1x128xf32, #tpu.memory_space<vmem>> -> memref<128xf32, #tpu.memory_space<vmem>>
    %383 = tpu.memref_slice %arg4[%c31_i32_219] : memref<32x!tpu.dma_semaphore, #tpu.memory_space<semaphore_mem>> -> memref<1x!tpu.dma_semaphore, #tpu.memory_space<semaphore_mem>>
    %384 = tpu.memref_squeeze %383 : memref<1x!tpu.dma_semaphore, #tpu.memory_space<semaphore_mem>> -> memref<!tpu.dma_semaphore, #tpu.memory_space<semaphore_mem>>
    tpu.enqueue_dma source(%380 : memref<128xf32, #tpu.memory_space<any>>) target(%382 : memref<128xf32, #tpu.memory_space<vmem>>) target_semaphore(%384 : memref<!tpu.dma_semaphore, #tpu.memory_space<semaphore_mem>>)
    %c0_i32_222 = arith.constant 0 : i32
    %c64_i32_223 = arith.constant 64 : i32
    %385 = arith.muli %c0_i32_222, %c64_i32_223 : i32
    %386 = tpu.assume_multiple %385, 64 : i32
    %c0_i32_224 = arith.constant 0 : i32
    %c64_i32_225 = arith.constant 64 : i32
    %387 = arith.addi %c0_i32_224, %c64_i32_225 : i32
    %c1_i32_226 = arith.constant 1 : i32
    scf.for %arg5 = %c0_i32_224 to %387 step %c1_i32_226  : i32 {
      %394 = arith.addi %386, %arg5 : i32
      %c32_i32 = arith.constant 32 : i32
      %395 = arith.addi %394, %c32_i32 : i32
      %396 = arith.addi %0, %395 : i32
      %c127_i32_230 = arith.constant 127 : i32
      %397 = arith.minsi %396, %c127_i32_230 : i32
      %398 = arith.index_cast %397 : i32 to index
      %399 = memref.load %arg1[%398] : memref<128xi32, #tpu.memory_space<smem>>
      %c0_i32_231 = arith.constant 0 : i32
      %c511_i32_232 = arith.constant 511 : i32
      %400 = arith.maxsi %c0_i32_231, %399 : i32
      %401 = arith.minsi %c511_i32_232, %400 : i32
      %c32_i32_233 = arith.constant 32 : i32
      %c0_i32_234 = arith.constant 0 : i32
      %402 = arith.cmpi eq, %c32_i32_233, %c0_i32_234 : i32
      %c1_i32_235 = arith.constant 1 : i32
      %403 = arith.select %402, %c1_i32_235, %c32_i32_233 : i32
      %404 = arith.remsi %394, %403 : i32
      %c0_i32_236 = arith.constant 0 : i32
      %405 = arith.cmpi ne, %404, %c0_i32_236 : i32
      %c0_i32_237 = arith.constant 0 : i32
      %406 = arith.cmpi slt, %404, %c0_i32_237 : i32
      %c0_i32_238 = arith.constant 0 : i32
      %407 = arith.cmpi slt, %403, %c0_i32_238 : i32
      %408 = arith.xori %406, %407 : i1
      %409 = arith.andi %408, %405 : i1
      %410 = arith.addi %404, %403 : i32
      %411 = arith.select %409, %410, %404 : i32
      %c0_i32_239 = arith.constant 0 : i32
      %c0_i32_240 = arith.constant 0 : i32
      %c0_i32_241 = arith.constant 0 : i32
      %412 = tpu.memref_slice %arg2[%c0_i32_239, %c0_i32_241] : memref<512x128xf32, #tpu.memory_space<any>> -> memref<1x128xf32, #tpu.memory_space<any>>
      %413 = tpu.memref_squeeze %412 : memref<1x128xf32, #tpu.memory_space<any>> -> memref<128xf32, #tpu.memory_space<any>>
      %c0_i32_242 = arith.constant 0 : i32
      %414 = tpu.memref_slice %arg3[%c0_i32_240, %c0_i32_242] : memref<64x128xf32, #tpu.memory_space<vmem>> -> memref<1x128xf32, #tpu.memory_space<vmem>>
      %415 = tpu.memref_squeeze %414 : memref<1x128xf32, #tpu.memory_space<vmem>> -> memref<128xf32, #tpu.memory_space<vmem>>
      %416 = tpu.memref_slice %arg4[%411] : memref<32x!tpu.dma_semaphore, #tpu.memory_space<semaphore_mem>> -> memref<1x!tpu.dma_semaphore, #tpu.memory_space<semaphore_mem>>
      %417 = tpu.memref_squeeze %416 : memref<1x!tpu.dma_semaphore, #tpu.memory_space<semaphore_mem>> -> memref<!tpu.dma_semaphore, #tpu.memory_space<semaphore_mem>>
      tpu.wait_dma2 semaphore(%417 : memref<!tpu.dma_semaphore, #tpu.memory_space<semaphore_mem>>) src(%413 : memref<128xf32, #tpu.memory_space<any>>) dst(%415 : memref<128xf32, #tpu.memory_space<vmem>>)
      %c32_i32_243 = arith.constant 32 : i32
      %418 = arith.addi %394, %c32_i32_243 : i32
      %c64_i32_244 = arith.constant 64 : i32
      %419 = arith.cmpi slt, %418, %c64_i32_244 : i32
      %420 = arith.extui %419 : i1 to i32
      %c0_i32_245 = arith.constant 0 : i32
      %421 = arith.cmpi ne, %420, %c0_i32_245 : i32
      scf.if %421 {
        %c32_i32_246 = arith.constant 32 : i32
        %422 = arith.addi %394, %c32_i32_246 : i32
        %c32_i32_247 = arith.constant 32 : i32
        %c0_i32_248 = arith.constant 0 : i32
        %423 = arith.cmpi eq, %c32_i32_247, %c0_i32_248 : i32
        %c1_i32_249 = arith.constant 1 : i32
        %424 = arith.select %423, %c1_i32_249, %c32_i32_247 : i32
        %425 = arith.remsi %422, %424 : i32
        %c0_i32_250 = arith.constant 0 : i32
        %426 = arith.cmpi ne, %425, %c0_i32_250 : i32
        %c0_i32_251 = arith.constant 0 : i32
        %427 = arith.cmpi slt, %425, %c0_i32_251 : i32
        %c0_i32_252 = arith.constant 0 : i32
        %428 = arith.cmpi slt, %424, %c0_i32_252 : i32
        %429 = arith.xori %427, %428 : i1
        %430 = arith.andi %429, %426 : i1
        %431 = arith.addi %425, %424 : i32
        %432 = arith.select %430, %431, %425 : i32
        %c0_i32_253 = arith.constant 0 : i32
        %433 = tpu.memref_slice %arg2[%401, %c0_i32_253] : memref<512x128xf32, #tpu.memory_space<any>> -> memref<1x128xf32, #tpu.memory_space<any>>
        %434 = tpu.memref_squeeze %433 : memref<1x128xf32, #tpu.memory_space<any>> -> memref<128xf32, #tpu.memory_space<any>>
        %c0_i32_254 = arith.constant 0 : i32
        %435 = tpu.memref_slice %arg3[%422, %c0_i32_254] : memref<64x128xf32, #tpu.memory_space<vmem>> -> memref<1x128xf32, #tpu.memory_space<vmem>>
        %436 = tpu.memref_squeeze %435 : memref<1x128xf32, #tpu.memory_space<vmem>> -> memref<128xf32, #tpu.memory_space<vmem>>
        %437 = tpu.memref_slice %arg4[%432] : memref<32x!tpu.dma_semaphore, #tpu.memory_space<semaphore_mem>> -> memref<1x!tpu.dma_semaphore, #tpu.memory_space<semaphore_mem>>
        %438 = tpu.memref_squeeze %437 : memref<1x!tpu.dma_semaphore, #tpu.memory_space<semaphore_mem>> -> memref<!tpu.dma_semaphore, #tpu.memory_space<semaphore_mem>>
        tpu.enqueue_dma source(%434 : memref<128xf32, #tpu.memory_space<any>>) target(%436 : memref<128xf32, #tpu.memory_space<vmem>>) target_semaphore(%438 : memref<!tpu.dma_semaphore, #tpu.memory_space<semaphore_mem>>)
      } else {
      }
    }
    %c64_i32_227 = arith.constant 64 : i32
    %388 = arith.index_cast %386 : i32 to index
    %c0 = arith.constant 0 : index
    %389 = vector.load %arg3[%388, %c0] : memref<64x128xf32, #tpu.memory_space<vmem>>, vector<64x128xf32>
    %cst = arith.constant 11.3137083 : f32
    %390 = vector.broadcast %cst : f32 to vector<64x128xf32>
    %391 = arith.mulf %389, %390 : vector<64x128xf32>
    %392 = arith.index_cast %386 : i32 to index
    %c0_228 = arith.constant 0 : index
    %393 = vector.load %arg3[%392, %c0_228] : memref<64x128xf32, #tpu.memory_space<vmem>>, vector<64x128xf32>
    tpu.vector_store %arg3[%392, %c0_228], %391 {strides = array<i32>} : memref<64x128xf32, #tpu.memory_space<vmem>>, vector<64x128xf32>,
    %c1_i32_229 = arith.constant 1 : i32
    return
  }
  func.func @transform_1(%arg0: i32, %arg1: memref<128xi32, #tpu.memory_space<smem>>) -> (i32, i32) {
    %c0_i32 = arith.constant 0 : i32
    %c0_i32_0 = arith.constant 0 : i32
    return %arg0, %c0_i32 : i32, i32
  }
}

</mosaic_0001>

<llo_original>
// kernel: tpu_custom_call.1
$region0: #{tpu_custom_call.1}
  #allocation0 [shape = 'u32[]', space=smem, size = 0x4, offset = 0x4, fixed_abs, tag = 'smem constant byte address 0x4 - core index']
  #allocation1 [shape = 'u32[144,128]{1,0:T(1,128)}', space=vmem, size = 0x12000, scoped, tag = 'internal scratch']
  #allocation2 [shape = 's32[1]{0}', space=sflag, size = 0x4, scoped, tag = 'scoped memory for tpu_custom_call.1']
  #allocation3 [shape = 'u8[512]{0}', space=smem, size = 0x200, scoped, tag = 'prefetched SMEM operand 0']
  %s0 = inlined_call_operand.hbm [shape: s32[128], index: 0, kind: input, shape index: {}]
  %s1 = inlined_call_operand.hbm [shape: f32[512,128], index: 1, kind: input, shape index: {}]
  %s2 = inlined_call_operand.hbm [shape: f32[128,128], index: 2, kind: output, shape index: {}]
  %s3 = sld [smem:[#allocation0]]
  $region48: #{tpu_custom_call.1} parent=0
    _
  %s5 = ssub.s32 1, %s3
  %s6 = scalar_select 0, %s5, %s3
  %8 = dma.hbm_to_smem %s0, 16, [#allocation3], [#allocation2]
  %9 = dma.done [#allocation2], 16
  %10 = sfence
  $region1: #{tpu_custom_call.1} parent=0
    #allocation4 [shape = 'u8[262144]{0}', space=vmem, size = 0x40000, scoped, tag = 'input window, operand 1, single buffered']
    #allocation5 [shape = 's32[2]{0}', space=sflag, size = 0x8, scoped, tag = 'scoped memory for tpu_custom_call.1']
    #allocation6 [shape = 's32[2]{0}', space=sflag, size = 0x8, scoped, tag = 'scoped memory for tpu_custom_call.1']
    #allocation7 [shape = 'u8[65536]{0}', space=vmem, size = 0x10000, scoped, tag = 'output window, operand 0']
    %11 = vsyncpa [#allocation5], 0
    %12 = vsyncpa [#allocation6], 0
    %s13 = scalar_lea.sflag [#allocation6], 1
    %14 = vsyncpa %s13, 0
    loop: start=0, step=1, limit=4
    $region2: #{tpu_custom_call.1} parent=1 // loop_pre_header
      _
    $region3: #{tpu_custom_call.1} parent=1 // loop_header
      %s16 = sphi 0, %s20
      %p17 = scmp.ge.s32.totalorder %s16, 4
      %s24 = sphi 0, %s24
      %s26 = sphi 0, %s24
      %s27 = sphi 0, %s26
      %s41 = sphi 0, %s27
      %s47 = sphi 0, %s49
      %s50 = sphi 0, %s47
      %s51 = sphi 0, %s50
      %s67 = sphi 0, %s51
    $region4: #{tpu_custom_call.1} parent=1 // loop_header_branch
      %19 = sbr.rel (%p17) target = $region8
    $region5: #{tpu_custom_call.1} parent=1 // loop_body
      %s21 = ssub.s32 %s16, 1
      %s22 = ssub.s32 %s16, 2
      %s23 = sadd.s32 %s16, 1
      %s25 = sadd.s32 %s24, 1
      %p28 = scmp.eq.s32.totalorder %s16, 1
      %p29 = scmp.ne.s32.totalorder %s24, %s26
      %p30 = scmp.eq.s32.totalorder %s16, 0
      %p31 = por %p29, %p30
      %p32 = scmp.ne.s32.totalorder %s24, %s26
      %p33 = scmp.eq.s32.totalorder %s21, 1
      %p34 = por %p32, %p33
      %p35 = scmp.ne.s32.totalorder %s26, %s27
      %p36 = scmp.eq.s32.totalorder %s21, 0
      %p37 = por %p35, %p36
      %p38 = scmp.ne.s32.totalorder %s26, %s27
      %p39 = scmp.eq.s32.totalorder %s22, 1
      %p40 = por %p38, %p39
      %p42 = scmp.ne.s32.totalorder %s27, %s41
      %p43 = scmp.eq.s32.totalorder %s22, 0
      %p44 = por %p42, %p43
      %s45 = ssub.s32 %s16, %s23
      %p46 = scmp.eq.s32.totalorder %s45, 0
      %s48 = sadd.s32 %s47, 1
      %s49 = scalar_select %p46, %s47, %s48
      %p52 = pneg %p46
      %p53 = scmp.eq.s32.totalorder %s16, 1
      %p54 = por %p52, %p53
      %p55 = scmp.ne.s32.totalorder %s47, %s50
      %p56 = scmp.eq.s32.totalorder %s16, 0
      %p57 = por %p55, %p56
      %p58 = scmp.ne.s32.totalorder %s47, %s50
      %p59 = scmp.eq.s32.totalorder %s21, 1
      %p60 = por %p58, %p59
      %p61 = scmp.ne.s32.totalorder %s50, %s51
      %p62 = scmp.eq.s32.totalorder %s21, 0
      %p63 = por %p61, %p62
      %p64 = scmp.ne.s32.totalorder %s50, %s51
      %p65 = scmp.eq.s32.totalorder %s22, 1
      %p66 = por %p64, %p65
      %p68 = scmp.ne.s32.totalorder %s51, %s67
      %p69 = scmp.eq.s32.totalorder %s22, 0
      %p70 = por %p68, %p69
      %p71 = scmp.le.s32.totalorder 1, %s16
      %p72 = scmp.lt.s32.totalorder %s16, 3
      %p73 = pnand %p71, %p72
      %p74 = pneg %p73
      // Predicated region
      $region9: #{tpu_custom_call.1} parent=5 // pred_check
        _
      $region10: #{tpu_custom_call.1} parent=5 // pred_check_branch
        %76 = sbr.rel (%p73) target = $region12
      $region11: #{tpu_custom_call.1} parent=5 // pred_region
        %s77 = ssub.s32 %s16, 1
        // Predicated region
        $region13: #{tpu_custom_call.1} parent=11 // pred_check
          %p78 = pneg %p37
        $region14: #{tpu_custom_call.1} parent=11 // pred_check_branch
          %80 = sbr.rel (%p78) target = $region16
        $region15: #{tpu_custom_call.1} parent=11 // pred_region
          %s82 = ssub.s32 8192, 8192
          %83 = vsyncadd [#allocation5], %s82
          %s84 = sshll.u32 [#allocation4], 4
          %s85 = int_to_ptr.vmem [resolvable:$true] %s84
          %90 = dma.hbm_to_vmem [thread:$0]  %s1, 8192, %s85, [#allocation5], 128, 128, 8
        $region16: #{tpu_custom_call.1} parent=11 // pred_fallthru
          _
      $region12: #{tpu_custom_call.1} parent=5 // pred_fallthru
        _
      %p91 = scmp.lt.s32.totalorder %s16, 2
      // Predicated region
      $region17: #{tpu_custom_call.1} parent=5 // pred_check
        %p92 = pneg %p91
      $region18: #{tpu_custom_call.1} parent=5 // pred_check_branch
        %94 = sbr.rel (%p92) target = $region20
      $region19: #{tpu_custom_call.1} parent=5 // pred_region
        _
      $region20: #{tpu_custom_call.1} parent=5 // pred_fallthru
        _
      %p95 = scmp.le.s32.totalorder 1, %s16
      %p96 = scmp.lt.s32.totalorder %s16, 3
      %p97 = pnand %p95, %p96
      %p98 = pneg %p97
      // Predicated region
      $region21: #{tpu_custom_call.1} parent=5 // pred_check
        _
      $region22: #{tpu_custom_call.1} parent=5 // pred_check_branch
        %100 = sbr.rel (%p97) target = $region24
      $region23: #{tpu_custom_call.1} parent=5 // pred_region
        %s101 = ssub.s32 %s16, 1
        // Predicated region
        $region25: #{tpu_custom_call.1} parent=23 // pred_check
          %p102 = pneg %p37
        $region26: #{tpu_custom_call.1} parent=23 // pred_check_branch
          %104 = sbr.rel (%p102) target = $region28
        $region27: #{tpu_custom_call.1} parent=23 // pred_region
          %105 = dma.done [#allocation5], 8192
        $region28: #{tpu_custom_call.1} parent=23 // pred_fallthru
          _
        %p106 = pneg %p37
        %p107 = pneg %p34
        %p108 = pneg %p63
        %p109 = pneg %p60
        %s110 = sand.u32 %s50, 1
        %s111 = scalar_lea.sflag [#allocation6], %s110
        %s112 = sand.u32 %s50, 1
        %s113 = smul.addr %s112, 64
        %s114 = scalar_lea.vmem [#allocation7], %s113
        %s115 = smul.u32 8, %s21
        %s116 = smul.u32 %s21, 64
        loop: start=0, step=1, limit=8
        $region29: #{tpu_custom_call.1} parent=23 // loop_pre_header
          _
        $region30: #{tpu_custom_call.1} parent=23 // loop_header
          %s118 = sphi 0, %s122
          %p119 = scmp.ge.s32.totalorder %s118, 8
        $region31: #{tpu_custom_call.1} parent=23 // loop_header_branch
          %121 = sbr.rel (%p119) target = $region35
        $region32: #{tpu_custom_call.1} parent=23 // loop_body
          %s123 = smul.u32 %s118, 8
          %s124 = sadd.s32 %s116, %s123
          %s125 = sld [smem:[#allocation3 + %s124]]
          %p126 = scmp.gt.s32.totalorder %s125, 0
          %s127 = scalar_select %p126, %s125, 0
          %p128 = scmp.lt.s32.totalorder %s127, 511
          %s129 = scalar_select %p128, %s127, 511
          %s130 = scalar_lea.vmem [#allocation4], %s129
          %v131 = vld [vmem:[%s130] sm:$0x1]
          %s132 = sadd.s32 %s124, 1
          %s133 = sld [smem:[#allocation3 + %s132]]
          %p134 = scmp.gt.s32.totalorder %s133, 0
          %s135 = scalar_select %p134, %s133, 0
          %p136 = scmp.lt.s32.totalorder %s135, 511
          %s137 = scalar_select %p136, %s135, 511
          %s138 = scalar_lea.vmem [#allocation4], %s137
          %v139 = vld [vmem:[%s138] sm:$0x1]
          %s140 = sadd.s32 %s124, 2
          %s141 = sld [smem:[#allocation3 + %s140]]
          %p142 = scmp.gt.s32.totalorder %s141, 0
          %s143 = scalar_select %p142, %s141, 0
          %p144 = scmp.lt.s32.totalorder %s143, 511
          %s145 = scalar_select %p144, %s143, 511
          %s146 = scalar_lea.vmem [#allocation4], %s145
          %v147 = vld [vmem:[%s146] sm:$0x1]
          %s148 = sadd.s32 %s124, 3
          %s149 = sld [smem:[#allocation3 + %s148]]
          %p150 = scmp.gt.s32.totalorder %s149, 0
          %s151 = scalar_select %p150, %s149, 0
          %p152 = scmp.lt.s32.totalorder %s151, 511
          %s153 = scalar_select %p152, %s151, 511
          %s154 = scalar_lea.vmem [#allocation4], %s153
          %v155 = vld [vmem:[%s154] sm:$0x1]
          %s156 = sadd.s32 %s124, 4
          %s157 = sld [smem:[#allocation3 + %s156]]
          %p158 = scmp.gt.s32.totalorder %s157, 0
          %s159 = scalar_select %p158, %s157, 0
          %p160 = scmp.lt.s32.totalorder %s159, 511
          %s161 = scalar_select %p160, %s159, 511
          %s162 = scalar_lea.vmem [#allocation4], %s161
          %v163 = vld [vmem:[%s162] sm:$0x1]
          %s164 = sadd.s32 %s124, 5
          %s165 = sld [smem:[#allocation3 + %s164]]
          %p166 = scmp.gt.s32.totalorder %s165, 0
          %s167 = scalar_select %p166, %s165, 0
          %p168 = scmp.lt.s32.totalorder %s167, 511
          %s169 = scalar_select %p168, %s167, 511
          %s170 = scalar_lea.vmem [#allocation4], %s169
          %v171 = vld [vmem:[%s170] sm:$0x1]
          %s172 = sadd.s32 %s124, 6
          %s173 = sld [smem:[#allocation3 + %s172]]
          %p174 = scmp.gt.s32.totalorder %s173, 0
          %s175 = scalar_select %p174, %s173, 0
          %p176 = scmp.lt.s32.totalorder %s175, 511
          %s177 = scalar_select %p176, %s175, 511
          %s178 = scalar_lea.vmem [#allocation4], %s177
          %v179 = vld [vmem:[%s178] sm:$0x1]
          %s180 = sadd.s32 %s124, 7
          %s181 = sld [smem:[#allocation3 + %s180]]
          %p182 = scmp.gt.s32.totalorder %s181, 0
          %s183 = scalar_select %p182, %s181, 0
          %p184 = scmp.lt.s32.totalorder %s183, 511
          %s185 = scalar_select %p184, %s183, 511
          %s186 = scalar_lea.vmem [#allocation4], %s185
          %v187 = vld [vmem:[%s186] sm:$0x1]
          %v189 = vrot.slane %v139, 7
          %v192 = vrot.slane %v147, 6
          %v195 = vrot.slane %v155, 5
          %v198 = vrot.slane %v163, 4
          %v201 = vrot.slane %v171, 3
          %v204 = vrot.slane %v179, 2
          %v207 = vrot.slane %v187, 1
          %vm209 = vcmask 1040384
          %v210 = vsel %vm209, %v131, %v189
          %vm211 = vcmask 1041408
          %v212 = vsel %vm211, %v210, %v192
          %vm213 = vcmask 1042432
          %v214 = vsel %vm213, %v212, %v195
          %vm215 = vcmask 1043456
          %v216 = vsel %vm215, %v214, %v198
          %vm217 = vcmask 1044480
          %v218 = vsel %vm217, %v216, %v201
          %vm219 = vcmask 1045504
          %v220 = vsel %vm219, %v218, %v204
          %vm221 = vcmask 1046528
          %v222 = vsel %vm221, %v220, %v207
          %v223 = vmul.f32 %v222, 11.313708
          %s224 = scalar_lea.vmem %s114, %s123 [#allocation7]
          %225 = vst [vmem:[%s224] sm:$0xff] %v223
        $region33: #{tpu_custom_call.1} parent=23 // loop_footer
          %s122 = sadd.s32 1, %s118
        $region34: #{tpu_custom_call.1} parent=23 // loop_footer_branch
          %117 = sbr.rel target = $region30
        $region35: #{tpu_custom_call.1} parent=23 // loop_exit
          _
        %s226 = sand.u32 %s50, 1
        %s227 = scalar_lea.sflag [#allocation6], %s226
        %s228 = sand.u32 %s50, 1
        %s229 = smul.addr %s228, 64
        %s230 = scalar_lea.vmem [#allocation7], %s229
        // Predicated region
        $region36: #{tpu_custom_call.1} parent=23 // pred_check
          %p231 = pneg %p60
        $region37: #{tpu_custom_call.1} parent=23 // pred_check_branch
          %233 = sbr.rel (%p231) target = $region39
        $region38: #{tpu_custom_call.1} parent=23 // pred_region
          %s234 = smul.u32 8, %s21
          %s236 = ssub.s32 1024, 1024
          %237 = vsyncadd %s227, %s236
          %s238 = smul.addr %s234, 128
          %s239 = scalar_lea.hbm %s2, %s238
          %s240 = sshll.u32 %s230, 4
          %s241 = int_to_ptr.vmem [resolvable:$true] %s240
          %246 = dma.vmem_to_hbm [thread:$0]  %s241, 1024, %s239, %s227, 128, 128, 8
        $region39: #{tpu_custom_call.1} parent=23 // pred_fallthru
          _
      $region24: #{tpu_custom_call.1} parent=5 // pred_fallthru
        _
      %p247 = scmp.le.s32.totalorder 2, %s16
      // Predicated region
      $region40: #{tpu_custom_call.1} parent=5 // pred_check
        %p248 = pneg %p247
      $region41: #{tpu_custom_call.1} parent=5 // pred_check_branch
        %250 = sbr.rel (%p248) target = $region43
      $region42: #{tpu_custom_call.1} parent=5 // pred_region
        %s251 = ssub.s32 %s16, 2
        // Predicated region
        $region44: #{tpu_custom_call.1} parent=42 // pred_check
          %p252 = pneg %p66
        $region45: #{tpu_custom_call.1} parent=42 // pred_check_branch
          %254 = sbr.rel (%p252) target = $region47
        $region46: #{tpu_custom_call.1} parent=42 // pred_region
          %s255 = sand.u32 %s51, 1
          %s256 = scalar_lea.sflag [#allocation6], %s255
          %s257 = sand.u32 %s51, 1
          %s258 = smul.addr %s257, 64
          %s259 = scalar_lea.vmem [#allocation7], %s258
          %260 = dma.done %s256, 1024
        $region47: #{tpu_custom_call.1} parent=42 // pred_fallthru
          _
      $region43: #{tpu_custom_call.1} parent=5 // pred_fallthru
        _
    $region6: #{tpu_custom_call.1} parent=1 // loop_footer
      %s20 = sadd.s32 1, %s16
    $region7: #{tpu_custom_call.1} parent=1 // loop_footer_branch
      %15 = sbr.rel target = $region3
    $region8: #{tpu_custom_call.1} parent=1 // loop_exit
      _
    %261 = vsyncpa [#allocation5], 1
    %s262 = scalar_lea.sflag [#allocation5], 1
    %263 = vsyncpa %s262, 1
    %264 = vsyncpa [#allocation6], 1
    %s265 = scalar_lea.sflag [#allocation6], 1
    %266 = vsyncpa %s265, 1

// kernel: tpu_custom_call.1
$region0: #{tpu_custom_call.1}
  #allocation0 [shape = 'u32[]', space=smem, size = 0x4, offset = 0x4, fixed_abs, tag = 'smem constant byte address 0x4 - core index']
  #allocation1 [shape = 'u32[144,128]{1,0:T(1,128)}', space=vmem, size = 0x12000, scoped, tag = 'internal scratch']
  #allocation2 [shape = 's32[1]{0}', space=sflag, size = 0x4, scoped, tag = 'scoped memory for tpu_custom_call.1']
  #allocation3 [shape = 'u8[512]{0}', space=smem, size = 0x200, scoped, tag = 'prefetched SMEM operand 0']
  %s0 = inlined_call_operand.hbm [shape: s32[128], index: 0, kind: input, shape index: {}]
  %s1 = inlined_call_operand.hbm [shape: f32[512,128], index: 1, kind: input, shape index: {}]
  %s2 = inlined_call_operand.hbm [shape: f32[128,128], index: 2, kind: output, shape index: {}]
  %s3 = sld [smem:[#allocation0]]
  $region48: #{tpu_custom_call.1} parent=0
    _
  %s5 = ssub.s32 1, %s3
  %s6 = scalar_select 0, %s5, %s3
  %8 = dma.hbm_to_smem %s0, 16, [#allocation3], [#allocation2]
  %9 = dma.done [#allocation2], 16
  %10 = sfence
  $region1: #{tpu_custom_call.1} parent=0
    #allocation4 [shape = 'u8[262144]{0}', space=vmem, size = 0x40000, scoped, tag = 'input window, operand 1, single buffered']
    #allocation5 [shape = 's32[2]{0}', space=sflag, size = 0x8, scoped, tag = 'scoped memory for tpu_custom_call.1']
    #allocation6 [shape = 's32[2]{0}', space=sflag, size = 0x8, scoped, tag = 'scoped memory for tpu_custom_call.1']
    #allocation7 [shape = 'u8[65536]{0}', space=vmem, size = 0x10000, scoped, tag = 'output window, operand 0']
    %11 = vsyncpa [#allocation5], 0
    %12 = vsyncpa [#allocation6], 0
    %s13 = scalar_lea.sflag [#allocation6], 1
    %14 = vsyncpa %s13, 0
    loop: start=0, step=1, limit=4
    $region2: #{tpu_custom_call.1} parent=1 // loop_pre_header
      _
    $region3: #{tpu_custom_call.1} parent=1 // loop_header
      %s16 = sphi 0, %s20
      %p17 = scmp.ge.s32.totalorder %s16, 4
      %s24 = sphi 0, %s24
      %s26 = sphi 0, %s24
      %s27 = sphi 0, %s26
      %s41 = sphi 0, %s27
      %s47 = sphi 0, %s49
      %s50 = sphi 0, %s47
      %s51 = sphi 0, %s50
      %s67 = sphi 0, %s51
    $region4: #{tpu_custom_call.1} parent=1 // loop_header_branch
      %19 = sbr.rel (%p17) target = $region8
    $region5: #{tpu_custom_call.1} parent=1 // loop_body
      %s21 = ssub.s32 %s16, 1
      %s22 = ssub.s32 %s16, 2
      %s23 = sadd.s32 %s16, 1
      %s25 = sadd.s32 %s24, 1
      %p28 = scmp.eq.s32.totalorder %s16, 1
      %p29 = scmp.ne.s32.totalorder %s24, %s26
      %p30 = scmp.eq.s32.totalorder %s16, 0
      %p31 = por %p29, %p30
      %p32 = scmp.ne.s32.totalorder %s24, %s26
      %p33 = scmp.eq.s32.totalorder %s21, 1
      %p34 = por %p32, %p33
      %p35 = scmp.ne.s32.totalorder %s26, %s27
      %p36 = scmp.eq.s32.totalorder %s21, 0
      %p37 = por %p35, %p36
      %p38 = scmp.ne.s32.totalorder %s26, %s27
      %p39 = scmp.eq.s32.totalorder %s22, 1
      %p40 = por %p38, %p39
      %p42 = scmp.ne.s32.totalorder %s27, %s41
      %p43 = scmp.eq.s32.totalorder %s22, 0
      %p44 = por %p42, %p43
      %s45 = ssub.s32 %s16, %s23
      %p46 = scmp.eq.s32.totalorder %s45, 0
      %s48 = sadd.s32 %s47, 1
      %s49 = scalar_select %p46, %s47, %s48
      %p52 = pneg %p46
      %p53 = scmp.eq.s32.totalorder %s16, 1
      %p54 = por %p52, %p53
      %p55 = scmp.ne.s32.totalorder %s47, %s50
      %p56 = scmp.eq.s32.totalorder %s16, 0
      %p57 = por %p55, %p56
      %p58 = scmp.ne.s32.totalorder %s47, %s50
      %p59 = scmp.eq.s32.totalorder %s21, 1
      %p60 = por %p58, %p59
      %p61 = scmp.ne.s32.totalorder %s50, %s51
      %p62 = scmp.eq.s32.totalorder %s21, 0
      %p63 = por %p61, %p62
      %p64 = scmp.ne.s32.totalorder %s50, %s51
      %p65 = scmp.eq.s32.totalorder %s22, 1
      %p66 = por %p64, %p65
      %p68 = scmp.ne.s32.totalorder %s51, %s67
      %p69 = scmp.eq.s32.totalorder %s22, 0
      %p70 = por %p68, %p69
      %p71 = scmp.le.s32.totalorder 1, %s16
      %p72 = scmp.lt.s32.totalorder %s16, 3
      %p73 = pnand %p71, %p72
      %p74 = pneg %p73
      // Predicated region
      $region9: #{tpu_custom_call.1} parent=5 // pred_check
        _
      $region10: #{tpu_custom_call.1} parent=5 // pred_check_branch
        %76 = sbr.rel (%p73) target = $region12
      $region11: #{tpu_custom_call.1} parent=5 // pred_region
        %s77 = ssub.s32 %s16, 1
        // Predicated region
        $region13: #{tpu_custom_call.1} parent=11 // pred_check
          %p78 = pneg %p37
        $region14: #{tpu_custom_call.1} parent=11 // pred_check_branch
          %80 = sbr.rel (%p78) target = $region16
        $region15: #{tpu_custom_call.1} parent=11 // pred_region
          %s82 = ssub.s32 8192, 8192
          %83 = vsyncadd [#allocation5], %s82
          %s84 = sshll.u32 [#allocation4], 4
          %s85 = int_to_ptr.vmem [resolvable:$true] %s84
          %90 = dma.hbm_to_vmem [thread:$0]  %s1, 8192, %s85, [#allocation5], 128, 128, 8
        $region16: #{tpu_custom_call.1} parent=11 // pred_fallthru
          _
      $region12: #{tpu_custom_call.1} parent=5 // pred_fallthru
        _
      %p91 = scmp.lt.s32.totalorder %s16, 2
      // Predicated region
      $region17: #{tpu_custom_call.1} parent=5 // pred_check
        %p92 = pneg %p91
      $region18: #{tpu_custom_call.1} parent=5 // pred_check_branch
        %94 = sbr.rel (%p92) target = $region20
      $region19: #{tpu_custom_call.1} parent=5 // pred_region
        _
      $region20: #{tpu_custom_call.1} parent=5 // pred_fallthru
        _
      %p95 = scmp.le.s32.totalorder 1, %s16
      %p96 = scmp.lt.s32.totalorder %s16, 3
      %p97 = pnand %p95, %p96
      %p98 = pneg %p97
      // Predicated region
      $region21: #{tpu_custom_call.1} parent=5 // pred_check
        _
      $region22: #{tpu_custom_call.1} parent=5 // pred_check_branch
        %100 = sbr.rel (%p97) target = $region24
      $region23: #{tpu_custom_call.1} parent=5 // pred_region
        %s101 = ssub.s32 %s16, 1
        // Predicated region
        $region25: #{tpu_custom_call.1} parent=23 // pred_check
          %p102 = pneg %p37
        $region26: #{tpu_custom_call.1} parent=23 // pred_check_branch
          %104 = sbr.rel (%p102) target = $region28
        $region27: #{tpu_custom_call.1} parent=23 // pred_region
          %105 = dma.done [#allocation5], 8192
        $region28: #{tpu_custom_call.1} parent=23 // pred_fallthru
          _
        %p106 = pneg %p37
        %p107 = pneg %p34
        %p108 = pneg %p63
        %p109 = pneg %p60
        %s110 = sand.u32 %s50, 1
        %s111 = scalar_lea.sflag [#allocation6], %s110
        %s112 = sand.u32 %s50, 1
        %s113 = smul.addr %s112, 64
        %s114 = scalar_lea.vmem [#allocation7], %s113
        %s115 = smul.u32 8, %s21
        %s116 = smul.u32 %s21, 64
        loop: start=0, step=1, limit=8
        $region29: #{tpu_custom_call.1} parent=23 // loop_pre_header
          _
        $region30: #{tpu_custom_call.1} parent=23 // loop_header
          %s118 = sphi 0, %s122
          %p119 = scmp.ge.s32.totalorder %s118, 8
        $region31: #{tpu_custom_call.1} parent=23 // loop_header_branch
          %121 = sbr.rel (%p119) target = $region35
        $region32: #{tpu_custom_call.1} parent=23 // loop_body
          %s123 = smul.u32 %s118, 8
          %s124 = sadd.s32 %s116, %s123
          %s125 = sld [smem:[#allocation3 + %s124]]
          %p126 = scmp.gt.s32.totalorder %s125, 0
          %s127 = scalar_select %p126, %s125, 0
          %p128 = scmp.lt.s32.totalorder %s127, 511
          %s129 = scalar_select %p128, %s127, 511
          %s130 = scalar_lea.vmem [#allocation4], %s129
          %v131 = vld [vmem:[%s130] sm:$0x1]
          %s132 = sadd.s32 %s124, 1
          %s133 = sld [smem:[#allocation3 + %s132]]
          %p134 = scmp.gt.s32.totalorder %s133, 0
          %s135 = scalar_select %p134, %s133, 0
          %p136 = scmp.lt.s32.totalorder %s135, 511
          %s137 = scalar_select %p136, %s135, 511
          %s138 = scalar_lea.vmem [#allocation4], %s137
          %v139 = vld [vmem:[%s138] sm:$0x1]
          %s140 = sadd.s32 %s124, 2
          %s141 = sld [smem:[#allocation3 + %s140]]
          %p142 = scmp.gt.s32.totalorder %s141, 0
          %s143 = scalar_select %p142, %s141, 0
          %p144 = scmp.lt.s32.totalorder %s143, 511
          %s145 = scalar_select %p144, %s143, 511
          %s146 = scalar_lea.vmem [#allocation4], %s145
          %v147 = vld [vmem:[%s146] sm:$0x1]
          %s148 = sadd.s32 %s124, 3
          %s149 = sld [smem:[#allocation3 + %s148]]
          %p150 = scmp.gt.s32.totalorder %s149, 0
          %s151 = scalar_select %p150, %s149, 0
          %p152 = scmp.lt.s32.totalorder %s151, 511
          %s153 = scalar_select %p152, %s151, 511
          %s154 = scalar_lea.vmem [#allocation4], %s153
          %v155 = vld [vmem:[%s154] sm:$0x1]
          %s156 = sadd.s32 %s124, 4
          %s157 = sld [smem:[#allocation3 + %s156]]
          %p158 = scmp.gt.s32.totalorder %s157, 0
          %s159 = scalar_select %p158, %s157, 0
          %p160 = scmp.lt.s32.totalorder %s159, 511
          %s161 = scalar_select %p160, %s159, 511
          %s162 = scalar_lea.vmem [#allocation4], %s161
          %v163 = vld [vmem:[%s162] sm:$0x1]
          %s164 = sadd.s32 %s124, 5
          %s165 = sld [smem:[#allocation3 + %s164]]
          %p166 = scmp.gt.s32.totalorder %s165, 0
          %s167 = scalar_select %p166, %s165, 0
          %p168 = scmp.lt.s32.totalorder %s167, 511
          %s169 = scalar_select %p168, %s167, 511
          %s170 = scalar_lea.vmem [#allocation4], %s169
          %v171 = vld [vmem:[%s170] sm:$0x1]
          %s172 = sadd.s32 %s124, 6
          %s173 = sld [smem:[#allocation3 + %s172]]
          %p174 = scmp.gt.s32.totalorder %s173, 0
          %s175 = scalar_select %p174, %s173, 0
          %p176 = scmp.lt.s32.totalorder %s175, 511
          %s177 = scalar_select %p176, %s175, 511
          %s178 = scalar_lea.vmem [#allocation4], %s177
          %v179 = vld [vmem:[%s178] sm:$0x1]
          %s180 = sadd.s32 %s124, 7
          %s181 = sld [smem:[#allocation3 + %s180]]
          %p182 = scmp.gt.s32.totalorder %s181, 0
          %s183 = scalar_select %p182, %s181, 0
          %p184 = scmp.lt.s32.totalorder %s183, 511
          %s185 = scalar_select %p184, %s183, 511
          %s186 = scalar_lea.vmem [#allocation4], %s185
          %v187 = vld [vmem:[%s186] sm:$0x1]
          %v189 = vrot.slane %v139, 7
          %v192 = vrot.slane %v147, 6
          %v195 = vrot.slane %v155, 5
          %v198 = vrot.slane %v163, 4
          %v201 = vrot.slane %v171, 3
          %v204 = vrot.slane %v179, 2
          %v207 = vrot.slane %v187, 1
          %vm209 = vcmask 1040384
          %v210 = vsel %vm209, %v131, %v189
          %vm211 = vcmask 1041408
          %v212 = vsel %vm211, %v210, %v192
          %vm213 = vcmask 1042432
          %v214 = vsel %vm213, %v212, %v195
          %vm215 = vcmask 1043456
          %v216 = vsel %vm215, %v214, %v198
          %vm217 = vcmask 1044480
          %v218 = vsel %vm217, %v216, %v201
          %vm219 = vcmask 1045504
          %v220 = vsel %vm219, %v218, %v204
          %vm221 = vcmask 1046528
          %v222 = vsel %vm221, %v220, %v207
          %v223 = vmul.f32 %v222, 11.313708
          %s224 = scalar_lea.vmem %s114, %s123 [#allocation7]
          %225 = vst [vmem:[%s224] sm:$0xff] %v223
        $region33: #{tpu_custom_call.1} parent=23 // loop_footer
          %s122 = sadd.s32 1, %s118
        $region34: #{tpu_custom_call.1} parent=23 // loop_footer_branch
          %117 = sbr.rel target = $region30
        $region35: #{tpu_custom_call.1} parent=23 // loop_exit
          _
        %s226 = sand.u32 %s50, 1
        %s227 = scalar_lea.sflag [#allocation6], %s226
        %s228 = sand.u32 %s50, 1
        %s229 = smul.addr %s228, 64
        %s230 = scalar_lea.vmem [#allocation7], %s229
        // Predicated region
        $region36: #{tpu_custom_call.1} parent=23 // pred_check
          %p231 = pneg %p60
        $region37: #{tpu_custom_call.1} parent=23 // pred_check_branch
          %233 = sbr.rel (%p231) target = $region39
        $region38: #{tpu_custom_call.1} parent=23 // pred_region
          %s234 = smul.u32 8, %s21
          %s236 = ssub.s32 1024, 1024
          %237 = vsyncadd %s227, %s236
          %s238 = smul.addr %s234, 128
          %s239 = scalar_lea.hbm %s2, %s238
          %s240 = sshll.u32 %s230, 4
          %s241 = int_to_ptr.vmem [resolvable:$true] %s240
          %246 = dma.vmem_to_hbm [thread:$0]  %s241, 1024, %s239, %s227, 128, 128, 8
        $region39: #{tpu_custom_call.1} parent=23 // pred_fallthru
          _
      $region24: #{tpu_custom_call.1} parent=5 // pred_fallthru
        _
      %p247 = scmp.le.s32.totalorder 2, %s16
      // Predicated region
      $region40: #{tpu_custom_call.1} parent=5 // pred_check
        %p248 = pneg %p247
      $region41: #{tpu_custom_call.1} parent=5 // pred_check_branch
        %250 = sbr.rel (%p248) target = $region43
      $region42: #{tpu_custom_call.1} parent=5 // pred_region
        %s251 = ssub.s32 %s16, 2
        // Predicated region
        $region44: #{tpu_custom_call.1} parent=42 // pred_check
          %p252 = pneg %p66
        $region45: #{tpu_custom_call.1} parent=42 // pred_check_branch
          %254 = sbr.rel (%p252) target = $region47
        $region46: #{tpu_custom_call.1} parent=42 // pred_region
          %s255 = sand.u32 %s51, 1
          %s256 = scalar_lea.sflag [#allocation6], %s255
          %s257 = sand.u32 %s51, 1
          %s258 = smul.addr %s257, 64
          %s259 = scalar_lea.vmem [#allocation7], %s258
          %260 = dma.done %s256, 1024
        $region47: #{tpu_custom_call.1} parent=42 // pred_fallthru
          _
      $region43: #{tpu_custom_call.1} parent=5 // pred_fallthru
        _
    $region6: #{tpu_custom_call.1} parent=1 // loop_footer
      %s20 = sadd.s32 1, %s16
    $region7: #{tpu_custom_call.1} parent=1 // loop_footer_branch
      %15 = sbr.rel target = $region3
    $region8: #{tpu_custom_call.1} parent=1 // loop_exit
      _
    %261 = vsyncpa [#allocation5], 1
    %s262 = scalar_lea.sflag [#allocation5], 1
    %263 = vsyncpa %s262, 1
    %264 = vsyncpa [#allocation6], 1
    %s265 = scalar_lea.sflag [#allocation6], 1
    %266 = vsyncpa %s265, 1

// kernel: tpu_custom_call.1
$region0: #{tpu_custom_call.1}
  #allocation0 [shape = 'u32[]', space=smem, size = 0x4, offset = 0x4, fixed_abs, tag = 'smem constant byte address 0x4 - core index']
  #allocation1 [shape = 'u32[144,128]{1,0:T(1,128)}', space=vmem, size = 0x12000, scoped, tag = 'internal scratch']
  #allocation2 [shape = 's32[32]{0}', space=sflag, size = 0x80, scoped, tag = 'scratch operand']
  #allocation3 [shape = 's32[1]{0}', space=sflag, size = 0x4, scoped, tag = 'scoped memory for tpu_custom_call.1']
  #allocation4 [shape = 'u8[512]{0}', space=smem, size = 0x200, scoped, tag = 'prefetched SMEM operand 0']
  #allocation7 [shape = 's32[]', space=sflag, size = 0x4, offset = 0, fixed_abs, tag = 'sflag constant byte address 0x0 - dummy sync flag']
  #allocation8 [shape = 's32[]', space=sflag, size = 0x4, offset = 0, fixed_abs, tag = 'sflag constant byte address 0x0 - dummy sync flag']
  #allocation9 [shape = 'u32[]', space=smem, size = 0x4, offset = 0x44, fixed_abs, tag = 'smem constant byte address 0x44 - assertion arg 0']
  #allocation10 [shape = 'u32[]', space=smem, size = 0x4, offset = 0x48, fixed_abs, tag = 'smem constant byte address 0x48 - assertion arg 1']
  #allocation11 [shape = 's32[]', space=sflag, size = 0x4, offset = 0, fixed_abs, tag = 'sflag constant byte address 0x0 - dummy sync flag']
  #allocation12 [shape = 's32[]', space=sflag, size = 0x4, offset = 0, fixed_abs, tag = 'sflag constant byte address 0x0 - dummy sync flag']
  #allocation13 [shape = 's32[]', space=sflag, size = 0x4, offset = 0, fixed_abs, tag = 'sflag constant byte address 0x0 - dummy sync flag']
  #allocation14 [shape = 's32[]', space=sflag, size = 0x4, offset = 0, fixed_abs, tag = 'sflag constant byte address 0x0 - dummy sync flag']
  #allocation15 [shape = 's32[]', space=sflag, size = 0x4, offset = 0, fixed_abs, tag = 'sflag constant byte address 0x0 - dummy sync flag']
  #allocation16 [shape = 's32[]', space=sflag, size = 0x4, offset = 0, fixed_abs, tag = 'sflag constant byte address 0x0 - dummy sync flag']
  #allocation17 [shape = 's32[]', space=sflag, size = 0x4, offset = 0, fixed_abs, tag = 'sflag constant byte address 0x0 - dummy sync flag']
  #allocation18 [shape = 's32[]', space=sflag, size = 0x4, offset = 0, fixed_abs, tag = 'sflag constant byte address 0x0 - dummy sync flag']
  #allocation19 [shape = 's32[]', space=sflag, size = 0x4, offset = 0, fixed_abs, tag = 'sflag constant byte address 0x0 - dummy sync flag']
  #allocation20 [shape = 's32[]', space=sflag, size = 0x4, offset = 0, fixed_abs, tag = 'sflag constant byte address 0x0 - dummy sync flag']
  #allocation21 [shape = 's32[]', space=sflag, size = 0x4, offset = 0, fixed_abs, tag = 'sflag constant byte address 0x0 - dummy sync flag']
  #allocation22 [shape = 's32[]', space=sflag, size = 0x4, offset = 0, fixed_abs, tag = 'sflag constant byte address 0x0 - dummy sync flag']
  #allocation23 [shape = 's32[]', space=sflag, size = 0x4, offset = 0, fixed_abs, tag = 'sflag constant byte address 0x0 - dummy sync flag']
  #allocation24 [shape = 's32[]', space=sflag, size = 0x4, offset = 0, fixed_abs, tag = 'sflag constant byte address 0x0 - dummy sync flag']
  #allocation25 [shape = 's32[]', space=sflag, size = 0x4, offset = 0, fixed_abs, tag = 'sflag constant byte address 0x0 - dummy sync flag']
  #allocation26 [shape = 's32[]', space=sflag, size = 0x4, offset = 0, fixed_abs, tag = 'sflag constant byte address 0x0 - dummy sync flag']
  #allocation27 [shape = 's32[]', space=sflag, size = 0x4, offset = 0, fixed_abs, tag = 'sflag constant byte address 0x0 - dummy sync flag']
  #allocation28 [shape = 's32[]', space=sflag, size = 0x4, offset = 0, fixed_abs, tag = 'sflag constant byte address 0x0 - dummy sync flag']
  #allocation29 [shape = 's32[]', space=sflag, size = 0x4, offset = 0, fixed_abs, tag = 'sflag constant byte address 0x0 - dummy sync flag']
  #allocation30 [shape = 's32[]', space=sflag, size = 0x4, offset = 0, fixed_abs, tag = 'sflag constant byte address 0x0 - dummy sync flag']
  #allocation31 [shape = 's32[]', space=sflag, size = 0x4, offset = 0, fixed_abs, tag = 'sflag constant byte address 0x0 - dummy sync flag']
  #allocation32 [shape = 's32[]', space=sflag, size = 0x4, offset = 0, fixed_abs, tag = 'sflag constant byte address 0x0 - dummy sync flag']
  #allocation33 [shape = 's32[]', space=sflag, size = 0x4, offset = 0, fixed_abs, tag = 'sflag constant byte address 0x0 - dummy sync flag']
  #allocation34 [shape = 's32[]', space=sflag, size = 0x4, offset = 0, fixed_abs, tag = 'sflag constant byte address 0x0 - dummy sync flag']
  #allocation35 [shape = 's32[]', space=sflag, size = 0x4, offset = 0, fixed_abs, tag = 'sflag constant byte address 0x0 - dummy sync flag']
  #allocation36 [shape = 's32[]', space=sflag, size = 0x4, offset = 0, fixed_abs, tag = 'sflag constant byte address 0x0 - dummy sync flag']
  #allocation37 [shape = 's32[]', space=sflag, size = 0x4, offset = 0, fixed_abs, tag = 'sflag constant byte address 0x0 - dummy sync flag']
  #allocation38 [shape = 's32[]', space=sflag, size = 0x4, offset = 0, fixed_abs, tag = 'sflag constant byte address 0x0 - dummy sync flag']
  #allocation39 [shape = 's32[]', space=sflag, size = 0x4, offset = 0, fixed_abs, tag = 'sflag constant byte address 0x0 - dummy sync flag']
  #allocation40 [shape = 's32[]', space=sflag, size = 0x4, offset = 0, fixed_abs, tag = 'sflag constant byte address 0x0 - dummy sync flag']
  #allocation41 [shape = 's32[]', space=sflag, size = 0x4, offset = 0, fixed_abs, tag = 'sflag constant byte address 0x0 - dummy sync flag']
  #allocation42 [shape = 's32[]', space=sflag, size = 0x4, offset = 0, fixed_abs, tag = 'sflag constant byte address 0x0 - dummy sync flag']
  #allocation43 [shape = 's32[]', space=sflag, size = 0x4, offset = 0, fixed_abs, tag = 'sflag constant byte address 0x0 - dummy sync flag']
  #allocation44 [shape = 's32[]', space=sflag, size = 0x4, offset = 0, fixed_abs, tag = 'sflag constant byte address 0x0 - dummy sync flag']
  #allocation45 [shape = 's32[]', space=sflag, size = 0x4, offset = 0, fixed_abs, tag = 'sflag constant byte address 0x0 - dummy sync flag']
  #allocation46 [shape = 's32[]', space=sflag, size = 0x4, offset = 0, fixed_abs, tag = 'sflag constant byte address 0x0 - dummy sync flag']
  #allocation47 [shape = 's32[]', space=sflag, size = 0x4, offset = 0, fixed_abs, tag = 'sflag constant byte address 0x0 - dummy sync flag']
  #allocation48 [shape = 's32[]', space=sflag, size = 0x4, offset = 0, fixed_abs, tag = 'sflag constant byte address 0x0 - dummy sync flag']
  #allocation49 [shape = 's32[]', space=sflag, size = 0x4, offset = 0, fixed_abs, tag = 'sflag constant byte address 0x0 - dummy sync flag']
  #allocation50 [shape = 's32[]', space=sflag, size = 0x4, offset = 0, fixed_abs, tag = 'sflag constant byte address 0x0 - dummy sync flag']
  #allocation51 [shape = 's32[]', space=sflag, size = 0x4, offset = 0, fixed_abs, tag = 'sflag constant byte address 0x0 - dummy sync flag']
  #allocation52 [shape = 's32[]', space=sflag, size = 0x4, offset = 0, fixed_abs, tag = 'sflag constant byte address 0x0 - dummy sync flag']
  #allocation53 [shape = 's32[]', space=sflag, size = 0x4, offset = 0, fixed_abs, tag = 'sflag constant byte address 0x0 - dummy sync flag']
  #allocation54 [shape = 's32[]', space=sflag, size = 0x4, offset = 0, fixed_abs, tag = 'sflag constant byte address 0x0 - dummy sync flag']
  #allocation55 [shape = 's32[]', space=sflag, size = 0x4, offset = 0, fixed_abs, tag = 'sflag constant byte address 0x0 - dummy sync flag']
  #allocation56 [shape = 's32[]', space=sflag, size = 0x4, offset = 0, fixed_abs, tag = 'sflag constant byte address 0x0 - dummy sync flag']
  #allocation57 [shape = 's32[]', space=sflag, size = 0x4, offset = 0, fixed_abs, tag = 'sflag constant byte address 0x0 - dummy sync flag']
  #allocation58 [shape = 's32[]', space=sflag, size = 0x4, offset = 0, fixed_abs, tag = 'sflag constant byte address 0x0 - dummy sync flag']
  #allocation59 [shape = 's32[]', space=sflag, size = 0x4, offset = 0, fixed_abs, tag = 'sflag constant byte address 0x0 - dummy sync flag']
  #allocation60 [shape = 's32[]', space=sflag, size = 0x4, offset = 0, fixed_abs, tag = 'sflag constant byte address 0x0 - dummy sync flag']
  #allocation61 [shape = 's32[]', space=sflag, size = 0x4, offset = 0, fixed_abs, tag = 'sflag constant byte address 0x0 - dummy sync flag']
  #allocation62 [shape = 's32[]', space=sflag, size = 0x4, offset = 0, fixed_abs, tag = 'sflag constant byte address 0x0 - dummy sync flag']
  #allocation63 [shape = 's32[]', space=sflag, size = 0x4, offset = 0, fixed_abs, tag = 'sflag constant byte address 0x0 - dummy sync flag']
  #allocation64 [shape = 's32[]', space=sflag, size = 0x4, offset = 0, fixed_abs, tag = 'sflag constant byte address 0x0 - dummy sync flag']
  #allocation65 [shape = 's32[]', space=sflag, size = 0x4, offset = 0, fixed_abs, tag = 'sflag constant byte address 0x0 - dummy sync flag']
  #allocation66 [shape = 's32[]', space=sflag, size = 0x4, offset = 0, fixed_abs, tag = 'sflag constant byte address 0x0 - dummy sync flag']
  #allocation67 [shape = 's32[]', space=sflag, size = 0x4, offset = 0, fixed_abs, tag = 'sflag constant byte address 0x0 - dummy sync flag']
  #allocation68 [shape = 's32[]', space=sflag, size = 0x4, offset = 0, fixed_abs, tag = 'sflag constant byte address 0x0 - dummy sync flag']
  #allocation69 [shape = 's32[]', space=sflag, size = 0x4, offset = 0, fixed_abs, tag = 'sflag constant byte address 0x0 - dummy sync flag']
  #allocation70 [shape = 's32[]', space=sflag, size = 0x4, offset = 0, fixed_abs, tag = 'sflag constant byte address 0x0 - dummy sync flag']
  #allocation71 [shape = 's32[]', space=sflag, size = 0x4, offset = 0, fixed_abs, tag = 'sflag constant byte address 0x0 - dummy sync flag']
  #allocation72 [shape = 's32[]', space=sflag, size = 0x4, offset = 0, fixed_abs, tag = 'sflag constant byte address 0x0 - dummy sync flag']
  #allocation73 [shape = 's32[]', space=sflag, size = 0x4, offset = 0, fixed_abs, tag = 'sflag constant byte address 0x0 - dummy sync flag']
  #allocation74 [shape = 's32[]', space=sflag, size = 0x4, offset = 0, fixed_abs, tag = 'sflag constant byte address 0x0 - dummy sync flag']
  %s0 = inlined_call_operand.hbm [shape: s32[128], index: 0, kind: input, shape index: {}]
  %s1 = inlined_call_operand.hbm [shape: f32[512,128], index: 1, kind: input, shape index: {}]
  %s2 = inlined_call_operand.hbm [shape: f32[128,128], index: 2, kind: output, shape index: {}]
  %s3 = sld [smem:[#allocation0]]
  $region168: #{tpu_custom_call.1} parent=0
    _
  %s5 = ssub.s32 1, %s3
  %s6 = scalar_select 0, %s5, %s3
  %8 = dma.hbm_to_smem %s0, 16, [#allocation4], [#allocation3]
  %9 = dma.done [#allocation3], 16
  %10 = sfence
  $region1: #{tpu_custom_call.1} parent=0
    #allocation5 [shape = 'u8[65536]{0}', space=vmem, size = 0x10000, scoped, tag = 'output window, operand 0']
    #allocation6 [shape = 's32[2]{0}', space=sflag, size = 0x8, scoped, tag = 'scoped memory for tpu_custom_call.1']
    %11 = vsyncpa [#allocation6], 0
    %s12 = scalar_lea.sflag [#allocation6], 1
    %13 = vsyncpa %s12, 0
    loop: start=0, step=1, limit=3
    $region2: #{tpu_custom_call.1} parent=1 // loop_pre_header
      _
    $region3: #{tpu_custom_call.1} parent=1 // loop_header
      %s15 = sphi 0, %s19
      %p16 = scmp.ge.s32.totalorder %s15, 3
      %s24 = sphi 0, %s26
      %s27 = sphi 0, %s24
      %s37 = sphi 0, %s27
    $region4: #{tpu_custom_call.1} parent=1 // loop_header_branch
      %18 = sbr.rel (%p16) target = $region8
    $region5: #{tpu_custom_call.1} parent=1 // loop_body
      %s20 = ssub.s32 %s15, 1
      %s21 = sadd.s32 %s15, 1
      %s22 = ssub.s32 %s15, %s21
      %p23 = scmp.eq.s32.totalorder %s22, 0
      %s25 = sadd.s32 %s24, 1
      %s26 = scalar_select %p23, %s24, %s25
      %p28 = pneg %p23
      %p29 = scmp.eq.s32.totalorder %s15, 1
      %p30 = por %p28, %p29
      %p31 = scmp.ne.s32.totalorder %s24, %s27
      %p32 = scmp.eq.s32.totalorder %s15, 0
      %p33 = por %p31, %p32
      %p34 = scmp.ne.s32.totalorder %s24, %s27
      %p35 = scmp.eq.s32.totalorder %s20, 1
      %p36 = por %p34, %p35
      %p38 = scmp.ne.s32.totalorder %s27, %s37
      %p39 = scmp.eq.s32.totalorder %s20, 0
      %p40 = por %p38, %p39
      %p41 = scmp.lt.s32.totalorder %s15, 2
      // Predicated region
      $region9: #{tpu_custom_call.1} parent=5 // pred_check
        %p42 = pneg %p41
      $region10: #{tpu_custom_call.1} parent=5 // pred_check_branch
        %44 = sbr.rel (%p42) target = $region12
      $region11: #{tpu_custom_call.1} parent=5 // pred_region
        %p45 = pneg %p33
        %p46 = pneg %p30
        %s47 = sand.u32 %s24, 1
        %s48 = scalar_lea.sflag [#allocation6], %s47
        %s49 = sand.u32 %s24, 1
        %s50 = smul.addr %s49, 64
        %s51 = scalar_lea.vmem [#allocation5], %s50
        %s52 = smul.u32 8, %s15
        %s53 = smul.u32 %s15, 64
        %p54 = scmp.lt.s32.totalorder %s53, 127
        %s55 = scalar_select %p54, %s53, 127
        %s56 = sld [smem:[#allocation4 + %s55]]
        %p57 = scmp.gt.s32.totalorder %s56, 0
        %s58 = scalar_select %p57, %s56, 0
        %p59 = scmp.lt.s32.totalorder %s58, 511
        %s60 = scalar_select %p59, %s58, 511
        %s61 = smul.addr %s60, 16
        %s62 = scalar_lea.hbm %s1, %s61
        // Predicated region
        $region13: #{tpu_custom_call.1} parent=11 // pred_check
          _
        $region14: #{tpu_custom_call.1} parent=11 // pred_check_branch
          %64 = sbr.rel target = $region16
        $region15: #{tpu_custom_call.1} parent=11 // pred_region
          %65 = sst [smem:[#allocation9]] [#allocation8]
          %66 = sst [smem:[#allocation10]] [#allocation7]
        $region16: #{tpu_custom_call.1} parent=11 // pred_fallthru
          _
        %68 = shalt.err (0)
        %s70 = sshll.u32 %s51, 4
        %s71 = int_to_ptr.vmem [resolvable:$true] %s70
        %73 = dma.hbm_to_vmem [thread:$0]  %s62, 16, %s71, [#allocation2]
        %s74 = sadd.s32 %s53, 1
        %p75 = scmp.lt.s32.totalorder %s74, 127
        %s76 = scalar_select %p75, %s74, 127
        %s77 = sld [smem:[#allocation4 + %s76]]
        %p78 = scmp.gt.s32.totalorder %s77, 0
        %s79 = scalar_select %p78, %s77, 0
        %p80 = scmp.lt.s32.totalorder %s79, 511
        %s81 = scalar_select %p80, %s79, 511
        %s82 = smul.addr %s81, 16
        %s83 = scalar_lea.hbm %s1, %s82
        %s84 = scalar_lea.vmem %s51, 1 [#allocation5]
        %s85 = scalar_lea.sflag [#allocation2], 1
        // Predicated region
        $region17: #{tpu_custom_call.1} parent=11 // pred_check
          _
        $region18: #{tpu_custom_call.1} parent=11 // pred_check_branch
          %87 = sbr.rel target = $region20
        $region19: #{tpu_custom_call.1} parent=11 // pred_region
          %88 = sst [smem:[#allocation9]] [#allocation12]
          %89 = sst [smem:[#allocation10]] [#allocation11]
        $region20: #{tpu_custom_call.1} parent=11 // pred_fallthru
          _
        %91 = shalt.err (0)
        %s93 = sshll.u32 %s84, 4
        %s94 = int_to_ptr.vmem [resolvable:$true] %s93
        %96 = dma.hbm_to_vmem [thread:$0]  %s83, 16, %s94, %s85
        %s97 = sadd.s32 %s53, 2
        %p98 = scmp.lt.s32.totalorder %s97, 127
        %s99 = scalar_select %p98, %s97, 127
        %s100 = sld [smem:[#allocation4 + %s99]]
        %p101 = scmp.gt.s32.totalorder %s100, 0
        %s102 = scalar_select %p101, %s100, 0
        %p103 = scmp.lt.s32.totalorder %s102, 511
        %s104 = scalar_select %p103, %s102, 511
        %s105 = smul.addr %s104, 16
        %s106 = scalar_lea.hbm %s1, %s105
        %s107 = scalar_lea.vmem %s51, 2 [#allocation5]
        %s108 = scalar_lea.sflag [#allocation2], 2
        // Predicated region
        $region21: #{tpu_custom_call.1} parent=11 // pred_check
          _
        $region22: #{tpu_custom_call.1} parent=11 // pred_check_branch
          %110 = sbr.rel target = $region24
        $region23: #{tpu_custom_call.1} parent=11 // pred_region
          %111 = sst [smem:[#allocation9]] [#allocation14]
          %112 = sst [smem:[#allocation10]] [#allocation13]
        $region24: #{tpu_custom_call.1} parent=11 // pred_fallthru
          _
        %114 = shalt.err (0)
        %s116 = sshll.u32 %s107, 4
        %s117 = int_to_ptr.vmem [resolvable:$true] %s116
        %119 = dma.hbm_to_vmem [thread:$0]  %s106, 16, %s117, %s108
        %s120 = sadd.s32 %s53, 3
        %p121 = scmp.lt.s32.totalorder %s120, 127
        %s122 = scalar_select %p121, %s120, 127
        %s123 = sld [smem:[#allocation4 + %s122]]
        %p124 = scmp.gt.s32.totalorder %s123, 0
        %s125 = scalar_select %p124, %s123, 0
        %p126 = scmp.lt.s32.totalorder %s125, 511
        %s127 = scalar_select %p126, %s125, 511
        %s128 = smul.addr %s127, 16
        %s129 = scalar_lea.hbm %s1, %s128
        %s130 = scalar_lea.vmem %s51, 3 [#allocation5]
        %s131 = scalar_lea.sflag [#allocation2], 3
        // Predicated region
        $region25: #{tpu_custom_call.1} parent=11 // pred_check
          _
        $region26: #{tpu_custom_call.1} parent=11 // pred_check_branch
          %133 = sbr.rel target = $region28
        $region27: #{tpu_custom_call.1} parent=11 // pred_region
          %134 = sst [smem:[#allocation9]] [#allocation16]
          %135 = sst [smem:[#allocation10]] [#allocation15]
        $region28: #{tpu_custom_call.1} parent=11 // pred_fallthru
          _
        %137 = shalt.err (0)
        %s139 = sshll.u32 %s130, 4
        %s140 = int_to_ptr.vmem [resolvable:$true] %s139
        %142 = dma.hbm_to_vmem [thread:$0]  %s129, 16, %s140, %s131
        %s143 = sadd.s32 %s53, 4
        %p144 = scmp.lt.s32.totalorder %s143, 127
        %s145 = scalar_select %p144, %s143, 127
        %s146 = sld [smem:[#allocation4 + %s145]]
        %p147 = scmp.gt.s32.totalorder %s146, 0
        %s148 = scalar_select %p147, %s146, 0
        %p149 = scmp.lt.s32.totalorder %s148, 511
        %s150 = scalar_select %p149, %s148, 511
        %s151 = smul.addr %s150, 16
        %s152 = scalar_lea.hbm %s1, %s151
        %s153 = scalar_lea.vmem %s51, 4 [#allocation5]
        %s154 = scalar_lea.sflag [#allocation2], 4
        // Predicated region
        $region29: #{tpu_custom_call.1} parent=11 // pred_check
          _
        $region30: #{tpu_custom_call.1} parent=11 // pred_check_branch
          %156 = sbr.rel target = $region32
        $region31: #{tpu_custom_call.1} parent=11 // pred_region
          %157 = sst [smem:[#allocation9]] [#allocation18]
          %158 = sst [smem:[#allocation10]] [#allocation17]
        $region32: #{tpu_custom_call.1} parent=11 // pred_fallthru
          _
        %160 = shalt.err (0)
        %s162 = sshll.u32 %s153, 4
        %s163 = int_to_ptr.vmem [resolvable:$true] %s162
        %165 = dma.hbm_to_vmem [thread:$0]  %s152, 16, %s163, %s154
        %s166 = sadd.s32 %s53, 5
        %p167 = scmp.lt.s32.totalorder %s166, 127
        %s168 = scalar_select %p167, %s166, 127
        %s169 = sld [smem:[#allocation4 + %s168]]
        %p170 = scmp.gt.s32.totalorder %s169, 0
        %s171 = scalar_select %p170, %s169, 0
        %p172 = scmp.lt.s32.totalorder %s171, 511
        %s173 = scalar_select %p172, %s171, 511
        %s174 = smul.addr %s173, 16
        %s175 = scalar_lea.hbm %s1, %s174
        %s176 = scalar_lea.vmem %s51, 5 [#allocation5]
        %s177 = scalar_lea.sflag [#allocation2], 5
        // Predicated region
        $region33: #{tpu_custom_call.1} parent=11 // pred_check
          _
        $region34: #{tpu_custom_call.1} parent=11 // pred_check_branch
          %179 = sbr.rel target = $region36
        $region35: #{tpu_custom_call.1} parent=11 // pred_region
          %180 = sst [smem:[#allocation9]] [#allocation20]
          %181 = sst [smem:[#allocation10]] [#allocation19]
        $region36: #{tpu_custom_call.1} parent=11 // pred_fallthru
          _
        %183 = shalt.err (0)
        %s185 = sshll.u32 %s176, 4
        %s186 = int_to_ptr.vmem [resolvable:$true] %s185
        %188 = dma.hbm_to_vmem [thread:$0]  %s175, 16, %s186, %s177
        %s189 = sadd.s32 %s53, 6
        %p190 = scmp.lt.s32.totalorder %s189, 127
        %s191 = scalar_select %p190, %s189, 127
        %s192 = sld [smem:[#allocation4 + %s191]]
        %p193 = scmp.gt.s32.totalorder %s192, 0
        %s194 = scalar_select %p193, %s192, 0
        %p195 = scmp.lt.s32.totalorder %s194, 511
        %s196 = scalar_select %p195, %s194, 511
        %s197 = smul.addr %s196, 16
        %s198 = scalar_lea.hbm %s1, %s197
        %s199 = scalar_lea.vmem %s51, 6 [#allocation5]
        %s200 = scalar_lea.sflag [#allocation2], 6
        // Predicated region
        $region37: #{tpu_custom_call.1} parent=11 // pred_check
          _
        $region38: #{tpu_custom_call.1} parent=11 // pred_check_branch
          %202 = sbr.rel target = $region40
        $region39: #{tpu_custom_call.1} parent=11 // pred_region
          %203 = sst [smem:[#allocation9]] [#allocation22]
          %204 = sst [smem:[#allocation10]] [#allocation21]
        $region40: #{tpu_custom_call.1} parent=11 // pred_fallthru
          _
        %206 = shalt.err (0)
        %s208 = sshll.u32 %s199, 4
        %s209 = int_to_ptr.vmem [resolvable:$true] %s208
        %211 = dma.hbm_to_vmem [thread:$0]  %s198, 16, %s209, %s200
        %s212 = sadd.s32 %s53, 7
        %p213 = scmp.lt.s32.totalorder %s212, 127
        %s214 = scalar_select %p213, %s212, 127
        %s215 = sld [smem:[#allocation4 + %s214]]
        %p216 = scmp.gt.s32.totalorder %s215, 0
        %s217 = scalar_select %p216, %s215, 0
        %p218 = scmp.lt.s32.totalorder %s217, 511
        %s219 = scalar_select %p218, %s217, 511
        %s220 = smul.addr %s219, 16
        %s221 = scalar_lea.hbm %s1, %s220
        %s222 = scalar_lea.vmem %s51, 7 [#allocation5]
        %s223 = scalar_lea.sflag [#allocation2], 7
        // Predicated region
        $region41: #{tpu_custom_call.1} parent=11 // pred_check
          _
        $region42: #{tpu_custom_call.1} parent=11 // pred_check_branch
          %225 = sbr.rel target = $region44
        $region43: #{tpu_custom_call.1} parent=11 // pred_region
          %226 = sst [smem:[#allocation9]] [#allocation24]
          %227 = sst [smem:[#allocation10]] [#allocation23]
        $region44: #{tpu_custom_call.1} parent=11 // pred_fallthru
          _
        %229 = shalt.err (0)
        %s231 = sshll.u32 %s222, 4
        %s232 = int_to_ptr.vmem [resolvable:$true] %s231
        %234 = dma.hbm_to_vmem [thread:$0]  %s221, 16, %s232, %s223
        %s235 = sadd.s32 %s53, 8
        %p236 = scmp.lt.s32.totalorder %s235, 127
        %s237 = scalar_select %p236, %s235, 127
        %s238 = sld [smem:[#allocation4 + %s237]]
        %p239 = scmp.gt.s32.totalorder %s238, 0
        %s240 = scalar_select %p239, %s238, 0
        %p241 = scmp.lt.s32.totalorder %s240, 511
        %s242 = scalar_select %p241, %s240, 511
        %s243 = smul.addr %s242, 16
        %s244 = scalar_lea.hbm %s1, %s243
        %s245 = scalar_lea.vmem %s51, 8 [#allocation5]
        %s246 = scalar_lea.sflag [#allocation2], 8
        // Predicated region
        $region45: #{tpu_custom_call.1} parent=11 // pred_check
          _
        $region46: #{tpu_custom_call.1} parent=11 // pred_check_branch
          %248 = sbr.rel target = $region48
        $region47: #{tpu_custom_call.1} parent=11 // pred_region
          %249 = sst [smem:[#allocation9]] [#allocation26]
          %250 = sst [smem:[#allocation10]] [#allocation25]
        $region48: #{tpu_custom_call.1} parent=11 // pred_fallthru
          _
        %252 = shalt.err (0)
        %s254 = sshll.u32 %s245, 4
        %s255 = int_to_ptr.vmem [resolvable:$true] %s254
        %257 = dma.hbm_to_vmem [thread:$0]  %s244, 16, %s255, %s246
        %s258 = sadd.s32 %s53, 9
        %p259 = scmp.lt.s32.totalorder %s258, 127
        %s260 = scalar_select %p259, %s258, 127
        %s261 = sld [smem:[#allocation4 + %s260]]
        %p262 = scmp.gt.s32.totalorder %s261, 0
        %s263 = scalar_select %p262, %s261, 0
        %p264 = scmp.lt.s32.totalorder %s263, 511
        %s265 = scalar_select %p264, %s263, 511
        %s266 = smul.addr %s265, 16
        %s267 = scalar_lea.hbm %s1, %s266
        %s268 = scalar_lea.vmem %s51, 9 [#allocation5]
        %s269 = scalar_lea.sflag [#allocation2], 9
        // Predicated region
        $region49: #{tpu_custom_call.1} parent=11 // pred_check
          _
        $region50: #{tpu_custom_call.1} parent=11 // pred_check_branch
          %271 = sbr.rel target = $region52
        $region51: #{tpu_custom_call.1} parent=11 // pred_region
          %272 = sst [smem:[#allocation9]] [#allocation28]
          %273 = sst [smem:[#allocation10]] [#allocation27]
        $region52: #{tpu_custom_call.1} parent=11 // pred_fallthru
          _
        %275 = shalt.err (0)
        %s277 = sshll.u32 %s268, 4
        %s278 = int_to_ptr.vmem [resolvable:$true] %s277
        %280 = dma.hbm_to_vmem [thread:$0]  %s267, 16, %s278, %s269
        %s281 = sadd.s32 %s53, 10
        %p282 = scmp.lt.s32.totalorder %s281, 127
        %s283 = scalar_select %p282, %s281, 127
        %s284 = sld [smem:[#allocation4 + %s283]]
        %p285 = scmp.gt.s32.totalorder %s284, 0
        %s286 = scalar_select %p285, %s284, 0
        %p287 = scmp.lt.s32.totalorder %s286, 511
        %s288 = scalar_select %p287, %s286, 511
        %s289 = smul.addr %s288, 16
        %s290 = scalar_lea.hbm %s1, %s289
        %s291 = scalar_lea.vmem %s51, 10 [#allocation5]
        %s292 = scalar_lea.sflag [#allocation2], 10
        // Predicated region
        $region53: #{tpu_custom_call.1} parent=11 // pred_check
          _
        $region54: #{tpu_custom_call.1} parent=11 // pred_check_branch
          %294 = sbr.rel target = $region56
        $region55: #{tpu_custom_call.1} parent=11 // pred_region
          %295 = sst [smem:[#allocation9]] [#allocation30]
          %296 = sst [smem:[#allocation10]] [#allocation29]
        $region56: #{tpu_custom_call.1} parent=11 // pred_fallthru
          _
        %298 = shalt.err (0)
        %s300 = sshll.u32 %s291, 4
        %s301 = int_to_ptr.vmem [resolvable:$true] %s300
        %303 = dma.hbm_to_vmem [thread:$0]  %s290, 16, %s301, %s292
        %s304 = sadd.s32 %s53, 11
        %p305 = scmp.lt.s32.totalorder %s304, 127
        %s306 = scalar_select %p305, %s304, 127
        %s307 = sld [smem:[#allocation4 + %s306]]
        %p308 = scmp.gt.s32.totalorder %s307, 0
        %s309 = scalar_select %p308, %s307, 0
        %p310 = scmp.lt.s32.totalorder %s309, 511
        %s311 = scalar_select %p310, %s309, 511
        %s312 = smul.addr %s311, 16
        %s313 = scalar_lea.hbm %s1, %s312
        %s314 = scalar_lea.vmem %s51, 11 [#allocation5]
        %s315 = scalar_lea.sflag [#allocation2], 11
        // Predicated region
        $region57: #{tpu_custom_call.1} parent=11 // pred_check
          _
        $region58: #{tpu_custom_call.1} parent=11 // pred_check_branch
          %317 = sbr.rel target = $region60
        $region59: #{tpu_custom_call.1} parent=11 // pred_region
          %318 = sst [smem:[#allocation9]] [#allocation32]
          %319 = sst [smem:[#allocation10]] [#allocation31]
        $region60: #{tpu_custom_call.1} parent=11 // pred_fallthru
          _
        %321 = shalt.err (0)
        %s323 = sshll.u32 %s314, 4
        %s324 = int_to_ptr.vmem [resolvable:$true] %s323
        %326 = dma.hbm_to_vmem [thread:$0]  %s313, 16, %s324, %s315
        %s327 = sadd.s32 %s53, 12
        %p328 = scmp.lt.s32.totalorder %s327, 127
        %s329 = scalar_select %p328, %s327, 127
        %s330 = sld [smem:[#allocation4 + %s329]]
        %p331 = scmp.gt.s32.totalorder %s330, 0
        %s332 = scalar_select %p331, %s330, 0
        %p333 = scmp.lt.s32.totalorder %s332, 511
        %s334 = scalar_select %p333, %s332, 511
        %s335 = smul.addr %s334, 16
        %s336 = scalar_lea.hbm %s1, %s335
        %s337 = scalar_lea.vmem %s51, 12 [#allocation5]
        %s338 = scalar_lea.sflag [#allocation2], 12
        // Predicated region
        $region61: #{tpu_custom_call.1} parent=11 // pred_check
          _
        $region62: #{tpu_custom_call.1} parent=11 // pred_check_branch
          %340 = sbr.rel target = $region64
        $region63: #{tpu_custom_call.1} parent=11 // pred_region
          %341 = sst [smem:[#allocation9]] [#allocation34]
          %342 = sst [smem:[#allocation10]] [#allocation33]
        $region64: #{tpu_custom_call.1} parent=11 // pred_fallthru
          _
        %344 = shalt.err (0)
        %s346 = sshll.u32 %s337, 4
        %s347 = int_to_ptr.vmem [resolvable:$true] %s346
        %349 = dma.hbm_to_vmem [thread:$0]  %s336, 16, %s347, %s338
        %s350 = sadd.s32 %s53, 13
        %p351 = scmp.lt.s32.totalorder %s350, 127
        %s352 = scalar_select %p351, %s350, 127
        %s353 = sld [smem:[#allocation4 + %s352]]
        %p354 = scmp.gt.s32.totalorder %s353, 0
        %s355 = scalar_select %p354, %s353, 0
        %p356 = scmp.lt.s32.totalorder %s355, 511
        %s357 = scalar_select %p356, %s355, 511
        %s358 = smul.addr %s357, 16
        %s359 = scalar_lea.hbm %s1, %s358
        %s360 = scalar_lea.vmem %s51, 13 [#allocation5]
        %s361 = scalar_lea.sflag [#allocation2], 13
        // Predicated region
        $region65: #{tpu_custom_call.1} parent=11 // pred_check
          _
        $region66: #{tpu_custom_call.1} parent=11 // pred_check_branch
          %363 = sbr.rel target = $region68
        $region67: #{tpu_custom_call.1} parent=11 // pred_region
          %364 = sst [smem:[#allocation9]] [#allocation36]
          %365 = sst [smem:[#allocation10]] [#allocation35]
        $region68: #{tpu_custom_call.1} parent=11 // pred_fallthru
          _
        %367 = shalt.err (0)
        %s369 = sshll.u32 %s360, 4
        %s370 = int_to_ptr.vmem [resolvable:$true] %s369
        %372 = dma.hbm_to_vmem [thread:$0]  %s359, 16, %s370, %s361
        %s373 = sadd.s32 %s53, 14
        %p374 = scmp.lt.s32.totalorder %s373, 127
        %s375 = scalar_select %p374, %s373, 127
        %s376 = sld [smem:[#allocation4 + %s375]]
        %p377 = scmp.gt.s32.totalorder %s376, 0
        %s378 = scalar_select %p377, %s376, 0
        %p379 = scmp.lt.s32.totalorder %s378, 511
        %s380 = scalar_select %p379, %s378, 511
        %s381 = smul.addr %s380, 16
        %s382 = scalar_lea.hbm %s1, %s381
        %s383 = scalar_lea.vmem %s51, 14 [#allocation5]
        %s384 = scalar_lea.sflag [#allocation2], 14
        // Predicated region
        $region69: #{tpu_custom_call.1} parent=11 // pred_check
          _
        $region70: #{tpu_custom_call.1} parent=11 // pred_check_branch
          %386 = sbr.rel target = $region72
        $region71: #{tpu_custom_call.1} parent=11 // pred_region
          %387 = sst [smem:[#allocation9]] [#allocation38]
          %388 = sst [smem:[#allocation10]] [#allocation37]
        $region72: #{tpu_custom_call.1} parent=11 // pred_fallthru
          _
        %390 = shalt.err (0)
        %s392 = sshll.u32 %s383, 4
        %s393 = int_to_ptr.vmem [resolvable:$true] %s392
        %395 = dma.hbm_to_vmem [thread:$0]  %s382, 16, %s393, %s384
        %s396 = sadd.s32 %s53, 15
        %p397 = scmp.lt.s32.totalorder %s396, 127
        %s398 = scalar_select %p397, %s396, 127
        %s399 = sld [smem:[#allocation4 + %s398]]
        %p400 = scmp.gt.s32.totalorder %s399, 0
        %s401 = scalar_select %p400, %s399, 0
        %p402 = scmp.lt.s32.totalorder %s401, 511
        %s403 = scalar_select %p402, %s401, 511
        %s404 = smul.addr %s403, 16
        %s405 = scalar_lea.hbm %s1, %s404
        %s406 = scalar_lea.vmem %s51, 15 [#allocation5]
        %s407 = scalar_lea.sflag [#allocation2], 15
        // Predicated region
        $region73: #{tpu_custom_call.1} parent=11 // pred_check
          _
        $region74: #{tpu_custom_call.1} parent=11 // pred_check_branch
          %409 = sbr.rel target = $region76
        $region75: #{tpu_custom_call.1} parent=11 // pred_region
          %410 = sst [smem:[#allocation9]] [#allocation40]
          %411 = sst [smem:[#allocation10]] [#allocation39]
        $region76: #{tpu_custom_call.1} parent=11 // pred_fallthru
          _
        %413 = shalt.err (0)
        %s415 = sshll.u32 %s406, 4
        %s416 = int_to_ptr.vmem [resolvable:$true] %s415
        %418 = dma.hbm_to_vmem [thread:$0]  %s405, 16, %s416, %s407
        %s419 = sadd.s32 %s53, 16
        %p420 = scmp.lt.s32.totalorder %s419, 127
        %s421 = scalar_select %p420, %s419, 127
        %s422 = sld [smem:[#allocation4 + %s421]]
        %p423 = scmp.gt.s32.totalorder %s422, 0
        %s424 = scalar_select %p423, %s422, 0
        %p425 = scmp.lt.s32.totalorder %s424, 511
        %s426 = scalar_select %p425, %s424, 511
        %s427 = smul.addr %s426, 16
        %s428 = scalar_lea.hbm %s1, %s427
        %s429 = scalar_lea.vmem %s51, 16 [#allocation5]
        %s430 = scalar_lea.sflag [#allocation2], 16
        // Predicated region
        $region77: #{tpu_custom_call.1} parent=11 // pred_check
          _
        $region78: #{tpu_custom_call.1} parent=11 // pred_check_branch
          %432 = sbr.rel target = $region80
        $region79: #{tpu_custom_call.1} parent=11 // pred_region
          %433 = sst [smem:[#allocation9]] [#allocation42]
          %434 = sst [smem:[#allocation10]] [#allocation41]
        $region80: #{tpu_custom_call.1} parent=11 // pred_fallthru
          _
        %436 = shalt.err (0)
        %s438 = sshll.u32 %s429, 4
        %s439 = int_to_ptr.vmem [resolvable:$true] %s438
        %441 = dma.hbm_to_vmem [thread:$0]  %s428, 16, %s439, %s430
        %s442 = sadd.s32 %s53, 17
        %p443 = scmp.lt.s32.totalorder %s442, 127
        %s444 = scalar_select %p443, %s442, 127
        %s445 = sld [smem:[#allocation4 + %s444]]
        %p446 = scmp.gt.s32.totalorder %s445, 0
        %s447 = scalar_select %p446, %s445, 0
        %p448 = scmp.lt.s32.totalorder %s447, 511
        %s449 = scalar_select %p448, %s447, 511
        %s450 = smul.addr %s449, 16
        %s451 = scalar_lea.hbm %s1, %s450
        %s452 = scalar_lea.vmem %s51, 17 [#allocation5]
        %s453 = scalar_lea.sflag [#allocation2], 17
        // Predicated region
        $region81: #{tpu_custom_call.1} parent=11 // pred_check
          _
        $region82: #{tpu_custom_call.1} parent=11 // pred_check_branch
          %455 = sbr.rel target = $region84
        $region83: #{tpu_custom_call.1} parent=11 // pred_region
          %456 = sst [smem:[#allocation9]] [#allocation44]
          %457 = sst [smem:[#allocation10]] [#allocation43]
        $region84: #{tpu_custom_call.1} parent=11 // pred_fallthru
          _
        %459 = shalt.err (0)
        %s461 = sshll.u32 %s452, 4
        %s462 = int_to_ptr.vmem [resolvable:$true] %s461
        %464 = dma.hbm_to_vmem [thread:$0]  %s451, 16, %s462, %s453
        %s465 = sadd.s32 %s53, 18
        %p466 = scmp.lt.s32.totalorder %s465, 127
        %s467 = scalar_select %p466, %s465, 127
        %s468 = sld [smem:[#allocation4 + %s467]]
        %p469 = scmp.gt.s32.totalorder %s468, 0
        %s470 = scalar_select %p469, %s468, 0
        %p471 = scmp.lt.s32.totalorder %s470, 511
        %s472 = scalar_select %p471, %s470, 511
        %s473 = smul.addr %s472, 16
        %s474 = scalar_lea.hbm %s1, %s473
        %s475 = scalar_lea.vmem %s51, 18 [#allocation5]
        %s476 = scalar_lea.sflag [#allocation2], 18
        // Predicated region
        $region85: #{tpu_custom_call.1} parent=11 // pred_check
          _
        $region86: #{tpu_custom_call.1} parent=11 // pred_check_branch
          %478 = sbr.rel target = $region88
        $region87: #{tpu_custom_call.1} parent=11 // pred_region
          %479 = sst [smem:[#allocation9]] [#allocation46]
          %480 = sst [smem:[#allocation10]] [#allocation45]
        $region88: #{tpu_custom_call.1} parent=11 // pred_fallthru
          _
        %482 = shalt.err (0)
        %s484 = sshll.u32 %s475, 4
        %s485 = int_to_ptr.vmem [resolvable:$true] %s484
        %487 = dma.hbm_to_vmem [thread:$0]  %s474, 16, %s485, %s476
        %s488 = sadd.s32 %s53, 19
        %p489 = scmp.lt.s32.totalorder %s488, 127
        %s490 = scalar_select %p489, %s488, 127
        %s491 = sld [smem:[#allocation4 + %s490]]
        %p492 = scmp.gt.s32.totalorder %s491, 0
        %s493 = scalar_select %p492, %s491, 0
        %p494 = scmp.lt.s32.totalorder %s493, 511
        %s495 = scalar_select %p494, %s493, 511
        %s496 = smul.addr %s495, 16
        %s497 = scalar_lea.hbm %s1, %s496
        %s498 = scalar_lea.vmem %s51, 19 [#allocation5]
        %s499 = scalar_lea.sflag [#allocation2], 19
        // Predicated region
        $region89: #{tpu_custom_call.1} parent=11 // pred_check
          _
        $region90: #{tpu_custom_call.1} parent=11 // pred_check_branch
          %501 = sbr.rel target = $region92
        $region91: #{tpu_custom_call.1} parent=11 // pred_region
          %502 = sst [smem:[#allocation9]] [#allocation48]
          %503 = sst [smem:[#allocation10]] [#allocation47]
        $region92: #{tpu_custom_call.1} parent=11 // pred_fallthru
          _
        %505 = shalt.err (0)
        %s507 = sshll.u32 %s498, 4
        %s508 = int_to_ptr.vmem [resolvable:$true] %s507
        %510 = dma.hbm_to_vmem [thread:$0]  %s497, 16, %s508, %s499
        %s511 = sadd.s32 %s53, 20
        %p512 = scmp.lt.s32.totalorder %s511, 127
        %s513 = scalar_select %p512, %s511, 127
        %s514 = sld [smem:[#allocation4 + %s513]]
        %p515 = scmp.gt.s32.totalorder %s514, 0
        %s516 = scalar_select %p515, %s514, 0
        %p517 = scmp.lt.s32.totalorder %s516, 511
        %s518 = scalar_select %p517, %s516, 511
        %s519 = smul.addr %s518, 16
        %s520 = scalar_lea.hbm %s1, %s519
        %s521 = scalar_lea.vmem %s51, 20 [#allocation5]
        %s522 = scalar_lea.sflag [#allocation2], 20
        // Predicated region
        $region93: #{tpu_custom_call.1} parent=11 // pred_check
          _
        $region94: #{tpu_custom_call.1} parent=11 // pred_check_branch
          %524 = sbr.rel target = $region96
        $region95: #{tpu_custom_call.1} parent=11 // pred_region
          %525 = sst [smem:[#allocation9]] [#allocation50]
          %526 = sst [smem:[#allocation10]] [#allocation49]
        $region96: #{tpu_custom_call.1} parent=11 // pred_fallthru
          _
        %528 = shalt.err (0)
        %s530 = sshll.u32 %s521, 4
        %s531 = int_to_ptr.vmem [resolvable:$true] %s530
        %533 = dma.hbm_to_vmem [thread:$0]  %s520, 16, %s531, %s522
        %s534 = sadd.s32 %s53, 21
        %p535 = scmp.lt.s32.totalorder %s534, 127
        %s536 = scalar_select %p535, %s534, 127
        %s537 = sld [smem:[#allocation4 + %s536]]
        %p538 = scmp.gt.s32.totalorder %s537, 0
        %s539 = scalar_select %p538, %s537, 0
        %p540 = scmp.lt.s32.totalorder %s539, 511
        %s541 = scalar_select %p540, %s539, 511
        %s542 = smul.addr %s541, 16
        %s543 = scalar_lea.hbm %s1, %s542
        %s544 = scalar_lea.vmem %s51, 21 [#allocation5]
        %s545 = scalar_lea.sflag [#allocation2], 21
        // Predicated region
        $region97: #{tpu_custom_call.1} parent=11 // pred_check
          _
        $region98: #{tpu_custom_call.1} parent=11 // pred_check_branch
          %547 = sbr.rel target = $region100
        $region99: #{tpu_custom_call.1} parent=11 // pred_region
          %548 = sst [smem:[#allocation9]] [#allocation52]
          %549 = sst [smem:[#allocation10]] [#allocation51]
        $region100: #{tpu_custom_call.1} parent=11 // pred_fallthru
          _
        %551 = shalt.err (0)
        %s553 = sshll.u32 %s544, 4
        %s554 = int_to_ptr.vmem [resolvable:$true] %s553
        %556 = dma.hbm_to_vmem [thread:$0]  %s543, 16, %s554, %s545
        %s557 = sadd.s32 %s53, 22
        %p558 = scmp.lt.s32.totalorder %s557, 127
        %s559 = scalar_select %p558, %s557, 127
        %s560 = sld [smem:[#allocation4 + %s559]]
        %p561 = scmp.gt.s32.totalorder %s560, 0
        %s562 = scalar_select %p561, %s560, 0
        %p563 = scmp.lt.s32.totalorder %s562, 511
        %s564 = scalar_select %p563, %s562, 511
        %s565 = smul.addr %s564, 16
        %s566 = scalar_lea.hbm %s1, %s565
        %s567 = scalar_lea.vmem %s51, 22 [#allocation5]
        %s568 = scalar_lea.sflag [#allocation2], 22
        // Predicated region
        $region101: #{tpu_custom_call.1} parent=11 // pred_check
          _
        $region102: #{tpu_custom_call.1} parent=11 // pred_check_branch
          %570 = sbr.rel target = $region104
        $region103: #{tpu_custom_call.1} parent=11 // pred_region
          %571 = sst [smem:[#allocation9]] [#allocation54]
          %572 = sst [smem:[#allocation10]] [#allocation53]
        $region104: #{tpu_custom_call.1} parent=11 // pred_fallthru
          _
        %574 = shalt.err (0)
        %s576 = sshll.u32 %s567, 4
        %s577 = int_to_ptr.vmem [resolvable:$true] %s576
        %579 = dma.hbm_to_vmem [thread:$0]  %s566, 16, %s577, %s568
        %s580 = sadd.s32 %s53, 23
        %p581 = scmp.lt.s32.totalorder %s580, 127
        %s582 = scalar_select %p581, %s580, 127
        %s583 = sld [smem:[#allocation4 + %s582]]
        %p584 = scmp.gt.s32.totalorder %s583, 0
        %s585 = scalar_select %p584, %s583, 0
        %p586 = scmp.lt.s32.totalorder %s585, 511
        %s587 = scalar_select %p586, %s585, 511
        %s588 = smul.addr %s587, 16
        %s589 = scalar_lea.hbm %s1, %s588
        %s590 = scalar_lea.vmem %s51, 23 [#allocation5]
        %s591 = scalar_lea.sflag [#allocation2], 23
        // Predicated region
        $region105: #{tpu_custom_call.1} parent=11 // pred_check
          _
        $region106: #{tpu_custom_call.1} parent=11 // pred_check_branch
          %593 = sbr.rel target = $region108
        $region107: #{tpu_custom_call.1} parent=11 // pred_region
          %594 = sst [smem:[#allocation9]] [#allocation56]
          %595 = sst [smem:[#allocation10]] [#allocation55]
        $region108: #{tpu_custom_call.1} parent=11 // pred_fallthru
          _
        %597 = shalt.err (0)
        %s599 = sshll.u32 %s590, 4
        %s600 = int_to_ptr.vmem [resolvable:$true] %s599
        %602 = dma.hbm_to_vmem [thread:$0]  %s589, 16, %s600, %s591
        %s603 = sadd.s32 %s53, 24
        %p604 = scmp.lt.s32.totalorder %s603, 127
        %s605 = scalar_select %p604, %s603, 127
        %s606 = sld [smem:[#allocation4 + %s605]]
        %p607 = scmp.gt.s32.totalorder %s606, 0
        %s608 = scalar_select %p607, %s606, 0
        %p609 = scmp.lt.s32.totalorder %s608, 511
        %s610 = scalar_select %p609, %s608, 511
        %s611 = smul.addr %s610, 16
        %s612 = scalar_lea.hbm %s1, %s611
        %s613 = scalar_lea.vmem %s51, 24 [#allocation5]
        %s614 = scalar_lea.sflag [#allocation2], 24
        // Predicated region
        $region109: #{tpu_custom_call.1} parent=11 // pred_check
          _
        $region110: #{tpu_custom_call.1} parent=11 // pred_check_branch
          %616 = sbr.rel target = $region112
        $region111: #{tpu_custom_call.1} parent=11 // pred_region
          %617 = sst [smem:[#allocation9]] [#allocation58]
          %618 = sst [smem:[#allocation10]] [#allocation57]
        $region112: #{tpu_custom_call.1} parent=11 // pred_fallthru
          _
        %620 = shalt.err (0)
        %s622 = sshll.u32 %s613, 4
        %s623 = int_to_ptr.vmem [resolvable:$true] %s622
        %625 = dma.hbm_to_vmem [thread:$0]  %s612, 16, %s623, %s614
        %s626 = sadd.s32 %s53, 25
        %p627 = scmp.lt.s32.totalorder %s626, 127
        %s628 = scalar_select %p627, %s626, 127
        %s629 = sld [smem:[#allocation4 + %s628]]
        %p630 = scmp.gt.s32.totalorder %s629, 0
        %s631 = scalar_select %p630, %s629, 0
        %p632 = scmp.lt.s32.totalorder %s631, 511
        %s633 = scalar_select %p632, %s631, 511
        %s634 = smul.addr %s633, 16
        %s635 = scalar_lea.hbm %s1, %s634
        %s636 = scalar_lea.vmem %s51, 25 [#allocation5]
        %s637 = scalar_lea.sflag [#allocation2], 25
        // Predicated region
        $region113: #{tpu_custom_call.1} parent=11 // pred_check
          _
        $region114: #{tpu_custom_call.1} parent=11 // pred_check_branch
          %639 = sbr.rel target = $region116
        $region115: #{tpu_custom_call.1} parent=11 // pred_region
          %640 = sst [smem:[#allocation9]] [#allocation60]
          %641 = sst [smem:[#allocation10]] [#allocation59]
        $region116: #{tpu_custom_call.1} parent=11 // pred_fallthru
          _
        %643 = shalt.err (0)
        %s645 = sshll.u32 %s636, 4
        %s646 = int_to_ptr.vmem [resolvable:$true] %s645
        %648 = dma.hbm_to_vmem [thread:$0]  %s635, 16, %s646, %s637
        %s649 = sadd.s32 %s53, 26
        %p650 = scmp.lt.s32.totalorder %s649, 127
        %s651 = scalar_select %p650, %s649, 127
        %s652 = sld [smem:[#allocation4 + %s651]]
        %p653 = scmp.gt.s32.totalorder %s652, 0
        %s654 = scalar_select %p653, %s652, 0
        %p655 = scmp.lt.s32.totalorder %s654, 511
        %s656 = scalar_select %p655, %s654, 511
        %s657 = smul.addr %s656, 16
        %s658 = scalar_lea.hbm %s1, %s657
        %s659 = scalar_lea.vmem %s51, 26 [#allocation5]
        %s660 = scalar_lea.sflag [#allocation2], 26
        // Predicated region
        $region117: #{tpu_custom_call.1} parent=11 // pred_check
          _
        $region118: #{tpu_custom_call.1} parent=11 // pred_check_branch
          %662 = sbr.rel target = $region120
        $region119: #{tpu_custom_call.1} parent=11 // pred_region
          %663 = sst [smem:[#allocation9]] [#allocation62]
          %664 = sst [smem:[#allocation10]] [#allocation61]
        $region120: #{tpu_custom_call.1} parent=11 // pred_fallthru
          _
        %666 = shalt.err (0)
        %s668 = sshll.u32 %s659, 4
        %s669 = int_to_ptr.vmem [resolvable:$true] %s668
        %671 = dma.hbm_to_vmem [thread:$0]  %s658, 16, %s669, %s660
        %s672 = sadd.s32 %s53, 27
        %p673 = scmp.lt.s32.totalorder %s672, 127
        %s674 = scalar_select %p673, %s672, 127
        %s675 = sld [smem:[#allocation4 + %s674]]
        %p676 = scmp.gt.s32.totalorder %s675, 0
        %s677 = scalar_select %p676, %s675, 0
        %p678 = scmp.lt.s32.totalorder %s677, 511
        %s679 = scalar_select %p678, %s677, 511
        %s680 = smul.addr %s679, 16
        %s681 = scalar_lea.hbm %s1, %s680
        %s682 = scalar_lea.vmem %s51, 27 [#allocation5]
        %s683 = scalar_lea.sflag [#allocation2], 27
        // Predicated region
        $region121: #{tpu_custom_call.1} parent=11 // pred_check
          _
        $region122: #{tpu_custom_call.1} parent=11 // pred_check_branch
          %685 = sbr.rel target = $region124
        $region123: #{tpu_custom_call.1} parent=11 // pred_region
          %686 = sst [smem:[#allocation9]] [#allocation64]
          %687 = sst [smem:[#allocation10]] [#allocation63]
        $region124: #{tpu_custom_call.1} parent=11 // pred_fallthru
          _
        %689 = shalt.err (0)
        %s691 = sshll.u32 %s682, 4
        %s692 = int_to_ptr.vmem [resolvable:$true] %s691
        %694 = dma.hbm_to_vmem [thread:$0]  %s681, 16, %s692, %s683
        %s695 = sadd.s32 %s53, 28
        %p696 = scmp.lt.s32.totalorder %s695, 127
        %s697 = scalar_select %p696, %s695, 127
        %s698 = sld [smem:[#allocation4 + %s697]]
        %p699 = scmp.gt.s32.totalorder %s698, 0
        %s700 = scalar_select %p699, %s698, 0
        %p701 = scmp.lt.s32.totalorder %s700, 511
        %s702 = scalar_select %p701, %s700, 511
        %s703 = smul.addr %s702, 16
        %s704 = scalar_lea.hbm %s1, %s703
        %s705 = scalar_lea.vmem %s51, 28 [#allocation5]
        %s706 = scalar_lea.sflag [#allocation2], 28
        // Predicated region
        $region125: #{tpu_custom_call.1} parent=11 // pred_check
          _
        $region126: #{tpu_custom_call.1} parent=11 // pred_check_branch
          %708 = sbr.rel target = $region128
        $region127: #{tpu_custom_call.1} parent=11 // pred_region
          %709 = sst [smem:[#allocation9]] [#allocation66]
          %710 = sst [smem:[#allocation10]] [#allocation65]
        $region128: #{tpu_custom_call.1} parent=11 // pred_fallthru
          _
        %712 = shalt.err (0)
        %s714 = sshll.u32 %s705, 4
        %s715 = int_to_ptr.vmem [resolvable:$true] %s714
        %717 = dma.hbm_to_vmem [thread:$0]  %s704, 16, %s715, %s706
        %s718 = sadd.s32 %s53, 29
        %p719 = scmp.lt.s32.totalorder %s718, 127
        %s720 = scalar_select %p719, %s718, 127
        %s721 = sld [smem:[#allocation4 + %s720]]
        %p722 = scmp.gt.s32.totalorder %s721, 0
        %s723 = scalar_select %p722, %s721, 0
        %p724 = scmp.lt.s32.totalorder %s723, 511
        %s725 = scalar_select %p724, %s723, 511
        %s726 = smul.addr %s725, 16
        %s727 = scalar_lea.hbm %s1, %s726
        %s728 = scalar_lea.vmem %s51, 29 [#allocation5]
        %s729 = scalar_lea.sflag [#allocation2], 29
        // Predicated region
        $region129: #{tpu_custom_call.1} parent=11 // pred_check
          _
        $region130: #{tpu_custom_call.1} parent=11 // pred_check_branch
          %731 = sbr.rel target = $region132
        $region131: #{tpu_custom_call.1} parent=11 // pred_region
          %732 = sst [smem:[#allocation9]] [#allocation68]
          %733 = sst [smem:[#allocation10]] [#allocation67]
        $region132: #{tpu_custom_call.1} parent=11 // pred_fallthru
          _
        %735 = shalt.err (0)
        %s737 = sshll.u32 %s728, 4
        %s738 = int_to_ptr.vmem [resolvable:$true] %s737
        %740 = dma.hbm_to_vmem [thread:$0]  %s727, 16, %s738, %s729
        %s741 = sadd.s32 %s53, 30
        %p742 = scmp.lt.s32.totalorder %s741, 127
        %s743 = scalar_select %p742, %s741, 127
        %s744 = sld [smem:[#allocation4 + %s743]]
        %p745 = scmp.gt.s32.totalorder %s744, 0
        %s746 = scalar_select %p745, %s744, 0
        %p747 = scmp.lt.s32.totalorder %s746, 511
        %s748 = scalar_select %p747, %s746, 511
        %s749 = smul.addr %s748, 16
        %s750 = scalar_lea.hbm %s1, %s749
        %s751 = scalar_lea.vmem %s51, 30 [#allocation5]
        %s752 = scalar_lea.sflag [#allocation2], 30
        // Predicated region
        $region133: #{tpu_custom_call.1} parent=11 // pred_check
          _
        $region134: #{tpu_custom_call.1} parent=11 // pred_check_branch
          %754 = sbr.rel target = $region136
        $region135: #{tpu_custom_call.1} parent=11 // pred_region
          %755 = sst [smem:[#allocation9]] [#allocation70]
          %756 = sst [smem:[#allocation10]] [#allocation69]
        $region136: #{tpu_custom_call.1} parent=11 // pred_fallthru
          _
        %758 = shalt.err (0)
        %s760 = sshll.u32 %s751, 4
        %s761 = int_to_ptr.vmem [resolvable:$true] %s760
        %763 = dma.hbm_to_vmem [thread:$0]  %s750, 16, %s761, %s752
        %s764 = sadd.s32 %s53, 31
        %p765 = scmp.lt.s32.totalorder %s764, 127
        %s766 = scalar_select %p765, %s764, 127
        %s767 = sld [smem:[#allocation4 + %s766]]
        %p768 = scmp.gt.s32.totalorder %s767, 0
        %s769 = scalar_select %p768, %s767, 0
        %p770 = scmp.lt.s32.totalorder %s769, 511
        %s771 = scalar_select %p770, %s769, 511
        %s772 = smul.addr %s771, 16
        %s773 = scalar_lea.hbm %s1, %s772
        %s774 = scalar_lea.vmem %s51, 31 [#allocation5]
        %s775 = scalar_lea.sflag [#allocation2], 31
        // Predicated region
        $region137: #{tpu_custom_call.1} parent=11 // pred_check
          _
        $region138: #{tpu_custom_call.1} parent=11 // pred_check_branch
          %777 = sbr.rel target = $region140
        $region139: #{tpu_custom_call.1} parent=11 // pred_region
          %778 = sst [smem:[#allocation9]] [#allocation72]
          %779 = sst [smem:[#allocation10]] [#allocation71]
        $region140: #{tpu_custom_call.1} parent=11 // pred_fallthru
          _
        %781 = shalt.err (0)
        %s783 = sshll.u32 %s774, 4
        %s784 = int_to_ptr.vmem [resolvable:$true] %s783
        %786 = dma.hbm_to_vmem [thread:$0]  %s773, 16, %s784, %s775
        loop: start=0, step=1, limit=64
        $region141: #{tpu_custom_call.1} parent=11 // loop_pre_header
          _
        $region142: #{tpu_custom_call.1} parent=11 // loop_header
          %s788 = sphi 0, %s792
          %p789 = scmp.ge.s32.totalorder %s788, 64
        $region143: #{tpu_custom_call.1} parent=11 // loop_header_branch
          %791 = sbr.rel (%p789) target = $region147
        $region144: #{tpu_custom_call.1} parent=11 // loop_body
          %s793 = sadd.s32 0, %s788
          %s794 = sadd.s32 %s793, 32
          %s795 = sadd.s32 %s53, %s794
          %p796 = scmp.lt.s32.totalorder %s795, 127
          %s797 = scalar_select %p796, %s795, 127
          %s798 = sld [smem:[#allocation4 + %s797]]
          %p799 = scmp.gt.s32.totalorder %s798, 0
          %s800 = scalar_select %p799, %s798, 0
          %p801 = scmp.lt.s32.totalorder %s800, 511
          %s802 = scalar_select %p801, %s800, 511
          %p803 = scmp.lt.s32.totalorder %s793, 0
          %s804 = ssub.s32 0, %s793
          %s805 = scalar_select %p803, %s804, %s793
          %s806 = sand.u32 %s805, 31
          %s807 = ssub.s32 0, %s806
          %s808 = scalar_select %p803, %s807, %s806
          %p809 = scmp.ne.s32.totalorder %s808, 0
          %p810 = scmp.lt.s32.totalorder %s808, 0
          %p811 = pnand %p810, %p809
          %p812 = pneg %p811
          %s813 = sadd.s32 %s808, 32
          %s814 = scalar_select %p812, %s813, %s808
          %s815 = scalar_lea.sflag [#allocation2], %s814
          %817 = dma.done %s815, 16
          %p818 = scmp.lt.s32.totalorder %s794, 64
          // Predicated region
          $region148: #{tpu_custom_call.1} parent=144 // pred_check
            %p819 = pneg %p818
          $region149: #{tpu_custom_call.1} parent=144 // pred_check_branch
            %821 = sbr.rel (%p819) target = $region151
          $region150: #{tpu_custom_call.1} parent=144 // pred_region
            %p822 = scmp.lt.s32.totalorder %s794, 0
            %s823 = ssub.s32 0, %s794
            %s824 = scalar_select %p822, %s823, %s794
            %s825 = sand.u32 %s824, 31
            %s826 = ssub.s32 0, %s825
            %s827 = scalar_select %p822, %s826, %s825
            %p828 = scmp.ne.s32.totalorder %s827, 0
            %p829 = scmp.lt.s32.totalorder %s827, 0
            %p830 = pnand %p829, %p828
            %p831 = pneg %p830
            %s832 = sadd.s32 %s827, 32
            %s833 = scalar_select %p831, %s832, %s827
            %s834 = smul.addr %s802, 16
            %s835 = scalar_lea.hbm %s1, %s834
            %s836 = scalar_lea.vmem %s51, %s794 [#allocation5]
            %s837 = scalar_lea.sflag [#allocation2], %s833
            // Predicated region
            $region152: #{tpu_custom_call.1} parent=150 // pred_check
              _
            $region153: #{tpu_custom_call.1} parent=150 // pred_check_branch
              %839 = sbr.rel target = $region155
            $region154: #{tpu_custom_call.1} parent=150 // pred_region
              %840 = sst [smem:[#allocation9]] [#allocation74]
              %841 = sst [smem:[#allocation10]] [#allocation73]
            $region155: #{tpu_custom_call.1} parent=150 // pred_fallthru
              _
            %843 = shalt.err (0)
            %s845 = sshll.u32 %s836, 4
            %s846 = int_to_ptr.vmem [resolvable:$true] %s845
            %848 = dma.hbm_to_vmem [thread:$0]  %s835, 16, %s846, %s837
          $region151: #{tpu_custom_call.1} parent=144 // pred_fallthru
            _
        $region145: #{tpu_custom_call.1} parent=11 // loop_footer
          %s792 = sadd.s32 1, %s788
        $region146: #{tpu_custom_call.1} parent=11 // loop_footer_branch
          %787 = sbr.rel target = $region142
        $region147: #{tpu_custom_call.1} parent=11 // loop_exit
          _
        %v849 = vld [vmem:[%s51] sm:$0xff]
        %v850 = vld [vmem:[%s51 + $0x8] sm:$0xff]
        %v851 = vld [vmem:[%s51 + $0x10] sm:$0xff]
        %v852 = vld [vmem:[%s51 + $0x18] sm:$0xff]
        %v853 = vld [vmem:[%s51 + $0x20] sm:$0xff]
        %v854 = vld [vmem:[%s51 + $0x28] sm:$0xff]
        %v855 = vld [vmem:[%s51 + $0x30] sm:$0xff]
        %v856 = vld [vmem:[%s51 + $0x38] sm:$0xff]
        %v857 = vmul.f32 %v849, 11.313708
        %v858 = vmul.f32 %v850, 11.313708
        %v859 = vmul.f32 %v851, 11.313708
        %v860 = vmul.f32 %v852, 11.313708
        %v861 = vmul.f32 %v853, 11.313708
        %v862 = vmul.f32 %v854, 11.313708
        %v863 = vmul.f32 %v855, 11.313708
        %v864 = vmul.f32 %v856, 11.313708
        %865 = vst [vmem:[%s51] sm:$0xff] %v857
        %866 = vst [vmem:[%s51 + $0x8] sm:$0xff] %v858
        %867 = vst [vmem:[%s51 + $0x10] sm:$0xff] %v859
        %868 = vst [vmem:[%s51 + $0x18] sm:$0xff] %v860
        %869 = vst [vmem:[%s51 + $0x20] sm:$0xff] %v861
        %870 = vst [vmem:[%s51 + $0x28] sm:$0xff] %v862
        %871 = vst [vmem:[%s51 + $0x30] sm:$0xff] %v863
        %872 = vst [vmem:[%s51 + $0x38] sm:$0xff] %v864
        %s873 = sand.u32 %s24, 1
        %s874 = scalar_lea.sflag [#allocation6], %s873
        %s875 = sand.u32 %s24, 1
        %s876 = smul.addr %s875, 64
        %s877 = scalar_lea.vmem [#allocation5], %s876
        // Predicated region
        $region156: #{tpu_custom_call.1} parent=11 // pred_check
          %p878 = pneg %p30
        $region157: #{tpu_custom_call.1} parent=11 // pred_check_branch
          %880 = sbr.rel (%p878) target = $region159
        $region158: #{tpu_custom_call.1} parent=11 // pred_region
          %s881 = smul.u32 8, %s15
          %s883 = ssub.s32 1024, 1024
          %884 = vsyncadd %s874, %s883
          %s885 = smul.addr %s881, 128
          %s886 = scalar_lea.hbm %s2, %s885
          %s887 = sshll.u32 %s877, 4
          %s888 = int_to_ptr.vmem [resolvable:$true] %s887
          %893 = dma.vmem_to_hbm [thread:$0]  %s888, 1024, %s886, %s874, 128, 128, 8
        $region159: #{tpu_custom_call.1} parent=11 // pred_fallthru
          _
      $region12: #{tpu_custom_call.1} parent=5 // pred_fallthru
        _
      %p894 = scmp.le.s32.totalorder 1, %s15
      // Predicated region
      $region160: #{tpu_custom_call.1} parent=5 // pred_check
        %p895 = pneg %p894
      $region161: #{tpu_custom_call.1} parent=5 // pred_check_branch
        %897 = sbr.rel (%p895) target = $region163
      $region162: #{tpu_custom_call.1} parent=5 // pred_region
        %s898 = ssub.s32 %s15, 1
        // Predicated region
        $region164: #{tpu_custom_call.1} parent=162 // pred_check
          %p899 = pneg %p36
        $region165: #{tpu_custom_call.1} parent=162 // pred_check_branch
          %901 = sbr.rel (%p899) target = $region167
        $region166: #{tpu_custom_call.1} parent=162 // pred_region
          %s902 = sand.u32 %s27, 1
          %s903 = scalar_lea.sflag [#allocation6], %s902
          %s904 = sand.u32 %s27, 1
          %s905 = smul.addr %s904, 64
          %s906 = scalar_lea.vmem [#allocation5], %s905
          %907 = dma.done %s903, 1024
        $region167: #{tpu_custom_call.1} parent=162 // pred_fallthru
          _
      $region163: #{tpu_custom_call.1} parent=5 // pred_fallthru
        _
    $region6: #{tpu_custom_call.1} parent=1 // loop_footer
      %s19 = sadd.s32 1, %s15
    $region7: #{tpu_custom_call.1} parent=1 // loop_footer_branch
      %14 = sbr.rel target = $region3
    $region8: #{tpu_custom_call.1} parent=1 // loop_exit
      _
    %908 = vsyncpa [#allocation6], 1
    %s909 = scalar_lea.sflag [#allocation6], 1
    %910 = vsyncpa %s909, 1
  %911 = vsyncmov [#allocation2]
  %s912 = vpop.sfrf %911
  %p913 = scmp.eq.s32.totalorder %s912, 0
  %p914 = pneg %p913
  %916 = shalt.err (%p914)
  %s917 = scalar_lea.sflag [#allocation2], 1
  %918 = vsyncmov %s917
  %s919 = vpop.sfrf %918
  %p920 = scmp.eq.s32.totalorder %s919, 0
  %p921 = pneg %p920
  %923 = shalt.err (%p921)
  %s924 = scalar_lea.sflag [#allocation2], 2
  %925 = vsyncmov %s924
  %s926 = vpop.sfrf %925
  %p927 = scmp.eq.s32.totalorder %s926, 0
  %p928 = pneg %p927
  %930 = shalt.err (%p928)
  %s931 = scalar_lea.sflag [#allocation2], 3
  %932 = vsyncmov %s931
  %s933 = vpop.sfrf %932
  %p934 = scmp.eq.s32.totalorder %s933, 0
  %p935 = pneg %p934
  %937 = shalt.err (%p935)
  %s938 = scalar_lea.sflag [#allocation2], 4
  %939 = vsyncmov %s938
  %s940 = vpop.sfrf %939
  %p941 = scmp.eq.s32.totalorder %s940, 0
  %p942 = pneg %p941
  %944 = shalt.err (%p942)
  %s945 = scalar_lea.sflag [#allocation2], 5
  %946 = vsyncmov %s945
  %s947 = vpop.sfrf %946
  %p948 = scmp.eq.s32.totalorder %s947, 0
  %p949 = pneg %p948
  %951 = shalt.err (%p949)
  %s952 = scalar_lea.sflag [#allocation2], 6
  %953 = vsyncmov %s952
  %s954 = vpop.sfrf %953
  %p955 = scmp.eq.s32.totalorder %s954, 0
  %p956 = pneg %p955
  %958 = shalt.err (%p956)
  %s959 = scalar_lea.sflag [#allocation2], 7
  %960 = vsyncmov %s959
  %s961 = vpop.sfrf %960
  %p962 = scmp.eq.s32.totalorder %s961, 0
  %p963 = pneg %p962
  %965 = shalt.err (%p963)
  %s966 = scalar_lea.sflag [#allocation2], 8
  %967 = vsyncmov %s966
  %s968 = vpop.sfrf %967
  %p969 = scmp.eq.s32.totalorder %s968, 0
  %p970 = pneg %p969
  %972 = shalt.err (%p970)
  %s973 = scalar_lea.sflag [#allocation2], 9
  %974 = vsyncmov %s973
  %s975 = vpop.sfrf %974
  %p976 = scmp.eq.s32.totalorder %s975, 0
  %p977 = pneg %p976
  %979 = shalt.err (%p977)
  %s980 = scalar_lea.sflag [#allocation2], 10
  %981 = vsyncmov %s980
  %s982 = vpop.sfrf %981
  %p983 = scmp.eq.s32.totalorder %s982, 0
  %p984 = pneg %p983
  %986 = shalt.err (%p984)
  %s987 = scalar_lea.sflag [#allocation2], 11
  %988 = vsyncmov %s987
  %s989 = vpop.sfrf %988
  %p990 = scmp.eq.s32.totalorder %s989, 0
  %p991 = pneg %p990
  %993 = shalt.err (%p991)
  %s994 = scalar_lea.sflag [#allocation2], 12
  %995 = vsyncmov %s994
  %s996 = vpop.sfrf %995
  %p997 = scmp.eq.s32.totalorder %s996, 0
  %p998 = pneg %p997
  %1000 = shalt.err (%p998)
  %s1001 = scalar_lea.sflag [#allocation2], 13
  %1002 = vsyncmov %s1001
  %s1003 = vpop.sfrf %1002
  %p1004 = scmp.eq.s32.totalorder %s1003, 0
  %p1005 = pneg %p1004
  %1007 = shalt.err (%p1005)
  %s1008 = scalar_lea.sflag [#allocation2], 14
  %1009 = vsyncmov %s1008
  %s1010 = vpop.sfrf %1009
  %p1011 = scmp.eq.s32.totalorder %s1010, 0
  %p1012 = pneg %p1011
  %1014 = shalt.err (%p1012)
  %s1015 = scalar_lea.sflag [#allocation2], 15
  %1016 = vsyncmov %s1015
  %s1017 = vpop.sfrf %1016
  %p1018 = scmp.eq.s32.totalorder %s1017, 0
  %p1019 = pneg %p1018
  %1021 = shalt.err (%p1019)
  %s1022 = scalar_lea.sflag [#allocation2], 16
  %1023 = vsyncmov %s1022
  %s1024 = vpop.sfrf %1023
  %p1025 = scmp.eq.s32.totalorder %s1024, 0
  %p1026 = pneg %p1025
  %1028 = shalt.err (%p1026)
  %s1029 = scalar_lea.sflag [#allocation2], 17
  %1030 = vsyncmov %s1029
  %s1031 = vpop.sfrf %1030
  %p1032 = scmp.eq.s32.totalorder %s1031, 0
  %p1033 = pneg %p1032
  %1035 = shalt.err (%p1033)
  %s1036 = scalar_lea.sflag [#allocation2], 18
  %1037 = vsyncmov %s1036
  %s1038 = vpop.sfrf %1037
  %p1039 = scmp.eq.s32.totalorder %s1038, 0
  %p1040 = pneg %p1039
  %1042 = shalt.err (%p1040)
  %s1043 = scalar_lea.sflag [#allocation2], 19
  %1044 = vsyncmov %s1043
  %s1045 = vpop.sfrf %1044
  %p1046 = scmp.eq.s32.totalorder %s1045, 0
  %p1047 = pneg %p1046
  %1049 = shalt.err (%p1047)
  %s1050 = scalar_lea.sflag [#allocation2], 20
  %1051 = vsyncmov %s1050
  %s1052 = vpop.sfrf %1051
  %p1053 = scmp.eq.s32.totalorder %s1052, 0
  %p1054 = pneg %p1053
  %1056 = shalt.err (%p1054)
  %s1057 = scalar_lea.sflag [#allocation2], 21
  %1058 = vsyncmov %s1057
  %s1059 = vpop.sfrf %1058
  %p1060 = scmp.eq.s32.totalorder %s1059, 0
  %p1061 = pneg %p1060
  %1063 = shalt.err (%p1061)
  %s1064 = scalar_lea.sflag [#allocation2], 22
  %1065 = vsyncmov %s1064
  %s1066 = vpop.sfrf %1065
  %p1067 = scmp.eq.s32.totalorder %s1066, 0
  %p1068 = pneg %p1067
  %1070 = shalt.err (%p1068)
  %s1071 = scalar_lea.sflag [#allocation2], 23
  %1072 = vsyncmov %s1071
  %s1073 = vpop.sfrf %1072
  %p1074 = scmp.eq.s32.totalorder %s1073, 0
  %p1075 = pneg %p1074
  %1077 = shalt.err (%p1075)
  %s1078 = scalar_lea.sflag [#allocation2], 24
  %1079 = vsyncmov %s1078
  %s1080 = vpop.sfrf %1079
  %p1081 = scmp.eq.s32.totalorder %s1080, 0
  %p1082 = pneg %p1081
  %1084 = shalt.err (%p1082)
  %s1085 = scalar_lea.sflag [#allocation2], 25
  %1086 = vsyncmov %s1085
  %s1087 = vpop.sfrf %1086
  %p1088 = scmp.eq.s32.totalorder %s1087, 0
  %p1089 = pneg %p1088
  %1091 = shalt.err (%p1089)
  %s1092 = scalar_lea.sflag [#allocation2], 26
  %1093 = vsyncmov %s1092
  %s1094 = vpop.sfrf %1093
  %p1095 = scmp.eq.s32.totalorder %s1094, 0
  %p1096 = pneg %p1095
  %1098 = shalt.err (%p1096)
  %s1099 = scalar_lea.sflag [#allocation2], 27
  %1100 = vsyncmov %s1099
  %s1101 = vpop.sfrf %1100
  %p1102 = scmp.eq.s32.totalorder %s1101, 0
  %p1103 = pneg %p1102
  %1105 = shalt.err (%p1103)
  %s1106 = scalar_lea.sflag [#allocation2], 28
  %1107 = vsyncmov %s1106
  %s1108 = vpop.sfrf %1107
  %p1109 = scmp.eq.s32.totalorder %s1108, 0
  %p1110 = pneg %p1109
  %1112 = shalt.err (%p1110)
  %s1113 = scalar_lea.sflag [#allocation2], 29
  %1114 = vsyncmov %s1113
  %s1115 = vpop.sfrf %1114
  %p1116 = scmp.eq.s32.totalorder %s1115, 0
  %p1117 = pneg %p1116
  %1119 = shalt.err (%p1117)
  %s1120 = scalar_lea.sflag [#allocation2], 30
  %1121 = vsyncmov %s1120
  %s1122 = vpop.sfrf %1121
  %p1123 = scmp.eq.s32.totalorder %s1122, 0
  %p1124 = pneg %p1123
  %1126 = shalt.err (%p1124)
  %s1127 = scalar_lea.sflag [#allocation2], 31
  %1128 = vsyncmov %s1127
  %s1129 = vpop.sfrf %1128
  %p1130 = scmp.eq.s32.totalorder %s1129, 0
  %p1131 = pneg %p1130
  %1133 = shalt.err (%p1131)

</llo_original>
